<compile_context>
chip_gen: v6e
topology: v6e:2x2x1
jax: 0.10.0
libtpu: 0.0.40
codegen_flags: <defaults>
</compile_context>

<pallas_src>
import math

import jax
import jax.numpy as jnp
import numpy as np
from jax.experimental import pallas as pl
from jax.experimental.pallas import tpu as pltpu

_INV_SQRT2 = 0.7071067811865476


def _gelu_exact(y):
    # exact (erf) GELU, matches torch.nn.GELU default
    return 0.5 * y * (1.0 + jax.lax.erf(y * jnp.float32(_INV_SQRT2)))


def _round_up(x, m):
    return (x + m - 1) // m * m


def _make_stem_kernel(H1, W1, C1, C2, C3, K1, PAD, group_k, compute_dtype):
    """Builds the fused kernel (all shape constants baked in as Python ints)."""
    M1 = H1 * W1
    rows = M1 // group_k

    def kernel(p1_ref, w1_ref, s1_ref, t1_ref,
               w2_ref, s2_ref, t2_ref,
               w3_ref, s3_ref, t3_ref,
               o_ref, a1p_ref, a2p_ref):
        # ---------------- layer 1: stride-2 conv (im2col matmul) + GELU + BN ----
        y = jnp.dot(p1_ref[0], w1_ref[...], preferred_element_type=jnp.float32)
        y = _gelu_exact(y)
        z = y * s1_ref[...] + t1_ref[...]                      # (M1, C1) f32

        # ------------- layers 2/3: 3x3 stride-1 "same" conv, fully in VMEM -----
        # Flattened-row-shift formulation: output pixel m=(h*W1+w), tap (kh,kw)
        # reads flat row m + (kh-1)*W1 + (kw-1) of the zero-padded activation;
        # a per-row mask kills the rows where the w index wraps across a row.
        def conv3x3_same(z_in, apad_ref, w_ref, cin, cout):
            apad_ref[...] = jnp.zeros_like(apad_ref)
            apad_ref[pl.ds(PAD, M1), :] = z_in.astype(apad_ref.dtype)

            w_idx = jax.lax.broadcasted_iota(jnp.int32, (M1, cin), 0) % W1
            mask_l = (w_idx > 0).astype(compute_dtype)          # tap reads col w-1
            mask_r = (w_idx < (W1 - 1)).astype(compute_dtype)   # tap reads col w+1

            acc = jnp.zeros((M1, cout), jnp.float32)
            for kh in range(3):
                for kw in range(3):
                    dh, dw = kh - 1, kw - 1
                    start = PAD + dh * W1 + dw                  # static offset
                    sl = apad_ref[pl.ds(start, M1), :]          # (M1, cin)
                    if dw == -1:
                        sl = sl * mask_l
                    elif dw == 1:
                        sl = sl * mask_r
                    acc = acc + jnp.dot(sl, w_ref[3 * kh + kw],
                                        preferred_element_type=jnp.float32)
            return acc

        y = conv3x3_same(z, a1p_ref, w2_ref, C1, C2)
        y = _gelu_exact(y)
        z = y * s2_ref[...] + t2_ref[...]                      # (M1, C2) f32

        y = conv3x3_same(z, a2p_ref, w3_ref, C2, C3)
        y = _gelu_exact(y)
        z = y * s3_ref[...] + t3_ref[...]                      # (M1, C3) f32

        # --------------------- lane-dense output store -------------------------
        if group_k > 1:
            parts = [z[j * rows:(j + 1) * rows, :] for j in range(group_k)]
            o_ref[0] = jnp.concatenate(parts, axis=1).astype(o_ref.dtype)
        else:
            o_ref[0] = z.astype(o_ref.dtype)

    return kernel


def patch_embed_stem_3conv(x_nchw, params, *, compute_dtype=jnp.float32):
    """Fused forward pass of PatchEmbed_stem_3conv.  Input/output are NCHW."""
    B, Cin, H, W = x_nchw.shape
    (w1, s1, t1), (w2, s2, t2), (w3, s3, t3) = params
    C1, C2, C3 = w1.shape[0], w2.shape[0], w3.shape[0]
    assert w1.shape[1] == Cin and w2.shape[1] == C1 and w3.shape[1] == C2

    H1 = (H + 2 - 3) // 2 + 1
    W1 = (W + 2 - 3) // 2 + 1
    M1 = H1 * W1
    K1 = 9 * Cin

    # ---- host glue: im2col of the raw 3-channel input for the stride-2 conv1 ----
    x = jnp.transpose(x_nchw, (0, 2, 3, 1))                    # NCHW -> NHWC
    xp = jnp.pad(x, ((0, 0), (1, 1), (1, 1), (0, 0)))
    cols = [xp[:, kh:kh + 2 * H1:2, kw:kw + 2 * W1:2, :]
            for kh in range(3) for kw in range(3)]
    p1 = jnp.stack(cols, axis=3).reshape(B, M1, K1).astype(compute_dtype)

    # ---- weights: (Cout,Cin,3,3) -> K-major (tap,cin,cout); BN as affine ----
    w1m = jnp.transpose(w1, (2, 3, 1, 0)).reshape(K1, C1).astype(compute_dtype)
    w2m = jnp.transpose(w2, (2, 3, 1, 0)).reshape(9, C1, C2).astype(compute_dtype)
    w3m = jnp.transpose(w3, (2, 3, 1, 0)).reshape(9, C2, C3).astype(compute_dtype)
    aff = [a.reshape(1, -1).astype(jnp.float32) for a in (s1, t1, s2, t2, s3, t3)]

    # lane-dense output grouping: pack group_k contiguous row-blocks into lanes
    group_k = 128 // math.gcd(C3, 128)
    if group_k <= 1 or (M1 % group_k) != 0:
        group_k = 1
    rows = M1 // group_k

    # sublane-aligned zero halo so every flat row shift stays in-bounds
    PAD = _round_up(W1 + 1, 8)

    kernel = _make_stem_kernel(H1, W1, C1, C2, C3, K1, PAD, group_k, compute_dtype)

    out = pl.pallas_call(
        kernel,
        out_shape=jax.ShapeDtypeStruct((B, rows, group_k * C3), jnp.float32),
        grid=(B,),
        in_specs=[
            pl.BlockSpec((1, M1, K1), lambda b: (b, 0, 0)),      # conv1 patches
            pl.BlockSpec((K1, C1), lambda b: (0, 0)),            # w1
            pl.BlockSpec((1, C1), lambda b: (0, 0)),             # bn1 scale
            pl.BlockSpec((1, C1), lambda b: (0, 0)),             # bn1 shift
            pl.BlockSpec((9, C1, C2), lambda b: (0, 0, 0)),      # w2 per-tap
            pl.BlockSpec((1, C2), lambda b: (0, 0)),             # bn2 scale
            pl.BlockSpec((1, C2), lambda b: (0, 0)),             # bn2 shift
            pl.BlockSpec((9, C2, C3), lambda b: (0, 0, 0)),      # w3 per-tap
            pl.BlockSpec((1, C3), lambda b: (0, 0)),             # bn3 scale
            pl.BlockSpec((1, C3), lambda b: (0, 0)),             # bn3 shift
        ],
        out_specs=pl.BlockSpec((1, rows, group_k * C3), lambda b: (b, 0, 0)),
        scratch_shapes=[
            pltpu.VMEM((M1 + 2 * PAD, C1), compute_dtype),       # padded act1
            pltpu.VMEM((M1 + 2 * PAD, C2), compute_dtype),       # padded act2
        ],
        compiler_params=pltpu.CompilerParams(
            dimension_semantics=("parallel",),
            vmem_limit_bytes=32 * 1024 * 1024,
        ),
    )(p1, w1m, aff[0], aff[1], w2m, aff[2], aff[3], w3m, aff[4], aff[5])

    # undo lane grouping (free reshapes/transposes in XLA) and restore NCHW
    y = out.reshape(B, rows, group_k, C3).transpose(0, 2, 1, 3).reshape(B, M1, C3)
    y = y.reshape(B, H1, W1, C3)
    return jnp.transpose(y, (0, 3, 1, 2))


# ----------------------- parameter construction (synthetic) -----------------------

def make_params(key, in_chans=3, embed_dim=32, eps=1e-5):
    """Deterministic conv weights + folded eval-mode BatchNorm scale/shift."""
    chans = [(in_chans, embed_dim // 2), (embed_dim // 2, embed_dim), (embed_dim, embed_dim)]
    params = []
    for (cin, cout) in chans:
        key, kw, kg, kb, km, kv = jax.random.split(key, 6)
        fan_in = cin * 9
        w = jax.random.normal(kw, (cout, cin, 3, 3), jnp.float32) * math.sqrt(2.0 / fan_in)
        gamma = 1.0 + 0.1 * jax.random.normal(kg, (cout,), jnp.float32)
        beta = 0.1 * jax.random.normal(kb, (cout,), jnp.float32)
        running_mean = 0.1 * jax.random.normal(km, (cout,), jnp.float32)
        running_var = 1.0 + 0.1 * jnp.abs(jax.random.normal(kv, (cout,), jnp.float32))
        scale = gamma / jnp.sqrt(running_var + eps)
        shift = beta - running_mean * scale
        params.append((w, scale, shift))
    return params


# ----------------------------- pure-JAX reference ---------------------------------

def ref_forward(x_nchw, params):
    y = x_nchw
    for (w, scale, shift), s in zip(params, (2, 1, 1)):
        y = jax.lax.conv_general_dilated(
            y, w, window_strides=(s, s), padding=((1, 1), (1, 1)),
            dimension_numbers=("NCHW", "OIHW", "NCHW"))
        y = 0.5 * y * (1.0 + jax.lax.erf(y * jnp.float32(_INV_SQRT2)))
        y = y * scale.reshape(1, -1, 1, 1) + shift.reshape(1, -1, 1, 1)
    return y


if __name__ == "__main__":
    # Small shapes consistent with the module: img_size=16, patch_size=2,
    # in_chans=3 (fixed by the module), embed_dim=32
    #   -> input (2, 3, 16, 16), output (2, 32, 8, 8).
    key = jax.random.PRNGKey(0)
    key, kx = jax.random.split(key)
    B, C, H, W = 2, 3, 16, 16
    embed_dim = 32

    x = jax.random.normal(kx, (B, C, H, W), jnp.float32)
    params = make_params(key, in_chans=C, embed_dim=embed_dim)

    ref = jax.block_until_ready(ref_forward(x, params))

    # f32 path: exact match to the module semantics
    out = jax.block_until_ready(patch_embed_stem_3conv(x, params))
    assert out.shape == (B, embed_dim, H // 2, W // 2), out.shape
    np.testing.assert_allclose(np.asarray(out), np.asarray(ref), rtol=1e-3, atol=1e-3)

    # bf16 matmul-input path (perf option): validate at a looser tolerance
    out_bf16 = jax.block_until_ready(
        patch_embed_stem_3conv(x, params, compute_dtype=jnp.bfloat16))
    np.testing.assert_allclose(np.asarray(out_bf16), np.asarray(ref), rtol=1e-1, atol=1e-1)

    print("KERNEL_OK")
</pallas_src>

<mosaic_0001>
module attributes {stable_mosaic.version = 11 : i64} {
  func.func @kernel(%arg0: i32, %arg1: memref<1x64x27xf32, #tpu.memory_space<vmem>>, %arg2: memref<27x16xf32, #tpu.memory_space<vmem>>, %arg3: memref<1x16xf32, #tpu.memory_space<vmem>>, %arg4: memref<1x16xf32, #tpu.memory_space<vmem>>, %arg5: memref<9x16x32xf32, #tpu.memory_space<vmem>>, %arg6: memref<1x32xf32, #tpu.memory_space<vmem>>, %arg7: memref<1x32xf32, #tpu.memory_space<vmem>>, %arg8: memref<9x32x32xf32, #tpu.memory_space<vmem>>, %arg9: memref<1x32xf32, #tpu.memory_space<vmem>>, %arg10: memref<1x32xf32, #tpu.memory_space<vmem>>, %arg11: memref<1x16x128xf32, #tpu.memory_space<vmem>>, %arg12: memref<96x16xf32, #tpu.memory_space<vmem>>, %arg13: memref<96x32xf32, #tpu.memory_space<vmem>>) attributes {dimension_semantics = [#tpu.dimension_semantics<parallel>], iteration_bounds = array<i64: 2>, scalar_prefetch = 0 : i64, scratch_operands = 2 : i64, tpu.core_type = #tpu.core_type<tc>, window_params = [{transform_indices = @transform_0, window_bounds = array<i64: 1, 64, 27>}, {pipeline_mode = #tpu.pipeline_mode<synchronous>, transform_indices = @transform_1, window_bounds = array<i64: 27, 16>}, {pipeline_mode = #tpu.pipeline_mode<synchronous>, transform_indices = @transform_2, window_bounds = array<i64: 1, 16>}, {pipeline_mode = #tpu.pipeline_mode<synchronous>, transform_indices = @transform_3, window_bounds = array<i64: 1, 16>}, {pipeline_mode = #tpu.pipeline_mode<synchronous>, transform_indices = @transform_4, window_bounds = array<i64: 9, 16, 32>}, {pipeline_mode = #tpu.pipeline_mode<synchronous>, transform_indices = @transform_5, window_bounds = array<i64: 1, 32>}, {pipeline_mode = #tpu.pipeline_mode<synchronous>, transform_indices = @transform_6, window_bounds = array<i64: 1, 32>}, {pipeline_mode = #tpu.pipeline_mode<synchronous>, transform_indices = @transform_7, window_bounds = array<i64: 9, 32, 32>}, {pipeline_mode = #tpu.pipeline_mode<synchronous>, transform_indices = @transform_8, window_bounds = array<i64: 1, 32>}, {pipeline_mode = #tpu.pipeline_mode<synchronous>, transform_indices = @transform_9, window_bounds = array<i64: 1, 32>}, {transform_indices = @transform_10, window_bounds = array<i64: 1, 16, 128>}]} {
    %c0 = arith.constant 0 : index
    %c0_0 = arith.constant 0 : index
    %c0_1 = arith.constant 0 : index
    %0 = vector.load %arg1[%c0, %c0_0, %c0_1] : memref<1x64x27xf32, #tpu.memory_space<vmem>>, vector<1x64x27xf32>
    %1 = vector.shape_cast %0 : vector<1x64x27xf32> to vector<64x27xf32>
    %c0_2 = arith.constant 0 : index
    %c0_3 = arith.constant 0 : index
    %2 = vector.load %arg2[%c0_2, %c0_3] : memref<27x16xf32, #tpu.memory_space<vmem>>, vector<27x16xf32>
    %cst = arith.constant dense<0.000000e+00> : vector<64x16xf32>
    %3 = tpu.matmul %1, %2, %cst {dimension_numbers = #tpu.dot_dimension_numbers<[1], [0], [0], [1], [0, 0, 1, 1], [], []>} : vector<64x27xf32>, vector<27x16xf32>, vector<64x16xf32> -> vector<64x16xf32>
    %cst_4 = arith.constant 5.000000e-01 : f32
    %4 = vector.broadcast %cst_4 : f32 to vector<64x16xf32>
    %5 = arith.mulf %4, %3 : vector<64x16xf32>
    %cst_5 = arith.constant 0.707106769 : f32
    %6 = vector.broadcast %cst_5 : f32 to vector<64x16xf32>
    %7 = arith.mulf %3, %6 : vector<64x16xf32>
    %8 = math.erf %7 : vector<64x16xf32>
    %cst_6 = arith.constant 1.000000e+00 : f32
    %9 = vector.broadcast %cst_6 : f32 to vector<64x16xf32>
    %10 = arith.addf %9, %8 : vector<64x16xf32>
    %11 = arith.mulf %5, %10 : vector<64x16xf32>
    %c0_7 = arith.constant 0 : index
    %c0_8 = arith.constant 0 : index
    %12 = vector.load %arg3[%c0_7, %c0_8] : memref<1x16xf32, #tpu.memory_space<vmem>>, vector<1x16xf32>
    %13 = vector.broadcast %12 : vector<1x16xf32> to vector<64x16xf32>
    %14 = arith.mulf %11, %13 : vector<64x16xf32>
    %c0_9 = arith.constant 0 : index
    %c0_10 = arith.constant 0 : index
    %15 = vector.load %arg4[%c0_9, %c0_10] : memref<1x16xf32, #tpu.memory_space<vmem>>, vector<1x16xf32>
    %16 = vector.broadcast %15 : vector<1x16xf32> to vector<64x16xf32>
    %17 = arith.addf %14, %16 : vector<64x16xf32>
    %cst_11 = arith.constant 0.000000e+00 : f32
    %18 = vector.broadcast %cst_11 : f32 to vector<96x16xf32>
    %c0_12 = arith.constant 0 : index
    %c0_13 = arith.constant 0 : index
    %19 = vector.load %arg12[%c0_12, %c0_13] : memref<96x16xf32, #tpu.memory_space<vmem>>, vector<96x16xf32>
    tpu.vector_store %arg12[%c0_12, %c0_13], %18 {strides = array<i32>} : memref<96x16xf32, #tpu.memory_space<vmem>>, vector<96x16xf32>,
    %c16 = arith.constant 16 : index
    %c0_14 = arith.constant 0 : index
    %20 = vector.load %arg12[%c16, %c0_14] : memref<96x16xf32, #tpu.memory_space<vmem>>, vector<64x16xf32>
    tpu.vector_store %arg12[%c16, %c0_14], %17 {strides = array<i32>} : memref<96x16xf32, #tpu.memory_space<vmem>>, vector<64x16xf32>,
    %21 = tpu.iota {dimensions = array<i32: 0>} : vector<64x16xi32>
    %c8_i32 = arith.constant 8 : i32
    %c0_i32 = arith.constant 0 : i32
    %22 = arith.cmpi eq, %c8_i32, %c0_i32 : i32
    %c1_i32 = arith.constant 1 : i32
    %23 = arith.select %22, %c1_i32, %c8_i32 : i32
    %24 = vector.broadcast %23 : i32 to vector<64x16xi32>
    %25 = arith.remsi %21, %24 : vector<64x16xi32>
    %c0_i32_15 = arith.constant 0 : i32
    %26 = vector.broadcast %c0_i32_15 : i32 to vector<64x16xi32>
    %27 = arith.cmpi ne, %25, %26 : vector<64x16xi32>
    %c0_i32_16 = arith.constant 0 : i32
    %28 = vector.broadcast %c0_i32_16 : i32 to vector<64x16xi32>
    %29 = arith.cmpi slt, %25, %28 : vector<64x16xi32>
    %c0_i32_17 = arith.constant 0 : i32
    %30 = arith.cmpi slt, %23, %c0_i32_17 : i32
    %31 = vector.broadcast %30 : i1 to vector<64x16xi1>
    %32 = vector.broadcast %31 : vector<64x16xi1> to vector<64x16xi1>
    %33 = arith.xori %29, %32 : vector<64x16xi1>
    %34 = arith.andi %33, %27 : vector<64x16xi1>
    %35 = vector.broadcast %23 : i32 to vector<64x16xi32>
    %36 = arith.addi %25, %35 : vector<64x16xi32>
    %37 = arith.select %34, %36, %25 : vector<64x16xi1>, vector<64x16xi32>
    %c0_i32_18 = arith.constant 0 : i32
    %38 = vector.broadcast %c0_i32_18 : i32 to vector<64x16xi32>
    %39 = arith.cmpi sgt, %37, %38 : vector<64x16xi32>
    %40 = arith.extui %39 : vector<64x16xi1> to vector<64x16xi32>
    %41 = arith.sitofp %40 : vector<64x16xi32> to vector<64x16xf32>
    %c7_i32 = arith.constant 7 : i32
    %42 = vector.broadcast %c7_i32 : i32 to vector<64x16xi32>
    %43 = arith.cmpi slt, %37, %42 : vector<64x16xi32>
    %44 = arith.extui %43 : vector<64x16xi1> to vector<64x16xi32>
    %45 = arith.sitofp %44 : vector<64x16xi32> to vector<64x16xf32>
    %cst_19 = arith.constant 0.000000e+00 : f32
    %46 = vector.broadcast %cst_19 : f32 to vector<64x32xf32>
    %c7 = arith.constant 7 : index
    %c0_20 = arith.constant 0 : index
    %47 = vector.load %arg12[%c7, %c0_20] : memref<96x16xf32, #tpu.memory_space<vmem>>, vector<64x16xf32>
    %48 = arith.mulf %47, %41 : vector<64x16xf32>
    %c0_21 = arith.constant 0 : index
    %c0_22 = arith.constant 0 : index
    %c0_23 = arith.constant 0 : index
    %49 = vector.load %arg5[%c0_21, %c0_22, %c0_23] : memref<9x16x32xf32, #tpu.memory_space<vmem>>, vector<1x16x32xf32>
    %50 = vector.shape_cast %49 : vector<1x16x32xf32> to vector<16x32xf32>
    %cst_24 = arith.constant dense<0.000000e+00> : vector<64x32xf32>
    %51 = tpu.matmul %48, %50, %cst_24 {dimension_numbers = #tpu.dot_dimension_numbers<[1], [0], [0], [1], [0, 0, 1, 1], [], []>} : vector<64x16xf32>, vector<16x32xf32>, vector<64x32xf32> -> vector<64x32xf32>
    %52 = arith.addf %46, %51 : vector<64x32xf32>
    %c8 = arith.constant 8 : index
    %c0_25 = arith.constant 0 : index
    %53 = vector.load %arg12[%c8, %c0_25] : memref<96x16xf32, #tpu.memory_space<vmem>>, vector<64x16xf32>
    %c1 = arith.constant 1 : index
    %c0_26 = arith.constant 0 : index
    %c0_27 = arith.constant 0 : index
    %54 = vector.load %arg5[%c1, %c0_26, %c0_27] : memref<9x16x32xf32, #tpu.memory_space<vmem>>, vector<1x16x32xf32>
    %55 = vector.shape_cast %54 : vector<1x16x32xf32> to vector<16x32xf32>
    %cst_28 = arith.constant dense<0.000000e+00> : vector<64x32xf32>
    %56 = tpu.matmul %53, %55, %cst_28 {dimension_numbers = #tpu.dot_dimension_numbers<[1], [0], [0], [1], [0, 0, 1, 1], [], []>} : vector<64x16xf32>, vector<16x32xf32>, vector<64x32xf32> -> vector<64x32xf32>
    %57 = arith.addf %52, %56 : vector<64x32xf32>
    %c9 = arith.constant 9 : index
    %c0_29 = arith.constant 0 : index
    %58 = vector.load %arg12[%c9, %c0_29] : memref<96x16xf32, #tpu.memory_space<vmem>>, vector<64x16xf32>
    %59 = arith.mulf %58, %45 : vector<64x16xf32>
    %c2 = arith.constant 2 : index
    %c0_30 = arith.constant 0 : index
    %c0_31 = arith.constant 0 : index
    %60 = vector.load %arg5[%c2, %c0_30, %c0_31] : memref<9x16x32xf32, #tpu.memory_space<vmem>>, vector<1x16x32xf32>
    %61 = vector.shape_cast %60 : vector<1x16x32xf32> to vector<16x32xf32>
    %cst_32 = arith.constant dense<0.000000e+00> : vector<64x32xf32>
    %62 = tpu.matmul %59, %61, %cst_32 {dimension_numbers = #tpu.dot_dimension_numbers<[1], [0], [0], [1], [0, 0, 1, 1], [], []>} : vector<64x16xf32>, vector<16x32xf32>, vector<64x32xf32> -> vector<64x32xf32>
    %63 = arith.addf %57, %62 : vector<64x32xf32>
    %c15 = arith.constant 15 : index
    %c0_33 = arith.constant 0 : index
    %64 = vector.load %arg12[%c15, %c0_33] : memref<96x16xf32, #tpu.memory_space<vmem>>, vector<64x16xf32>
    %65 = arith.mulf %64, %41 : vector<64x16xf32>
    %c3 = arith.constant 3 : index
    %c0_34 = arith.constant 0 : index
    %c0_35 = arith.constant 0 : index
    %66 = vector.load %arg5[%c3, %c0_34, %c0_35] : memref<9x16x32xf32, #tpu.memory_space<vmem>>, vector<1x16x32xf32>
    %67 = vector.shape_cast %66 : vector<1x16x32xf32> to vector<16x32xf32>
    %cst_36 = arith.constant dense<0.000000e+00> : vector<64x32xf32>
    %68 = tpu.matmul %65, %67, %cst_36 {dimension_numbers = #tpu.dot_dimension_numbers<[1], [0], [0], [1], [0, 0, 1, 1], [], []>} : vector<64x16xf32>, vector<16x32xf32>, vector<64x32xf32> -> vector<64x32xf32>
    %69 = arith.addf %63, %68 : vector<64x32xf32>
    %c16_37 = arith.constant 16 : index
    %c0_38 = arith.constant 0 : index
    %70 = vector.load %arg12[%c16_37, %c0_38] : memref<96x16xf32, #tpu.memory_space<vmem>>, vector<64x16xf32>
    %c4 = arith.constant 4 : index
    %c0_39 = arith.constant 0 : index
    %c0_40 = arith.constant 0 : index
    %71 = vector.load %arg5[%c4, %c0_39, %c0_40] : memref<9x16x32xf32, #tpu.memory_space<vmem>>, vector<1x16x32xf32>
    %72 = vector.shape_cast %71 : vector<1x16x32xf32> to vector<16x32xf32>
    %cst_41 = arith.constant dense<0.000000e+00> : vector<64x32xf32>
    %73 = tpu.matmul %70, %72, %cst_41 {dimension_numbers = #tpu.dot_dimension_numbers<[1], [0], [0], [1], [0, 0, 1, 1], [], []>} : vector<64x16xf32>, vector<16x32xf32>, vector<64x32xf32> -> vector<64x32xf32>
    %74 = arith.addf %69, %73 : vector<64x32xf32>
    %c17 = arith.constant 17 : index
    %c0_42 = arith.constant 0 : index
    %75 = vector.load %arg12[%c17, %c0_42] : memref<96x16xf32, #tpu.memory_space<vmem>>, vector<64x16xf32>
    %76 = arith.mulf %75, %45 : vector<64x16xf32>
    %c5 = arith.constant 5 : index
    %c0_43 = arith.constant 0 : index
    %c0_44 = arith.constant 0 : index
    %77 = vector.load %arg5[%c5, %c0_43, %c0_44] : memref<9x16x32xf32, #tpu.memory_space<vmem>>, vector<1x16x32xf32>
    %78 = vector.shape_cast %77 : vector<1x16x32xf32> to vector<16x32xf32>
    %cst_45 = arith.constant dense<0.000000e+00> : vector<64x32xf32>
    %79 = tpu.matmul %76, %78, %cst_45 {dimension_numbers = #tpu.dot_dimension_numbers<[1], [0], [0], [1], [0, 0, 1, 1], [], []>} : vector<64x16xf32>, vector<16x32xf32>, vector<64x32xf32> -> vector<64x32xf32>
    %80 = arith.addf %74, %79 : vector<64x32xf32>
    %c23 = arith.constant 23 : index
    %c0_46 = arith.constant 0 : index
    %81 = vector.load %arg12[%c23, %c0_46] : memref<96x16xf32, #tpu.memory_space<vmem>>, vector<64x16xf32>
    %82 = arith.mulf %81, %41 : vector<64x16xf32>
    %c6 = arith.constant 6 : index
    %c0_47 = arith.constant 0 : index
    %c0_48 = arith.constant 0 : index
    %83 = vector.load %arg5[%c6, %c0_47, %c0_48] : memref<9x16x32xf32, #tpu.memory_space<vmem>>, vector<1x16x32xf32>
    %84 = vector.shape_cast %83 : vector<1x16x32xf32> to vector<16x32xf32>
    %cst_49 = arith.constant dense<0.000000e+00> : vector<64x32xf32>
    %85 = tpu.matmul %82, %84, %cst_49 {dimension_numbers = #tpu.dot_dimension_numbers<[1], [0], [0], [1], [0, 0, 1, 1], [], []>} : vector<64x16xf32>, vector<16x32xf32>, vector<64x32xf32> -> vector<64x32xf32>
    %86 = arith.addf %80, %85 : vector<64x32xf32>
    %c24 = arith.constant 24 : index
    %c0_50 = arith.constant 0 : index
    %87 = vector.load %arg12[%c24, %c0_50] : memref<96x16xf32, #tpu.memory_space<vmem>>, vector<64x16xf32>
    %c7_51 = arith.constant 7 : index
    %c0_52 = arith.constant 0 : index
    %c0_53 = arith.constant 0 : index
    %88 = vector.load %arg5[%c7_51, %c0_52, %c0_53] : memref<9x16x32xf32, #tpu.memory_space<vmem>>, vector<1x16x32xf32>
    %89 = vector.shape_cast %88 : vector<1x16x32xf32> to vector<16x32xf32>
    %cst_54 = arith.constant dense<0.000000e+00> : vector<64x32xf32>
    %90 = tpu.matmul %87, %89, %cst_54 {dimension_numbers = #tpu.dot_dimension_numbers<[1], [0], [0], [1], [0, 0, 1, 1], [], []>} : vector<64x16xf32>, vector<16x32xf32>, vector<64x32xf32> -> vector<64x32xf32>
    %91 = arith.addf %86, %90 : vector<64x32xf32>
    %c25 = arith.constant 25 : index
    %c0_55 = arith.constant 0 : index
    %92 = vector.load %arg12[%c25, %c0_55] : memref<96x16xf32, #tpu.memory_space<vmem>>, vector<64x16xf32>
    %93 = arith.mulf %92, %45 : vector<64x16xf32>
    %c8_56 = arith.constant 8 : index
    %c0_57 = arith.constant 0 : index
    %c0_58 = arith.constant 0 : index
    %94 = vector.load %arg5[%c8_56, %c0_57, %c0_58] : memref<9x16x32xf32, #tpu.memory_space<vmem>>, vector<1x16x32xf32>
    %95 = vector.shape_cast %94 : vector<1x16x32xf32> to vector<16x32xf32>
    %cst_59 = arith.constant dense<0.000000e+00> : vector<64x32xf32>
    %96 = tpu.matmul %93, %95, %cst_59 {dimension_numbers = #tpu.dot_dimension_numbers<[1], [0], [0], [1], [0, 0, 1, 1], [], []>} : vector<64x16xf32>, vector<16x32xf32>, vector<64x32xf32> -> vector<64x32xf32>
    %97 = arith.addf %91, %96 : vector<64x32xf32>
    %cst_60 = arith.constant 5.000000e-01 : f32
    %98 = vector.broadcast %cst_60 : f32 to vector<64x32xf32>
    %99 = arith.mulf %98, %97 : vector<64x32xf32>
    %cst_61 = arith.constant 0.707106769 : f32
    %100 = vector.broadcast %cst_61 : f32 to vector<64x32xf32>
    %101 = arith.mulf %97, %100 : vector<64x32xf32>
    %102 = math.erf %101 : vector<64x32xf32>
    %cst_62 = arith.constant 1.000000e+00 : f32
    %103 = vector.broadcast %cst_62 : f32 to vector<64x32xf32>
    %104 = arith.addf %103, %102 : vector<64x32xf32>
    %105 = arith.mulf %99, %104 : vector<64x32xf32>
    %c0_63 = arith.constant 0 : index
    %c0_64 = arith.constant 0 : index
    %106 = vector.load %arg6[%c0_63, %c0_64] : memref<1x32xf32, #tpu.memory_space<vmem>>, vector<1x32xf32>
    %107 = vector.broadcast %106 : vector<1x32xf32> to vector<64x32xf32>
    %108 = arith.mulf %105, %107 : vector<64x32xf32>
    %c0_65 = arith.constant 0 : index
    %c0_66 = arith.constant 0 : index
    %109 = vector.load %arg7[%c0_65, %c0_66] : memref<1x32xf32, #tpu.memory_space<vmem>>, vector<1x32xf32>
    %110 = vector.broadcast %109 : vector<1x32xf32> to vector<64x32xf32>
    %111 = arith.addf %108, %110 : vector<64x32xf32>
    %cst_67 = arith.constant 0.000000e+00 : f32
    %112 = vector.broadcast %cst_67 : f32 to vector<96x32xf32>
    %c0_68 = arith.constant 0 : index
    %c0_69 = arith.constant 0 : index
    %113 = vector.load %arg13[%c0_68, %c0_69] : memref<96x32xf32, #tpu.memory_space<vmem>>, vector<96x32xf32>
    tpu.vector_store %arg13[%c0_68, %c0_69], %112 {strides = array<i32>} : memref<96x32xf32, #tpu.memory_space<vmem>>, vector<96x32xf32>,
    %c16_70 = arith.constant 16 : index
    %c0_71 = arith.constant 0 : index
    %114 = vector.load %arg13[%c16_70, %c0_71] : memref<96x32xf32, #tpu.memory_space<vmem>>, vector<64x32xf32>
    tpu.vector_store %arg13[%c16_70, %c0_71], %111 {strides = array<i32>} : memref<96x32xf32, #tpu.memory_space<vmem>>, vector<64x32xf32>,
    %115 = tpu.iota {dimensions = array<i32: 0>} : vector<64x32xi32>
    %c8_i32_72 = arith.constant 8 : i32
    %c0_i32_73 = arith.constant 0 : i32
    %116 = arith.cmpi eq, %c8_i32_72, %c0_i32_73 : i32
    %c1_i32_74 = arith.constant 1 : i32
    %117 = arith.select %116, %c1_i32_74, %c8_i32_72 : i32
    %118 = vector.broadcast %117 : i32 to vector<64x32xi32>
    %119 = arith.remsi %115, %118 : vector<64x32xi32>
    %c0_i32_75 = arith.constant 0 : i32
    %120 = vector.broadcast %c0_i32_75 : i32 to vector<64x32xi32>
    %121 = arith.cmpi ne, %119, %120 : vector<64x32xi32>
    %c0_i32_76 = arith.constant 0 : i32
    %122 = vector.broadcast %c0_i32_76 : i32 to vector<64x32xi32>
    %123 = arith.cmpi slt, %119, %122 : vector<64x32xi32>
    %c0_i32_77 = arith.constant 0 : i32
    %124 = arith.cmpi slt, %117, %c0_i32_77 : i32
    %125 = vector.broadcast %124 : i1 to vector<64x32xi1>
    %126 = vector.broadcast %125 : vector<64x32xi1> to vector<64x32xi1>
    %127 = arith.xori %123, %126 : vector<64x32xi1>
    %128 = arith.andi %127, %121 : vector<64x32xi1>
    %129 = vector.broadcast %117 : i32 to vector<64x32xi32>
    %130 = arith.addi %119, %129 : vector<64x32xi32>
    %131 = arith.select %128, %130, %119 : vector<64x32xi1>, vector<64x32xi32>
    %c0_i32_78 = arith.constant 0 : i32
    %132 = vector.broadcast %c0_i32_78 : i32 to vector<64x32xi32>
    %133 = arith.cmpi sgt, %131, %132 : vector<64x32xi32>
    %134 = arith.extui %133 : vector<64x32xi1> to vector<64x32xi32>
    %135 = arith.sitofp %134 : vector<64x32xi32> to vector<64x32xf32>
    %c7_i32_79 = arith.constant 7 : i32
    %136 = vector.broadcast %c7_i32_79 : i32 to vector<64x32xi32>
    %137 = arith.cmpi slt, %131, %136 : vector<64x32xi32>
    %138 = arith.extui %137 : vector<64x32xi1> to vector<64x32xi32>
    %139 = arith.sitofp %138 : vector<64x32xi32> to vector<64x32xf32>
    %cst_80 = arith.constant 0.000000e+00 : f32
    %140 = vector.broadcast %cst_80 : f32 to vector<64x32xf32>
    %c7_81 = arith.constant 7 : index
    %c0_82 = arith.constant 0 : index
    %141 = vector.load %arg13[%c7_81, %c0_82] : memref<96x32xf32, #tpu.memory_space<vmem>>, vector<64x32xf32>
    %142 = arith.mulf %141, %135 : vector<64x32xf32>
    %c0_83 = arith.constant 0 : index
    %c0_84 = arith.constant 0 : index
    %c0_85 = arith.constant 0 : index
    %143 = vector.load %arg8[%c0_83, %c0_84, %c0_85] : memref<9x32x32xf32, #tpu.memory_space<vmem>>, vector<1x32x32xf32>
    %144 = vector.shape_cast %143 : vector<1x32x32xf32> to vector<32x32xf32>
    %cst_86 = arith.constant dense<0.000000e+00> : vector<64x32xf32>
    %145 = tpu.matmul %142, %144, %cst_86 {dimension_numbers = #tpu.dot_dimension_numbers<[1], [0], [0], [1], [0, 0, 1, 1], [], []>} : vector<64x32xf32>, vector<32x32xf32>, vector<64x32xf32> -> vector<64x32xf32>
    %146 = arith.addf %140, %145 : vector<64x32xf32>
    %c8_87 = arith.constant 8 : index
    %c0_88 = arith.constant 0 : index
    %147 = vector.load %arg13[%c8_87, %c0_88] : memref<96x32xf32, #tpu.memory_space<vmem>>, vector<64x32xf32>
    %c1_89 = arith.constant 1 : index
    %c0_90 = arith.constant 0 : index
    %c0_91 = arith.constant 0 : index
    %148 = vector.load %arg8[%c1_89, %c0_90, %c0_91] : memref<9x32x32xf32, #tpu.memory_space<vmem>>, vector<1x32x32xf32>
    %149 = vector.shape_cast %148 : vector<1x32x32xf32> to vector<32x32xf32>
    %cst_92 = arith.constant dense<0.000000e+00> : vector<64x32xf32>
    %150 = tpu.matmul %147, %149, %cst_92 {dimension_numbers = #tpu.dot_dimension_numbers<[1], [0], [0], [1], [0, 0, 1, 1], [], []>} : vector<64x32xf32>, vector<32x32xf32>, vector<64x32xf32> -> vector<64x32xf32>
    %151 = arith.addf %146, %150 : vector<64x32xf32>
    %c9_93 = arith.constant 9 : index
    %c0_94 = arith.constant 0 : index
    %152 = vector.load %arg13[%c9_93, %c0_94] : memref<96x32xf32, #tpu.memory_space<vmem>>, vector<64x32xf32>
    %153 = arith.mulf %152, %139 : vector<64x32xf32>
    %c2_95 = arith.constant 2 : index
    %c0_96 = arith.constant 0 : index
    %c0_97 = arith.constant 0 : index
    %154 = vector.load %arg8[%c2_95, %c0_96, %c0_97] : memref<9x32x32xf32, #tpu.memory_space<vmem>>, vector<1x32x32xf32>
    %155 = vector.shape_cast %154 : vector<1x32x32xf32> to vector<32x32xf32>
    %cst_98 = arith.constant dense<0.000000e+00> : vector<64x32xf32>
    %156 = tpu.matmul %153, %155, %cst_98 {dimension_numbers = #tpu.dot_dimension_numbers<[1], [0], [0], [1], [0, 0, 1, 1], [], []>} : vector<64x32xf32>, vector<32x32xf32>, vector<64x32xf32> -> vector<64x32xf32>
    %157 = arith.addf %151, %156 : vector<64x32xf32>
    %c15_99 = arith.constant 15 : index
    %c0_100 = arith.constant 0 : index
    %158 = vector.load %arg13[%c15_99, %c0_100] : memref<96x32xf32, #tpu.memory_space<vmem>>, vector<64x32xf32>
    %159 = arith.mulf %158, %135 : vector<64x32xf32>
    %c3_101 = arith.constant 3 : index
    %c0_102 = arith.constant 0 : index
    %c0_103 = arith.constant 0 : index
    %160 = vector.load %arg8[%c3_101, %c0_102, %c0_103] : memref<9x32x32xf32, #tpu.memory_space<vmem>>, vector<1x32x32xf32>
    %161 = vector.shape_cast %160 : vector<1x32x32xf32> to vector<32x32xf32>
    %cst_104 = arith.constant dense<0.000000e+00> : vector<64x32xf32>
    %162 = tpu.matmul %159, %161, %cst_104 {dimension_numbers = #tpu.dot_dimension_numbers<[1], [0], [0], [1], [0, 0, 1, 1], [], []>} : vector<64x32xf32>, vector<32x32xf32>, vector<64x32xf32> -> vector<64x32xf32>
    %163 = arith.addf %157, %162 : vector<64x32xf32>
    %c16_105 = arith.constant 16 : index
    %c0_106 = arith.constant 0 : index
    %164 = vector.load %arg13[%c16_105, %c0_106] : memref<96x32xf32, #tpu.memory_space<vmem>>, vector<64x32xf32>
    %c4_107 = arith.constant 4 : index
    %c0_108 = arith.constant 0 : index
    %c0_109 = arith.constant 0 : index
    %165 = vector.load %arg8[%c4_107, %c0_108, %c0_109] : memref<9x32x32xf32, #tpu.memory_space<vmem>>, vector<1x32x32xf32>
    %166 = vector.shape_cast %165 : vector<1x32x32xf32> to vector<32x32xf32>
    %cst_110 = arith.constant dense<0.000000e+00> : vector<64x32xf32>
    %167 = tpu.matmul %164, %166, %cst_110 {dimension_numbers = #tpu.dot_dimension_numbers<[1], [0], [0], [1], [0, 0, 1, 1], [], []>} : vector<64x32xf32>, vector<32x32xf32>, vector<64x32xf32> -> vector<64x32xf32>
    %168 = arith.addf %163, %167 : vector<64x32xf32>
    %c17_111 = arith.constant 17 : index
    %c0_112 = arith.constant 0 : index
    %169 = vector.load %arg13[%c17_111, %c0_112] : memref<96x32xf32, #tpu.memory_space<vmem>>, vector<64x32xf32>
    %170 = arith.mulf %169, %139 : vector<64x32xf32>
    %c5_113 = arith.constant 5 : index
    %c0_114 = arith.constant 0 : index
    %c0_115 = arith.constant 0 : index
    %171 = vector.load %arg8[%c5_113, %c0_114, %c0_115] : memref<9x32x32xf32, #tpu.memory_space<vmem>>, vector<1x32x32xf32>
    %172 = vector.shape_cast %171 : vector<1x32x32xf32> to vector<32x32xf32>
    %cst_116 = arith.constant dense<0.000000e+00> : vector<64x32xf32>
    %173 = tpu.matmul %170, %172, %cst_116 {dimension_numbers = #tpu.dot_dimension_numbers<[1], [0], [0], [1], [0, 0, 1, 1], [], []>} : vector<64x32xf32>, vector<32x32xf32>, vector<64x32xf32> -> vector<64x32xf32>
    %174 = arith.addf %168, %173 : vector<64x32xf32>
    %c23_117 = arith.constant 23 : index
    %c0_118 = arith.constant 0 : index
    %175 = vector.load %arg13[%c23_117, %c0_118] : memref<96x32xf32, #tpu.memory_space<vmem>>, vector<64x32xf32>
    %176 = arith.mulf %175, %135 : vector<64x32xf32>
    %c6_119 = arith.constant 6 : index
    %c0_120 = arith.constant 0 : index
    %c0_121 = arith.constant 0 : index
    %177 = vector.load %arg8[%c6_119, %c0_120, %c0_121] : memref<9x32x32xf32, #tpu.memory_space<vmem>>, vector<1x32x32xf32>
    %178 = vector.shape_cast %177 : vector<1x32x32xf32> to vector<32x32xf32>
    %cst_122 = arith.constant dense<0.000000e+00> : vector<64x32xf32>
    %179 = tpu.matmul %176, %178, %cst_122 {dimension_numbers = #tpu.dot_dimension_numbers<[1], [0], [0], [1], [0, 0, 1, 1], [], []>} : vector<64x32xf32>, vector<32x32xf32>, vector<64x32xf32> -> vector<64x32xf32>
    %180 = arith.addf %174, %179 : vector<64x32xf32>
    %c24_123 = arith.constant 24 : index
    %c0_124 = arith.constant 0 : index
    %181 = vector.load %arg13[%c24_123, %c0_124] : memref<96x32xf32, #tpu.memory_space<vmem>>, vector<64x32xf32>
    %c7_125 = arith.constant 7 : index
    %c0_126 = arith.constant 0 : index
    %c0_127 = arith.constant 0 : index
    %182 = vector.load %arg8[%c7_125, %c0_126, %c0_127] : memref<9x32x32xf32, #tpu.memory_space<vmem>>, vector<1x32x32xf32>
    %183 = vector.shape_cast %182 : vector<1x32x32xf32> to vector<32x32xf32>
    %cst_128 = arith.constant dense<0.000000e+00> : vector<64x32xf32>
    %184 = tpu.matmul %181, %183, %cst_128 {dimension_numbers = #tpu.dot_dimension_numbers<[1], [0], [0], [1], [0, 0, 1, 1], [], []>} : vector<64x32xf32>, vector<32x32xf32>, vector<64x32xf32> -> vector<64x32xf32>
    %185 = arith.addf %180, %184 : vector<64x32xf32>
    %c25_129 = arith.constant 25 : index
    %c0_130 = arith.constant 0 : index
    %186 = vector.load %arg13[%c25_129, %c0_130] : memref<96x32xf32, #tpu.memory_space<vmem>>, vector<64x32xf32>
    %187 = arith.mulf %186, %139 : vector<64x32xf32>
    %c8_131 = arith.constant 8 : index
    %c0_132 = arith.constant 0 : index
    %c0_133 = arith.constant 0 : index
    %188 = vector.load %arg8[%c8_131, %c0_132, %c0_133] : memref<9x32x32xf32, #tpu.memory_space<vmem>>, vector<1x32x32xf32>
    %189 = vector.shape_cast %188 : vector<1x32x32xf32> to vector<32x32xf32>
    %cst_134 = arith.constant dense<0.000000e+00> : vector<64x32xf32>
    %190 = tpu.matmul %187, %189, %cst_134 {dimension_numbers = #tpu.dot_dimension_numbers<[1], [0], [0], [1], [0, 0, 1, 1], [], []>} : vector<64x32xf32>, vector<32x32xf32>, vector<64x32xf32> -> vector<64x32xf32>
    %191 = arith.addf %185, %190 : vector<64x32xf32>
    %cst_135 = arith.constant 5.000000e-01 : f32
    %192 = vector.broadcast %cst_135 : f32 to vector<64x32xf32>
    %193 = arith.mulf %192, %191 : vector<64x32xf32>
    %cst_136 = arith.constant 0.707106769 : f32
    %194 = vector.broadcast %cst_136 : f32 to vector<64x32xf32>
    %195 = arith.mulf %191, %194 : vector<64x32xf32>
    %196 = math.erf %195 : vector<64x32xf32>
    %cst_137 = arith.constant 1.000000e+00 : f32
    %197 = vector.broadcast %cst_137 : f32 to vector<64x32xf32>
    %198 = arith.addf %197, %196 : vector<64x32xf32>
    %199 = arith.mulf %193, %198 : vector<64x32xf32>
    %c0_138 = arith.constant 0 : index
    %c0_139 = arith.constant 0 : index
    %200 = vector.load %arg9[%c0_138, %c0_139] : memref<1x32xf32, #tpu.memory_space<vmem>>, vector<1x32xf32>
    %201 = vector.broadcast %200 : vector<1x32xf32> to vector<64x32xf32>
    %202 = arith.mulf %199, %201 : vector<64x32xf32>
    %c0_140 = arith.constant 0 : index
    %c0_141 = arith.constant 0 : index
    %203 = vector.load %arg10[%c0_140, %c0_141] : memref<1x32xf32, #tpu.memory_space<vmem>>, vector<1x32xf32>
    %204 = vector.broadcast %203 : vector<1x32xf32> to vector<64x32xf32>
    %205 = arith.addf %202, %204 : vector<64x32xf32>
    %206 = vector.extract_strided_slice %205 {offsets = [0, 0], sizes = [16, 32], strides = [1, 1]} : vector<64x32xf32> to vector<16x32xf32>
    %207 = vector.extract_strided_slice %205 {offsets = [16, 0], sizes = [16, 32], strides = [1, 1]} : vector<64x32xf32> to vector<16x32xf32>
    %208 = vector.extract_strided_slice %205 {offsets = [32, 0], sizes = [16, 32], strides = [1, 1]} : vector<64x32xf32> to vector<16x32xf32>
    %209 = vector.extract_strided_slice %205 {offsets = [48, 0], sizes = [16, 32], strides = [1, 1]} : vector<64x32xf32> to vector<16x32xf32>
    %210 = tpu.concatenate %206, %207, %208, %209 in 1 : vector<16x32xf32>, vector<16x32xf32>, vector<16x32xf32>, vector<16x32xf32> -> vector<16x128xf32>
    %c0_142 = arith.constant 0 : index
    %c0_143 = arith.constant 0 : index
    %c0_144 = arith.constant 0 : index
    %211 = vector.load %arg11[%c0_142, %c0_143, %c0_144] : memref<1x16x128xf32, #tpu.memory_space<vmem>>, vector<1x16x128xf32>
    %212 = vector.shape_cast %211 : vector<1x16x128xf32> to vector<16x128xf32>
    %213 = vector.shape_cast %210 : vector<16x128xf32> to vector<1x16x128xf32>
    tpu.vector_store %arg11[%c0_142, %c0_143, %c0_144], %213 {strides = array<i32>} : memref<1x16x128xf32, #tpu.memory_space<vmem>>, vector<1x16x128xf32>,
    return
  }
  func.func @transform_0(%arg0: i32) -> (i32, i32, i32) {
    %c0_i32 = arith.constant 0 : i32
    %c0_i32_0 = arith.constant 0 : i32
    %c0_i32_1 = arith.constant 0 : i32
    return %arg0, %c0_i32, %c0_i32_0 : i32, i32, i32
  }
  func.func @transform_1(%arg0: i32) -> (i32, i32) {
    %c0_i32 = arith.constant 0 : i32
    %c0_i32_0 = arith.constant 0 : i32
    %c0_i32_1 = arith.constant 0 : i32
    return %c0_i32, %c0_i32_0 : i32, i32
  }
  func.func @transform_2(%arg0: i32) -> (i32, i32) {
    %c0_i32 = arith.constant 0 : i32
    %c0_i32_0 = arith.constant 0 : i32
    %c0_i32_1 = arith.constant 0 : i32
    return %c0_i32, %c0_i32_0 : i32, i32
  }
  func.func @transform_3(%arg0: i32) -> (i32, i32) {
    %c0_i32 = arith.constant 0 : i32
    %c0_i32_0 = arith.constant 0 : i32
    %c0_i32_1 = arith.constant 0 : i32
    return %c0_i32, %c0_i32_0 : i32, i32
  }
  func.func @transform_4(%arg0: i32) -> (i32, i32, i32) {
    %c0_i32 = arith.constant 0 : i32
    %c0_i32_0 = arith.constant 0 : i32
    %c0_i32_1 = arith.constant 0 : i32
    %c0_i32_2 = arith.constant 0 : i32
    return %c0_i32, %c0_i32_0, %c0_i32_1 : i32, i32, i32
  }
  func.func @transform_5(%arg0: i32) -> (i32, i32) {
    %c0_i32 = arith.constant 0 : i32
    %c0_i32_0 = arith.constant 0 : i32
    %c0_i32_1 = arith.constant 0 : i32
    return %c0_i32, %c0_i32_0 : i32, i32
  }
  func.func @transform_6(%arg0: i32) -> (i32, i32) {
    %c0_i32 = arith.constant 0 : i32
    %c0_i32_0 = arith.constant 0 : i32
    %c0_i32_1 = arith.constant 0 : i32
    return %c0_i32, %c0_i32_0 : i32, i32
  }
  func.func @transform_7(%arg0: i32) -> (i32, i32, i32) {
    %c0_i32 = arith.constant 0 : i32
    %c0_i32_0 = arith.constant 0 : i32
    %c0_i32_1 = arith.constant 0 : i32
    %c0_i32_2 = arith.constant 0 : i32
    return %c0_i32, %c0_i32_0, %c0_i32_1 : i32, i32, i32
  }
  func.func @transform_8(%arg0: i32) -> (i32, i32) {
    %c0_i32 = arith.constant 0 : i32
    %c0_i32_0 = arith.constant 0 : i32
    %c0_i32_1 = arith.constant 0 : i32
    return %c0_i32, %c0_i32_0 : i32, i32
  }
  func.func @transform_9(%arg0: i32) -> (i32, i32) {
    %c0_i32 = arith.constant 0 : i32
    %c0_i32_0 = arith.constant 0 : i32
    %c0_i32_1 = arith.constant 0 : i32
    return %c0_i32, %c0_i32_0 : i32, i32
  }
  func.func @transform_10(%arg0: i32) -> (i32, i32, i32) {
    %c0_i32 = arith.constant 0 : i32
    %c0_i32_0 = arith.constant 0 : i32
    %c0_i32_1 = arith.constant 0 : i32
    return %arg0, %c0_i32, %c0_i32_0 : i32, i32, i32
  }
}

</mosaic_0001>

<llo_original>
// kernel: tpu_custom_call.1
$region0: #{tpu_custom_call.1}
  #allocation0 [shape = 'u32[]', space=smem, size = 0x4, offset = 0x4, fixed_abs, tag = 'smem constant byte address 0x4 - core index']
  #allocation1 [shape = 'u32[144,128]{1,0:T(1,128)}', space=vmem, size = 0x12000, scoped, tag = 'internal scratch']
  #allocation2 [shape = 'f32[96,16]{1,0:T(8,128)}', space=vmem, size = 0xc000, scoped, tag = 'scratch operand']
  #allocation3 [shape = 'f32[96,32]{1,0:T(8,128)}', space=vmem, size = 0xc000, scoped, tag = 'scratch operand']
  %s0 = inlined_call_operand.vmem [shape: f32[2,64,27], index: 0, kind: input, shape index: {}]
  %s1 = inlined_call_operand.vmem [shape: f32[27,16], index: 1, kind: input, shape index: {}]
  %s2 = inlined_call_operand.vmem [shape: f32[1,16], index: 2, kind: input, shape index: {}]
  %s3 = inlined_call_operand.vmem [shape: f32[1,16], index: 3, kind: input, shape index: {}]
  %s4 = inlined_call_operand.vmem [shape: f32[9,16,32], index: 4, kind: input, shape index: {}]
  %s5 = inlined_call_operand.vmem [shape: f32[1,32], index: 5, kind: input, shape index: {}]
  %s6 = inlined_call_operand.vmem [shape: f32[1,32], index: 6, kind: input, shape index: {}]
  %s7 = inlined_call_operand.hbm [shape: f32[9,32,32], index: 7, kind: input, shape index: {}]
  %s8 = inlined_call_operand.vmem [shape: f32[1,32], index: 8, kind: input, shape index: {}]
  %s9 = inlined_call_operand.vmem [shape: f32[1,32], index: 9, kind: input, shape index: {}]
  %s10 = inlined_call_operand.hbm [shape: f32[2,16,128], index: 10, kind: output, shape index: {}]
  %s11 = sld [smem:[#allocation0]]
  $region77: #{tpu_custom_call.1} parent=0
    _
  %s13 = ssub.s32 1, %s11
  %s14 = scalar_select 0, %s13, %s11
  $region1: #{tpu_custom_call.1} parent=0
    #allocation4 [shape = 'u8[147456]{0}', space=vmem, size = 0x24000, scoped, tag = 'input window, operand 7, single buffered']
    #allocation5 [shape = 's32[2]{0}', space=sflag, size = 0x8, scoped, tag = 'scoped memory for tpu_custom_call.1']
    #allocation6 [shape = 's32[2]{0}', space=sflag, size = 0x8, scoped, tag = 'scoped memory for tpu_custom_call.1']
    #allocation7 [shape = 'u8[16384]{0}', space=vmem, size = 0x4000, scoped, tag = 'output window, operand 0']
    %15 = vsyncpa [#allocation5], 0
    %16 = vsyncpa [#allocation6], 0
    %s17 = scalar_lea.sflag [#allocation6], 1
    %18 = vsyncpa %s17, 0
    loop: start=0, step=1, limit=4
    $region2: #{tpu_custom_call.1} parent=1 // loop_pre_header
      _
    $region3: #{tpu_custom_call.1} parent=1 // loop_header
      %s20 = sphi 0, %s24
      %p21 = scmp.ge.s32.totalorder %s20, 4
      %s30 = sphi 0, %s32
      %s33 = sphi 0, %s30
      %s34 = sphi 0, %s33
      %s50 = sphi 0, %s34
      %s54 = sphi 0, %s54
      %s56 = sphi 0, %s54
      %s57 = sphi 0, %s56
      %s71 = sphi 0, %s57
      %s75 = sphi 0, %s75
      %s77 = sphi 0, %s75
      %s78 = sphi 0, %s77
      %s92 = sphi 0, %s78
      %s96 = sphi 0, %s96
      %s98 = sphi 0, %s96
      %s99 = sphi 0, %s98
      %s113 = sphi 0, %s99
      %s117 = sphi 0, %s117
      %s119 = sphi 0, %s117
      %s120 = sphi 0, %s119
      %s134 = sphi 0, %s120
      %s138 = sphi 0, %s138
      %s140 = sphi 0, %s138
      %s141 = sphi 0, %s140
      %s155 = sphi 0, %s141
      %s159 = sphi 0, %s159
      %s161 = sphi 0, %s159
      %s162 = sphi 0, %s161
      %s176 = sphi 0, %s162
      %s180 = sphi 0, %s180
      %s182 = sphi 0, %s180
      %s183 = sphi 0, %s182
      %s197 = sphi 0, %s183
      %s201 = sphi 0, %s201
      %s203 = sphi 0, %s201
      %s204 = sphi 0, %s203
      %s218 = sphi 0, %s204
      %s222 = sphi 0, %s222
      %s224 = sphi 0, %s222
      %s225 = sphi 0, %s224
      %s239 = sphi 0, %s225
      %s245 = sphi 0, %s247
      %s248 = sphi 0, %s245
      %s249 = sphi 0, %s248
      %s265 = sphi 0, %s249
    $region4: #{tpu_custom_call.1} parent=1 // loop_header_branch
      %23 = sbr.rel (%p21) target = $region8
    $region5: #{tpu_custom_call.1} parent=1 // loop_body
      %s25 = ssub.s32 %s20, 1
      %s26 = ssub.s32 %s20, 2
      %s27 = sadd.s32 %s20, 1
      %s28 = ssub.s32 %s20, %s27
      %p29 = scmp.eq.s32.totalorder %s28, 0
      %s31 = sadd.s32 %s30, 1
      %s32 = scalar_select %p29, %s30, %s31
      %p35 = pneg %p29
      %p36 = scmp.eq.s32.totalorder %s20, 1
      %p37 = por %p35, %p36
      %p38 = scmp.ne.s32.totalorder %s30, %s33
      %p39 = scmp.eq.s32.totalorder %s20, 0
      %p40 = por %p38, %p39
      %p41 = scmp.ne.s32.totalorder %s30, %s33
      %p42 = scmp.eq.s32.totalorder %s25, 1
      %p43 = por %p41, %p42
      %p44 = scmp.ne.s32.totalorder %s33, %s34
      %p45 = scmp.eq.s32.totalorder %s25, 0
      %p46 = por %p44, %p45
      %p47 = scmp.ne.s32.totalorder %s33, %s34
      %p48 = scmp.eq.s32.totalorder %s26, 1
      %p49 = por %p47, %p48
      %p51 = scmp.ne.s32.totalorder %s34, %s50
      %p52 = scmp.eq.s32.totalorder %s26, 0
      %p53 = por %p51, %p52
      %s55 = sadd.s32 %s54, 1
      %p58 = scmp.eq.s32.totalorder %s20, 1
      %p59 = scmp.ne.s32.totalorder %s54, %s56
      %p60 = scmp.eq.s32.totalorder %s20, 0
      %p61 = por %p59, %p60
      %p62 = scmp.ne.s32.totalorder %s54, %s56
      %p63 = scmp.eq.s32.totalorder %s25, 1
      %p64 = por %p62, %p63
      %p65 = scmp.ne.s32.totalorder %s56, %s57
      %p66 = scmp.eq.s32.totalorder %s25, 0
      %p67 = por %p65, %p66
      %p68 = scmp.ne.s32.totalorder %s56, %s57
      %p69 = scmp.eq.s32.totalorder %s26, 1
      %p70 = por %p68, %p69
      %p72 = scmp.ne.s32.totalorder %s57, %s71
      %p73 = scmp.eq.s32.totalorder %s26, 0
      %p74 = por %p72, %p73
      %s76 = sadd.s32 %s75, 1
      %p79 = scmp.eq.s32.totalorder %s20, 1
      %p80 = scmp.ne.s32.totalorder %s75, %s77
      %p81 = scmp.eq.s32.totalorder %s20, 0
      %p82 = por %p80, %p81
      %p83 = scmp.ne.s32.totalorder %s75, %s77
      %p84 = scmp.eq.s32.totalorder %s25, 1
      %p85 = por %p83, %p84
      %p86 = scmp.ne.s32.totalorder %s77, %s78
      %p87 = scmp.eq.s32.totalorder %s25, 0
      %p88 = por %p86, %p87
      %p89 = scmp.ne.s32.totalorder %s77, %s78
      %p90 = scmp.eq.s32.totalorder %s26, 1
      %p91 = por %p89, %p90
      %p93 = scmp.ne.s32.totalorder %s78, %s92
      %p94 = scmp.eq.s32.totalorder %s26, 0
      %p95 = por %p93, %p94
      %s97 = sadd.s32 %s96, 1
      %p100 = scmp.eq.s32.totalorder %s20, 1
      %p101 = scmp.ne.s32.totalorder %s96, %s98
      %p102 = scmp.eq.s32.totalorder %s20, 0
      %p103 = por %p101, %p102
      %p104 = scmp.ne.s32.totalorder %s96, %s98
      %p105 = scmp.eq.s32.totalorder %s25, 1
      %p106 = por %p104, %p105
      %p107 = scmp.ne.s32.totalorder %s98, %s99
      %p108 = scmp.eq.s32.totalorder %s25, 0
      %p109 = por %p107, %p108
      %p110 = scmp.ne.s32.totalorder %s98, %s99
      %p111 = scmp.eq.s32.totalorder %s26, 1
      %p112 = por %p110, %p111
      %p114 = scmp.ne.s32.totalorder %s99, %s113
      %p115 = scmp.eq.s32.totalorder %s26, 0
      %p116 = por %p114, %p115
      %s118 = sadd.s32 %s117, 1
      %p121 = scmp.eq.s32.totalorder %s20, 1
      %p122 = scmp.ne.s32.totalorder %s117, %s119
      %p123 = scmp.eq.s32.totalorder %s20, 0
      %p124 = por %p122, %p123
      %p125 = scmp.ne.s32.totalorder %s117, %s119
      %p126 = scmp.eq.s32.totalorder %s25, 1
      %p127 = por %p125, %p126
      %p128 = scmp.ne.s32.totalorder %s119, %s120
      %p129 = scmp.eq.s32.totalorder %s25, 0
      %p130 = por %p128, %p129
      %p131 = scmp.ne.s32.totalorder %s119, %s120
      %p132 = scmp.eq.s32.totalorder %s26, 1
      %p133 = por %p131, %p132
      %p135 = scmp.ne.s32.totalorder %s120, %s134
      %p136 = scmp.eq.s32.totalorder %s26, 0
      %p137 = por %p135, %p136
      %s139 = sadd.s32 %s138, 1
      %p142 = scmp.eq.s32.totalorder %s20, 1
      %p143 = scmp.ne.s32.totalorder %s138, %s140
      %p144 = scmp.eq.s32.totalorder %s20, 0
      %p145 = por %p143, %p144
      %p146 = scmp.ne.s32.totalorder %s138, %s140
      %p147 = scmp.eq.s32.totalorder %s25, 1
      %p148 = por %p146, %p147
      %p149 = scmp.ne.s32.totalorder %s140, %s141
      %p150 = scmp.eq.s32.totalorder %s25, 0
      %p151 = por %p149, %p150
      %p152 = scmp.ne.s32.totalorder %s140, %s141
      %p153 = scmp.eq.s32.totalorder %s26, 1
      %p154 = por %p152, %p153
      %p156 = scmp.ne.s32.totalorder %s141, %s155
      %p157 = scmp.eq.s32.totalorder %s26, 0
      %p158 = por %p156, %p157
      %s160 = sadd.s32 %s159, 1
      %p163 = scmp.eq.s32.totalorder %s20, 1
      %p164 = scmp.ne.s32.totalorder %s159, %s161
      %p165 = scmp.eq.s32.totalorder %s20, 0
      %p166 = por %p164, %p165
      %p167 = scmp.ne.s32.totalorder %s159, %s161
      %p168 = scmp.eq.s32.totalorder %s25, 1
      %p169 = por %p167, %p168
      %p170 = scmp.ne.s32.totalorder %s161, %s162
      %p171 = scmp.eq.s32.totalorder %s25, 0
      %p172 = por %p170, %p171
      %p173 = scmp.ne.s32.totalorder %s161, %s162
      %p174 = scmp.eq.s32.totalorder %s26, 1
      %p175 = por %p173, %p174
      %p177 = scmp.ne.s32.totalorder %s162, %s176
      %p178 = scmp.eq.s32.totalorder %s26, 0
      %p179 = por %p177, %p178
      %s181 = sadd.s32 %s180, 1
      %p184 = scmp.eq.s32.totalorder %s20, 1
      %p185 = scmp.ne.s32.totalorder %s180, %s182
      %p186 = scmp.eq.s32.totalorder %s20, 0
      %p187 = por %p185, %p186
      %p188 = scmp.ne.s32.totalorder %s180, %s182
      %p189 = scmp.eq.s32.totalorder %s25, 1
      %p190 = por %p188, %p189
      %p191 = scmp.ne.s32.totalorder %s182, %s183
      %p192 = scmp.eq.s32.totalorder %s25, 0
      %p193 = por %p191, %p192
      %p194 = scmp.ne.s32.totalorder %s182, %s183
      %p195 = scmp.eq.s32.totalorder %s26, 1
      %p196 = por %p194, %p195
      %p198 = scmp.ne.s32.totalorder %s183, %s197
      %p199 = scmp.eq.s32.totalorder %s26, 0
      %p200 = por %p198, %p199
      %s202 = sadd.s32 %s201, 1
      %p205 = scmp.eq.s32.totalorder %s20, 1
      %p206 = scmp.ne.s32.totalorder %s201, %s203
      %p207 = scmp.eq.s32.totalorder %s20, 0
      %p208 = por %p206, %p207
      %p209 = scmp.ne.s32.totalorder %s201, %s203
      %p210 = scmp.eq.s32.totalorder %s25, 1
      %p211 = por %p209, %p210
      %p212 = scmp.ne.s32.totalorder %s203, %s204
      %p213 = scmp.eq.s32.totalorder %s25, 0
      %p214 = por %p212, %p213
      %p215 = scmp.ne.s32.totalorder %s203, %s204
      %p216 = scmp.eq.s32.totalorder %s26, 1
      %p217 = por %p215, %p216
      %p219 = scmp.ne.s32.totalorder %s204, %s218
      %p220 = scmp.eq.s32.totalorder %s26, 0
      %p221 = por %p219, %p220
      %s223 = sadd.s32 %s222, 1
      %p226 = scmp.eq.s32.totalorder %s20, 1
      %p227 = scmp.ne.s32.totalorder %s222, %s224
      %p228 = scmp.eq.s32.totalorder %s20, 0
      %p229 = por %p227, %p228
      %p230 = scmp.ne.s32.totalorder %s222, %s224
      %p231 = scmp.eq.s32.totalorder %s25, 1
      %p232 = por %p230, %p231
      %p233 = scmp.ne.s32.totalorder %s224, %s225
      %p234 = scmp.eq.s32.totalorder %s25, 0
      %p235 = por %p233, %p234
      %p236 = scmp.ne.s32.totalorder %s224, %s225
      %p237 = scmp.eq.s32.totalorder %s26, 1
      %p238 = por %p236, %p237
      %p240 = scmp.ne.s32.totalorder %s225, %s239
      %p241 = scmp.eq.s32.totalorder %s26, 0
      %p242 = por %p240, %p241
      %s243 = ssub.s32 %s20, %s27
      %p244 = scmp.eq.s32.totalorder %s243, 0
      %s246 = sadd.s32 %s245, 1
      %s247 = scalar_select %p244, %s245, %s246
      %p250 = pneg %p244
      %p251 = scmp.eq.s32.totalorder %s20, 1
      %p252 = por %p250, %p251
      %p253 = scmp.ne.s32.totalorder %s245, %s248
      %p254 = scmp.eq.s32.totalorder %s20, 0
      %p255 = por %p253, %p254
      %p256 = scmp.ne.s32.totalorder %s245, %s248
      %p257 = scmp.eq.s32.totalorder %s25, 1
      %p258 = por %p256, %p257
      %p259 = scmp.ne.s32.totalorder %s248, %s249
      %p260 = scmp.eq.s32.totalorder %s25, 0
      %p261 = por %p259, %p260
      %p262 = scmp.ne.s32.totalorder %s248, %s249
      %p263 = scmp.eq.s32.totalorder %s26, 1
      %p264 = por %p262, %p263
      %p266 = scmp.ne.s32.totalorder %s249, %s265
      %p267 = scmp.eq.s32.totalorder %s26, 0
      %p268 = por %p266, %p267
      %p269 = scmp.le.s32.totalorder 1, %s20
      %p270 = scmp.lt.s32.totalorder %s20, 3
      %p271 = pnand %p269, %p270
      %p272 = pneg %p271
      // Predicated region
      $region9: #{tpu_custom_call.1} parent=5 // pred_check
        _
      $region10: #{tpu_custom_call.1} parent=5 // pred_check_branch
        %274 = sbr.rel (%p271) target = $region12
      $region11: #{tpu_custom_call.1} parent=5 // pred_region
        %s275 = ssub.s32 %s20, 1
        // Predicated region
        $region13: #{tpu_custom_call.1} parent=11 // pred_check
          %p276 = pneg %p67
        $region14: #{tpu_custom_call.1} parent=11 // pred_check_branch
          %278 = sbr.rel (%p276) target = $region16
        $region15: #{tpu_custom_call.1} parent=11 // pred_region
          _
        $region16: #{tpu_custom_call.1} parent=11 // pred_fallthru
          _
        // Predicated region
        $region17: #{tpu_custom_call.1} parent=11 // pred_check
          %p279 = pneg %p88
        $region18: #{tpu_custom_call.1} parent=11 // pred_check_branch
          %281 = sbr.rel (%p279) target = $region20
        $region19: #{tpu_custom_call.1} parent=11 // pred_region
          _
        $region20: #{tpu_custom_call.1} parent=11 // pred_fallthru
          _
        // Predicated region
        $region21: #{tpu_custom_call.1} parent=11 // pred_check
          %p282 = pneg %p109
        $region22: #{tpu_custom_call.1} parent=11 // pred_check_branch
          %284 = sbr.rel (%p282) target = $region24
        $region23: #{tpu_custom_call.1} parent=11 // pred_region
          _
        $region24: #{tpu_custom_call.1} parent=11 // pred_fallthru
          _
        // Predicated region
        $region25: #{tpu_custom_call.1} parent=11 // pred_check
          %p285 = pneg %p130
        $region26: #{tpu_custom_call.1} parent=11 // pred_check_branch
          %287 = sbr.rel (%p285) target = $region28
        $region27: #{tpu_custom_call.1} parent=11 // pred_region
          _
        $region28: #{tpu_custom_call.1} parent=11 // pred_fallthru
          _
        // Predicated region
        $region29: #{tpu_custom_call.1} parent=11 // pred_check
          %p288 = pneg %p151
        $region30: #{tpu_custom_call.1} parent=11 // pred_check_branch
          %290 = sbr.rel (%p288) target = $region32
        $region31: #{tpu_custom_call.1} parent=11 // pred_region
          _
        $region32: #{tpu_custom_call.1} parent=11 // pred_fallthru
          _
        // Predicated region
        $region33: #{tpu_custom_call.1} parent=11 // pred_check
          %p291 = pneg %p172
        $region34: #{tpu_custom_call.1} parent=11 // pred_check_branch
          %293 = sbr.rel (%p291) target = $region36
        $region35: #{tpu_custom_call.1} parent=11 // pred_region
          _
        $region36: #{tpu_custom_call.1} parent=11 // pred_fallthru
          _
        // Predicated region
        $region37: #{tpu_custom_call.1} parent=11 // pred_check
          %p294 = pneg %p193
        $region38: #{tpu_custom_call.1} parent=11 // pred_check_branch
          %296 = sbr.rel (%p294) target = $region40
        $region39: #{tpu_custom_call.1} parent=11 // pred_region
          %s298 = ssub.s32 4608, 4608
          %299 = vsyncadd [#allocation5], %s298
          %s300 = sshll.u32 [#allocation4], 4
          %s301 = int_to_ptr.vmem [resolvable:$true] %s300
          %306 = dma.hbm_to_vmem [thread:$0]  %s7, 4608, %s301, [#allocation5], 128, 128, 8
        $region40: #{tpu_custom_call.1} parent=11 // pred_fallthru
          _
        // Predicated region
        $region41: #{tpu_custom_call.1} parent=11 // pred_check
          %p307 = pneg %p214
        $region42: #{tpu_custom_call.1} parent=11 // pred_check_branch
          %309 = sbr.rel (%p307) target = $region44
        $region43: #{tpu_custom_call.1} parent=11 // pred_region
          _
        $region44: #{tpu_custom_call.1} parent=11 // pred_fallthru
          _
        // Predicated region
        $region45: #{tpu_custom_call.1} parent=11 // pred_check
          %p310 = pneg %p235
        $region46: #{tpu_custom_call.1} parent=11 // pred_check_branch
          %312 = sbr.rel (%p310) target = $region48
        $region47: #{tpu_custom_call.1} parent=11 // pred_region
          _
        $region48: #{tpu_custom_call.1} parent=11 // pred_fallthru
          _
      $region12: #{tpu_custom_call.1} parent=5 // pred_fallthru
        _
      %p313 = scmp.lt.s32.totalorder %s20, 2
      // Predicated region
      $region49: #{tpu_custom_call.1} parent=5 // pred_check
        %p314 = pneg %p313
      $region50: #{tpu_custom_call.1} parent=5 // pred_check_branch
        %316 = sbr.rel (%p314) target = $region52
      $region51: #{tpu_custom_call.1} parent=5 // pred_region
        // Predicated region
        $region53: #{tpu_custom_call.1} parent=51 // pred_check
          %p317 = pneg %p40
        $region54: #{tpu_custom_call.1} parent=51 // pred_check_branch
          %319 = sbr.rel (%p317) target = $region56
        $region55: #{tpu_custom_call.1} parent=51 // pred_region
          %p320 = scmp.lt.s32.totalorder %s20, 1
          %s321 = scalar_select %p320, %s20, 1
          %s322 = smul.addr %s321, 8
          %s323 = smul.addr %s322, 8
          %s324 = scalar_lea.vmem %s0, %s323
        $region56: #{tpu_custom_call.1} parent=51 // pred_fallthru
          _
      $region52: #{tpu_custom_call.1} parent=5 // pred_fallthru
        _
      %p325 = scmp.le.s32.totalorder 1, %s20
      %p326 = scmp.lt.s32.totalorder %s20, 3
      %p327 = pnand %p325, %p326
      %p328 = pneg %p327
      // Predicated region
      $region57: #{tpu_custom_call.1} parent=5 // pred_check
        _
      $region58: #{tpu_custom_call.1} parent=5 // pred_check_branch
        %330 = sbr.rel (%p327) target = $region60
      $region59: #{tpu_custom_call.1} parent=5 // pred_region
        %s331 = ssub.s32 %s20, 1
        // Predicated region
        $region61: #{tpu_custom_call.1} parent=59 // pred_check
          %p332 = pneg %p193
        $region62: #{tpu_custom_call.1} parent=59 // pred_check_branch
          %334 = sbr.rel (%p332) target = $region64
        $region63: #{tpu_custom_call.1} parent=59 // pred_region
          %335 = dma.done [#allocation5], 4608
        $region64: #{tpu_custom_call.1} parent=59 // pred_fallthru
          _
        %p336 = scmp.lt.s32.totalorder %s25, 1
        %s337 = scalar_select %p336, %s25, 1
        %s338 = smul.addr %s337, 8
        %s339 = smul.addr %s338, 8
        %s340 = scalar_lea.vmem %s0, %s339
        %p341 = pneg %p46
        %p342 = pneg %p43
        %p343 = pneg %p67
        %p344 = pneg %p64
        %p345 = pneg %p88
        %p346 = pneg %p85
        %p347 = pneg %p109
        %p348 = pneg %p106
        %p349 = pneg %p130
        %p350 = pneg %p127
        %p351 = pneg %p151
        %p352 = pneg %p148
        %p353 = pneg %p172
        %p354 = pneg %p169
        %p355 = pneg %p193
        %p356 = pneg %p190
        %p357 = pneg %p214
        %p358 = pneg %p211
        %p359 = pneg %p235
        %p360 = pneg %p232
        %p361 = pneg %p261
        %p362 = pneg %p258
        %s363 = sand.u32 %s248, 1
        %s364 = scalar_lea.sflag [#allocation6], %s363
        %s365 = sand.u32 %s248, 1
        %s366 = smul.addr %s365, 16
        %s367 = scalar_lea.vmem [#allocation7], %s366
        %p368 = scmp.lt.s32.totalorder %s25, 1
        %s369 = scalar_select %p368, %s25, 1
        %s370 = smul.addr %s369, 8
        %s371 = smul.addr %s370, 8
        %s372 = scalar_lea.vmem %s0, %s371
        %v373 = vld [vmem:[%s372] sm:$0xff]
        %v374 = vld [vmem:[%s372 + $0x8] sm:$0xff]
        %v375 = vld [vmem:[%s372 + $0x10] sm:$0xff]
        %v376 = vld [vmem:[%s372 + $0x18] sm:$0xff]
        %v377 = vld [vmem:[%s372 + $0x20] sm:$0xff]
        %v378 = vld [vmem:[%s372 + $0x28] sm:$0xff]
        %v379 = vld [vmem:[%s372 + $0x30] sm:$0xff]
        %v380 = vld [vmem:[%s372 + $0x38] sm:$0xff]
        %v381 = vld [vmem:[%s1] sm:$0xff]
        %v382 = vld [vmem:[%s1 + $0x8] sm:$0xff]
        %v383 = vld [vmem:[%s1 + $0x10] sm:$0xff]
        %v384 = vld [vmem:[%s1 + $0x18] sm:$0x7]
        %vm385 = vcmask 220160
        %v387 = vsel %vm385, %v373, 0
        %v390 = vsel %vm385, %v374, 0
        %v393 = vsel %vm385, %v375, 0
        %v396 = vsel %vm385, %v376, 0
        %v399 = vsel %vm385, %v377, 0
        %v402 = vsel %vm385, %v378, 0
        %v405 = vsel %vm385, %v379, 0
        %v408 = vsel %vm385, %v380, 0
        %vm410 = vcmask 1042432
        %v412 = vsel %vm410, %v384, 0
        %414 = vmatprep.subr.mxu0 0.0
        %415 = vmatpush1.msra.mxu0 0.0
        %416 = vmatprep.subr.mxu0 0.0
        %417 = vmatpush1.msra.mxu0 0.0
        %418 = vmatprep.subr.mxu0 0.0
        %419 = vmatpush1.msra.mxu0 0.0
        %420 = vmatprep.subr.mxu0 0.0
        %421 = vmatpush1.msra.mxu0 0.0
        %422 = vmatprep.subr.mxu0 0.0
        %423 = vmatpush1.msra.mxu0 0.0
        %424 = vmatprep.subr.mxu0 0.0
        %425 = vmatpush1.msra.mxu0 0.0
        %426 = vmatprep.subr.mxu0 0.0
        %427 = vmatpush1.msra.mxu0 0.0
        %428 = vmatprep.subr.mxu0 0.0
        %429 = vmatpush1.msra.mxu0 0.0
        %430 = vmatprep.subr.mxu0 0.0
        %431 = vmatpush1.msra.mxu0 0.0
        %432 = vmatprep.subr.mxu0 0.0
        %433 = vmatpush1.msra.mxu0 0.0
        %434 = vmatprep.subr.mxu0 0.0
        %435 = vmatpush1.msra.mxu0 0.0
        %436 = vmatprep.subr.mxu0 0.0
        %437 = vmatpush1.msra.mxu0 0.0
        %438 = vmatprep.subr.mxu0 0.0
        %439 = vmatpush1.msra.mxu0 %v412
        %440 = vmatprep.subr.mxu0 0.0
        %441 = vmatpush1.msra.mxu0 %v383
        %442 = vmatprep.subr.mxu0 0.0
        %443 = vmatpush1.msra.mxu0 %v382
        %444 = vmatprep.subr.mxu0 0.0
        %445 = vmatpush1.msra.mxu0 %v381
        %446 = vmatprep.subr.mxu0 0.0
        %447 = vmatpush2.msra.mxu0 0.0
        %448 = vmatprep.subr.mxu0 0.0
        %449 = vmatpush2.msra.mxu0 0.0
        %450 = vmatprep.subr.mxu0 0.0
        %451 = vmatpush2.msra.mxu0 0.0
        %452 = vmatprep.subr.mxu0 0.0
        %453 = vmatpush2.msra.mxu0 0.0
        %454 = vmatprep.subr.mxu0 0.0
        %455 = vmatpush2.msra.mxu0 0.0
        %456 = vmatprep.subr.mxu0 0.0
        %457 = vmatpush2.msra.mxu0 0.0
        %458 = vmatprep.subr.mxu0 0.0
        %459 = vmatpush2.msra.mxu0 0.0
        %460 = vmatprep.subr.mxu0 0.0
        %461 = vmatpush2.msra.mxu0 0.0
        %462 = vmatprep.subr.mxu0 0.0
        %463 = vmatpush2.msra.mxu0 0.0
        %464 = vmatprep.subr.mxu0 0.0
        %465 = vmatpush2.msra.mxu0 0.0
        %466 = vmatprep.subr.mxu0 0.0
        %467 = vmatpush2.msra.mxu0 0.0
        %468 = vmatprep.subr.mxu0 0.0
        %469 = vmatpush2.msra.mxu0 0.0
        %470 = vmatprep.subr.mxu0 0.0
        %471 = vmatpush2.msra.mxu0 0.0
        %472 = vmatprep.subr.mxu0 0.0
        %473 = vmatpush2.msra.mxu0 0.0
        %474 = vmatprep.subr.mxu0 0.0
        %475 = vmatpush2.msra.mxu0 0.0
        %476 = vmatprep.subr.mxu0 0.0
        %477 = vmatpush2.msra.mxu0 0.0
        %478 = vmatprep.mubr.f32.mxu0 0.0
        %479 = vmatmul.mubr.f32.gmra.mxu0 %v387
        %v480 = vpop.f32.mrf.mxu0
        %v481 = vadd.f32 0.0, %v480
        %v482 = vpop.f32.mrf.mxu0
        %483 = vmatprep.mubr.f32.mxu0 0.0
        %484 = vmatmul.mubr.f32.gmra.mxu0 %v390
        %v485 = vpop.f32.mrf.mxu0
        %v486 = vadd.f32 0.0, %v485
        %v487 = vpop.f32.mrf.mxu0
        %488 = vmatprep.mubr.f32.mxu0 0.0
        %489 = vmatmul.mubr.f32.gmra.mxu0 %v393
        %v490 = vpop.f32.mrf.mxu0
        %v491 = vadd.f32 0.0, %v490
        %v492 = vpop.f32.mrf.mxu0
        %493 = vmatprep.mubr.f32.mxu0 0.0
        %494 = vmatmul.mubr.f32.gmra.mxu0 %v396
        %v495 = vpop.f32.mrf.mxu0
        %v496 = vadd.f32 0.0, %v495
        %v497 = vpop.f32.mrf.mxu0
        %498 = vmatprep.mubr.f32.mxu0 0.0
        %499 = vmatmul.mubr.f32.gmra.mxu0 %v399
        %v500 = vpop.f32.mrf.mxu0
        %v501 = vadd.f32 0.0, %v500
        %v502 = vpop.f32.mrf.mxu0
        %503 = vmatprep.mubr.f32.mxu0 0.0
        %504 = vmatmul.mubr.f32.gmra.mxu0 %v402
        %v505 = vpop.f32.mrf.mxu0
        %v506 = vadd.f32 0.0, %v505
        %v507 = vpop.f32.mrf.mxu0
        %508 = vmatprep.mubr.f32.mxu0 0.0
        %509 = vmatmul.mubr.f32.gmra.mxu0 %v405
        %v510 = vpop.f32.mrf.mxu0
        %v511 = vadd.f32 0.0, %v510
        %v512 = vpop.f32.mrf.mxu0
        %513 = vmatprep.mubr.f32.mxu0 0.0
        %514 = vmatmul.mubr.f32.gmra.mxu0 %v408
        %v515 = vpop.f32.mrf.mxu0
        %v516 = vadd.f32 0.0, %v515
        %v517 = vpop.f32.mrf.mxu0
        %518 = vdwg.mxu0
        %v519 = vmul.f32 %v481, 0.5
        %v520 = vmul.f32 %v486, 0.5
        %v521 = vmul.f32 %v491, 0.5
        %v522 = vmul.f32 %v496, 0.5
        %v523 = vmul.f32 %v501, 0.5
        %v524 = vmul.f32 %v506, 0.5
        %v525 = vmul.f32 %v511, 0.5
        %v526 = vmul.f32 %v516, 0.5
        %v527 = vmul.f32 %v481, 0.70710677
        %v528 = vmul.f32 %v486, 0.70710677
        %v529 = vmul.f32 %v491, 0.70710677
        %v530 = vmul.f32 %v496, 0.70710677
        %v531 = vmul.f32 %v501, 0.70710677
        %v532 = vmul.f32 %v506, 0.70710677
        %v533 = vmul.f32 %v511, 0.70710677
        %v534 = vmul.f32 %v516, 0.70710677
        %v535 = verf.f32.pop %v527
        %v536 = verf.f32.pop %v528
        %v537 = verf.f32.pop %v529
        %v538 = verf.f32.pop %v530
        %v539 = verf.f32.pop %v531
        %v540 = verf.f32.pop %v532
        %v541 = verf.f32.pop %v533
        %v542 = verf.f32.pop %v534
        %v543 = vadd.f32 %v535, 1.0
        %v544 = vadd.f32 %v536, 1.0
        %v545 = vadd.f32 %v537, 1.0
        %v546 = vadd.f32 %v538, 1.0
        %v547 = vadd.f32 %v539, 1.0
        %v548 = vadd.f32 %v540, 1.0
        %v549 = vadd.f32 %v541, 1.0
        %v550 = vadd.f32 %v542, 1.0
        %v551 = vmul.f32 %v519, %v543
        %v552 = vmul.f32 %v520, %v544
        %v553 = vmul.f32 %v521, %v545
        %v554 = vmul.f32 %v522, %v546
        %v555 = vmul.f32 %v523, %v547
        %v556 = vmul.f32 %v524, %v548
        %v557 = vmul.f32 %v525, %v549
        %v558 = vmul.f32 %v526, %v550
        %v559 = vld [vmem:[%s2] sm:$0x1]
        %v561 = vlaneseq
        %v562 = vshrl.u32 %v561, 7
        %v563 = vsub.s32 0, %v562
        %v564 = vrot.slane %v559, %v563
        %v566 = vmul.f32 %v551, %v564
        %v567 = vmul.f32 %v552, %v564
        %v568 = vmul.f32 %v553, %v564
        %v569 = vmul.f32 %v554, %v564
        %v570 = vmul.f32 %v555, %v564
        %v571 = vmul.f32 %v556, %v564
        %v572 = vmul.f32 %v557, %v564
        %v573 = vmul.f32 %v558, %v564
        %v574 = vld [vmem:[%s3] sm:$0x1]
        %v576 = vlaneseq
        %v577 = vshrl.u32 %v576, 7
        %v578 = vsub.s32 0, %v577
        %v579 = vrot.slane %v574, %v578
        %v581 = vadd.f32 %v566, %v579
        %v582 = vadd.f32 %v567, %v579
        %v583 = vadd.f32 %v568, %v579
        %v584 = vadd.f32 %v569, %v579
        %v585 = vadd.f32 %v570, %v579
        %v586 = vadd.f32 %v571, %v579
        %v587 = vadd.f32 %v572, %v579
        %v588 = vadd.f32 %v573, %v579
        %vm589 = vcmask 130048
        %590 = vst.msk [vmem:[#allocation2] sm:$0xff] %vm589, 0.0
        %591 = vst.msk [vmem:[#allocation2 + $0x8] sm:$0xff] %vm589, 0.0
        %592 = vst.msk [vmem:[#allocation2 + $0x10] sm:$0xff] %vm589, 0.0
        %593 = vst.msk [vmem:[#allocation2 + $0x18] sm:$0xff] %vm589, 0.0
        %594 = vst.msk [vmem:[#allocation2 + $0x20] sm:$0xff] %vm589, 0.0
        %595 = vst.msk [vmem:[#allocation2 + $0x28] sm:$0xff] %vm589, 0.0
        %596 = vst.msk [vmem:[#allocation2 + $0x30] sm:$0xff] %vm589, 0.0
        %597 = vst.msk [vmem:[#allocation2 + $0x38] sm:$0xff] %vm589, 0.0
        %598 = vst.msk [vmem:[#allocation2 + $0x40] sm:$0xff] %vm589, 0.0
        %599 = vst.msk [vmem:[#allocation2 + $0x48] sm:$0xff] %vm589, 0.0
        %600 = vst.msk [vmem:[#allocation2 + $0x50] sm:$0xff] %vm589, 0.0
        %601 = vst.msk [vmem:[#allocation2 + $0x58] sm:$0xff] %vm589, 0.0
        %602 = vst.msk [vmem:[#allocation2 + $0x10] sm:$0xff] %vm589, %v581
        %603 = vst.msk [vmem:[#allocation2 + $0x18] sm:$0xff] %vm589, %v582
        %604 = vst.msk [vmem:[#allocation2 + $0x20] sm:$0xff] %vm589, %v583
        %605 = vst.msk [vmem:[#allocation2 + $0x28] sm:$0xff] %vm589, %v584
        %606 = vst.msk [vmem:[#allocation2 + $0x30] sm:$0xff] %vm589, %v585
        %607 = vst.msk [vmem:[#allocation2 + $0x38] sm:$0xff] %vm589, %v586
        %608 = vst.msk [vmem:[#allocation2 + $0x40] sm:$0xff] %vm589, %v587
        %609 = vst.msk [vmem:[#allocation2 + $0x48] sm:$0xff] %vm589, %v588
        %v610 = vlaneseq
        %v611 = vshrl.u32 %v610, 7
        %v612 = vadd.s32 %v611, 8
        %v613 = vadd.s32 %v611, 16
        %v614 = vadd.s32 %v611, 24
        %v615 = vadd.s32 %v611, 32
        %v616 = vadd.s32 %v611, 40
        %v617 = vadd.s32 %v611, 48
        %v618 = vadd.s32 %v611, 56
        %vm619 = vcmp.lt.s32.totalorder %v611, 0
        %v620 = vsub.s32 0, %v611
        %v621 = vsel %vm619, %v620, %v611
        %v622 = vshrl.u32 %v621, 3
        %v623 = vand.u32 %v621, 7
        %v624 = vsub.s32 0, %v623
        %v625 = vsel %vm619, %v624, %v623
        %vm626 = vcmp.lt.s32.totalorder %v612, 0
        %v627 = vsub.s32 0, %v612
        %v628 = vsel %vm626, %v627, %v612
        %v629 = vshrl.u32 %v628, 3
        %v630 = vand.u32 %v628, 7
        %v631 = vsub.s32 0, %v630
        %v632 = vsel %vm626, %v631, %v630
        %vm633 = vcmp.lt.s32.totalorder %v613, 0
        %v634 = vsub.s32 0, %v613
        %v635 = vsel %vm633, %v634, %v613
        %v636 = vshrl.u32 %v635, 3
        %v637 = vand.u32 %v635, 7
        %v638 = vsub.s32 0, %v637
        %v639 = vsel %vm633, %v638, %v637
        %vm640 = vcmp.lt.s32.totalorder %v614, 0
        %v641 = vsub.s32 0, %v614
        %v642 = vsel %vm640, %v641, %v614
        %v643 = vshrl.u32 %v642, 3
        %v644 = vand.u32 %v642, 7
        %v645 = vsub.s32 0, %v644
        %v646 = vsel %vm640, %v645, %v644
        %vm647 = vcmp.lt.s32.totalorder %v615, 0
        %v648 = vsub.s32 0, %v615
        %v649 = vsel %vm647, %v648, %v615
        %v650 = vshrl.u32 %v649, 3
        %v651 = vand.u32 %v649, 7
        %v652 = vsub.s32 0, %v651
        %v653 = vsel %vm647, %v652, %v651
        %vm654 = vcmp.lt.s32.totalorder %v616, 0
        %v655 = vsub.s32 0, %v616
        %v656 = vsel %vm654, %v655, %v616
        %v657 = vshrl.u32 %v656, 3
        %v658 = vand.u32 %v656, 7
        %v659 = vsub.s32 0, %v658
        %v660 = vsel %vm654, %v659, %v658
        %vm661 = vcmp.lt.s32.totalorder %v617, 0
        %v662 = vsub.s32 0, %v617
        %v663 = vsel %vm661, %v662, %v617
        %v664 = vshrl.u32 %v663, 3
        %v665 = vand.u32 %v663, 7
        %v666 = vsub.s32 0, %v665
        %v667 = vsel %vm661, %v666, %v665
        %vm668 = vcmp.lt.s32.totalorder %v618, 0
        %v669 = vsub.s32 0, %v618
        %v670 = vsel %vm668, %v669, %v618
        %v671 = vshrl.u32 %v670, 3
        %v672 = vand.u32 %v670, 7
        %v673 = vsub.s32 0, %v672
        %v674 = vsel %vm668, %v673, %v672
        %vm675 = vcmp.ne.s32.totalorder %v625, 0
        %vm676 = vcmp.ne.s32.totalorder %v632, 0
        %vm677 = vcmp.ne.s32.totalorder %v639, 0
        %vm678 = vcmp.ne.s32.totalorder %v646, 0
        %vm679 = vcmp.ne.s32.totalorder %v653, 0
        %vm680 = vcmp.ne.s32.totalorder %v660, 0
        %vm681 = vcmp.ne.s32.totalorder %v667, 0
        %vm682 = vcmp.ne.s32.totalorder %v674, 0
        %vm683 = vcmp.lt.s32.totalorder %v625, 0
        %vm684 = vcmp.lt.s32.totalorder %v632, 0
        %vm685 = vcmp.lt.s32.totalorder %v639, 0
        %vm686 = vcmp.lt.s32.totalorder %v646, 0
        %vm687 = vcmp.lt.s32.totalorder %v653, 0
        %vm688 = vcmp.lt.s32.totalorder %v660, 0
        %vm689 = vcmp.lt.s32.totalorder %v667, 0
        %vm690 = vcmp.lt.s32.totalorder %v674, 0
        %vm691 = vmand %vm683, %vm675
        %vm692 = vmand %vm684, %vm676
        %vm693 = vmand %vm685, %vm677
        %vm694 = vmand %vm686, %vm678
        %vm695 = vmand %vm687, %vm679
        %vm696 = vmand %vm688, %vm680
        %vm697 = vmand %vm689, %vm681
        %vm698 = vmand %vm690, %vm682
        %v699 = vadd.s32 %v625, 8
        %v700 = vadd.s32 %v632, 8
        %v701 = vadd.s32 %v639, 8
        %v702 = vadd.s32 %v646, 8
        %v703 = vadd.s32 %v653, 8
        %v704 = vadd.s32 %v660, 8
        %v705 = vadd.s32 %v667, 8
        %v706 = vadd.s32 %v674, 8
        %v707 = vsel %vm691, %v699, %v625
        %v708 = vsel %vm692, %v700, %v632
        %v709 = vsel %vm693, %v701, %v639
        %v710 = vsel %vm694, %v702, %v646
        %v711 = vsel %vm695, %v703, %v653
        %v712 = vsel %vm696, %v704, %v660
        %v713 = vsel %vm697, %v705, %v667
        %v714 = vsel %vm698, %v706, %v674
        %vm715 = vcmp.gt.s32.totalorder %v707, 0
        %vm716 = vcmp.gt.s32.totalorder %v708, 0
        %vm717 = vcmp.gt.s32.totalorder %v709, 0
        %vm718 = vcmp.gt.s32.totalorder %v710, 0
        %vm719 = vcmp.gt.s32.totalorder %v711, 0
        %vm720 = vcmp.gt.s32.totalorder %v712, 0
        %vm721 = vcmp.gt.s32.totalorder %v713, 0
        %vm722 = vcmp.gt.s32.totalorder %v714, 0
        %v723 = vsel %vm715, 1, 0
        %v724 = vsel %vm716, 1, 0
        %v725 = vsel %vm717, 1, 0
        %v726 = vsel %vm718, 1, 0
        %v727 = vsel %vm719, 1, 0
        %v728 = vsel %vm720, 1, 0
        %v729 = vsel %vm721, 1, 0
        %v730 = vsel %vm722, 1, 0
        %v731 = vcvt.s32.f32 %v723
        %v732 = vcvt.s32.f32 %v724
        %v733 = vcvt.s32.f32 %v725
        %v734 = vcvt.s32.f32 %v726
        %v735 = vcvt.s32.f32 %v727
        %v736 = vcvt.s32.f32 %v728
        %v737 = vcvt.s32.f32 %v729
        %v738 = vcvt.s32.f32 %v730
        %vm739 = vcmp.lt.s32.totalorder %v707, 7
        %vm740 = vcmp.lt.s32.totalorder %v708, 7
        %vm741 = vcmp.lt.s32.totalorder %v709, 7
        %vm742 = vcmp.lt.s32.totalorder %v710, 7
        %vm743 = vcmp.lt.s32.totalorder %v711, 7
        %vm744 = vcmp.lt.s32.totalorder %v712, 7
        %vm745 = vcmp.lt.s32.totalorder %v713, 7
        %vm746 = vcmp.lt.s32.totalorder %v714, 7
        %v747 = vsel %vm739, 1, 0
        %v748 = vsel %vm740, 1, 0
        %v749 = vsel %vm741, 1, 0
        %v750 = vsel %vm742, 1, 0
        %v751 = vsel %vm743, 1, 0
        %v752 = vsel %vm744, 1, 0
        %v753 = vsel %vm745, 1, 0
        %v754 = vsel %vm746, 1, 0
        %v755 = vcvt.s32.f32 %v747
        %v756 = vcvt.s32.f32 %v748
        %v757 = vcvt.s32.f32 %v749
        %v758 = vcvt.s32.f32 %v750
        %v759 = vcvt.s32.f32 %v751
        %v760 = vcvt.s32.f32 %v752
        %v761 = vcvt.s32.f32 %v753
        %v762 = vcvt.s32.f32 %v754
        %v763 = vld [vmem:[#allocation2 + $0x7] sm:$0xff]
        %v764 = vld [vmem:[#allocation2 + $0xf] sm:$0xff]
        %v765 = vld [vmem:[#allocation2 + $0x17] sm:$0xff]
        %v766 = vld [vmem:[#allocation2 + $0x1f] sm:$0xff]
        %v767 = vld [vmem:[#allocation2 + $0x27] sm:$0xff]
        %v768 = vld [vmem:[#allocation2 + $0x2f] sm:$0xff]
        %v769 = vld [vmem:[#allocation2 + $0x37] sm:$0xff]
        %v770 = vld [vmem:[#allocation2 + $0x3f] sm:$0xff]
        %v771 = vmul.f32 %v763, %v731
        %v772 = vmul.f32 %v764, %v732
        %v773 = vmul.f32 %v765, %v733
        %v774 = vmul.f32 %v766, %v734
        %v775 = vmul.f32 %v767, %v735
        %v776 = vmul.f32 %v768, %v736
        %v777 = vmul.f32 %v769, %v737
        %v778 = vmul.f32 %v770, %v738
        %v779 = vld [vmem:[%s4] sm:$0xff]
        %v780 = vld [vmem:[%s4 + $0x8] sm:$0xff]
        %v781 = vld [vmem:[#allocation2 + $0x8] sm:$0xff]
        %v782 = vld [vmem:[#allocation2 + $0x10] sm:$0xff]
        %v783 = vld [vmem:[#allocation2 + $0x18] sm:$0xff]
        %v784 = vld [vmem:[#allocation2 + $0x20] sm:$0xff]
        %v785 = vld [vmem:[#allocation2 + $0x28] sm:$0xff]
        %v786 = vld [vmem:[#allocation2 + $0x30] sm:$0xff]
        %v787 = vld [vmem:[#allocation2 + $0x38] sm:$0xff]
        %v788 = vld [vmem:[#allocation2 + $0x40] sm:$0xff]
        %s789 = scalar_lea.vmem %s4, 16
        %v790 = vld [vmem:[%s789] sm:$0xff]
        %v791 = vld [vmem:[%s789 + $0x8] sm:$0xff]
        %v793 = vsel %vm589, %v781, 0
        %v796 = vsel %vm589, %v782, 0
        %v799 = vsel %vm589, %v783, 0
        %v802 = vsel %vm589, %v784, 0
        %v805 = vsel %vm589, %v785, 0
        %v808 = vsel %vm589, %v786, 0
        %v811 = vsel %vm589, %v787, 0
        %v814 = vsel %vm589, %v788, 0
        %816 = vmatprep.subr.mxu0 0.0
        %817 = vmatpush1.msra.mxu0 0.0
        %818 = vmatprep.subr.mxu0 0.0
        %819 = vmatpush1.msra.mxu0 0.0
        %820 = vmatprep.subr.mxu0 0.0
        %821 = vmatpush1.msra.mxu0 0.0
        %822 = vmatprep.subr.mxu0 0.0
        %823 = vmatpush1.msra.mxu0 0.0
        %824 = vmatprep.subr.mxu0 0.0
        %825 = vmatpush1.msra.mxu0 0.0
        %826 = vmatprep.subr.mxu0 0.0
        %827 = vmatpush1.msra.mxu0 0.0
        %828 = vmatprep.subr.mxu0 0.0
        %829 = vmatpush1.msra.mxu0 0.0
        %830 = vmatprep.subr.mxu0 0.0
        %831 = vmatpush1.msra.mxu0 0.0
        %832 = vmatprep.subr.mxu0 0.0
        %833 = vmatpush1.msra.mxu0 0.0
        %834 = vmatprep.subr.mxu0 0.0
        %835 = vmatpush1.msra.mxu0 0.0
        %836 = vmatprep.subr.mxu0 0.0
        %837 = vmatpush1.msra.mxu0 0.0
        %838 = vmatprep.subr.mxu0 0.0
        %839 = vmatpush1.msra.mxu0 0.0
        %840 = vmatprep.subr.mxu0 0.0
        %841 = vmatpush1.msra.mxu0 0.0
        %842 = vmatprep.subr.mxu0 0.0
        %843 = vmatpush1.msra.mxu0 0.0
        %844 = vmatprep.subr.mxu0 0.0
        %845 = vmatpush1.msra.mxu0 %v791
        %846 = vmatprep.subr.mxu0 0.0
        %847 = vmatpush1.msra.mxu0 %v790
        %848 = vmatprep.subr.mxu0 0.0
        %849 = vmatpush2.msra.mxu0 0.0
        %850 = vmatprep.subr.mxu0 0.0
        %851 = vmatpush2.msra.mxu0 0.0
        %852 = vmatprep.subr.mxu0 0.0
        %853 = vmatpush2.msra.mxu0 0.0
        %854 = vmatprep.subr.mxu0 0.0
        %855 = vmatpush2.msra.mxu0 0.0
        %856 = vmatprep.subr.mxu0 0.0
        %857 = vmatpush2.msra.mxu0 0.0
        %858 = vmatprep.subr.mxu0 0.0
        %859 = vmatpush2.msra.mxu0 0.0
        %860 = vmatprep.subr.mxu0 0.0
        %861 = vmatpush2.msra.mxu0 0.0
        %862 = vmatprep.subr.mxu0 0.0
        %863 = vmatpush2.msra.mxu0 0.0
        %864 = vmatprep.subr.mxu0 0.0
        %865 = vmatpush2.msra.mxu0 0.0
        %866 = vmatprep.subr.mxu0 0.0
        %867 = vmatpush2.msra.mxu0 0.0
        %868 = vmatprep.subr.mxu0 0.0
        %869 = vmatpush2.msra.mxu0 0.0
        %870 = vmatprep.subr.mxu0 0.0
        %871 = vmatpush2.msra.mxu0 0.0
        %872 = vmatprep.subr.mxu0 0.0
        %873 = vmatpush2.msra.mxu0 0.0
        %874 = vmatprep.subr.mxu0 0.0
        %875 = vmatpush2.msra.mxu0 0.0
        %876 = vmatprep.subr.mxu0 0.0
        %877 = vmatpush2.msra.mxu0 0.0
        %878 = vmatprep.subr.mxu0 0.0
        %879 = vmatpush2.msra.mxu0 0.0
        %880 = vmatprep.mubr.f32.mxu0 0.0
        %881 = vmatmul.mubr.f32.gmra.mxu0 %v793
        %v882 = vpop.f32.mrf.mxu0
        %v883 = vadd.f32 0.0, %v882
        %v884 = vpop.f32.mrf.mxu0
        %885 = vmatprep.mubr.f32.mxu0 0.0
        %886 = vmatmul.mubr.f32.gmra.mxu0 %v796
        %v887 = vpop.f32.mrf.mxu0
        %v888 = vadd.f32 0.0, %v887
        %v889 = vpop.f32.mrf.mxu0
        %890 = vmatprep.mubr.f32.mxu0 0.0
        %891 = vmatmul.mubr.f32.gmra.mxu0 %v799
        %v892 = vpop.f32.mrf.mxu0
        %v893 = vadd.f32 0.0, %v892
        %v894 = vpop.f32.mrf.mxu0
        %895 = vmatprep.mubr.f32.mxu0 0.0
        %896 = vmatmul.mubr.f32.gmra.mxu0 %v802
        %v897 = vpop.f32.mrf.mxu0
        %v898 = vadd.f32 0.0, %v897
        %v899 = vpop.f32.mrf.mxu0
        %900 = vmatprep.mubr.f32.mxu0 0.0
        %901 = vmatmul.mubr.f32.gmra.mxu0 %v805
        %v902 = vpop.f32.mrf.mxu0
        %v903 = vadd.f32 0.0, %v902
        %v904 = vpop.f32.mrf.mxu0
        %905 = vmatprep.mubr.f32.mxu0 0.0
        %906 = vmatmul.mubr.f32.gmra.mxu0 %v808
        %v907 = vpop.f32.mrf.mxu0
        %v908 = vadd.f32 0.0, %v907
        %v909 = vpop.f32.mrf.mxu0
        %910 = vmatprep.mubr.f32.mxu0 0.0
        %911 = vmatmul.mubr.f32.gmra.mxu0 %v811
        %v912 = vpop.f32.mrf.mxu0
        %v913 = vadd.f32 0.0, %v912
        %v914 = vpop.f32.mrf.mxu0
        %915 = vmatprep.mubr.f32.mxu0 0.0
        %916 = vmatmul.mubr.f32.gmra.mxu0 %v814
        %v917 = vpop.f32.mrf.mxu0
        %v918 = vadd.f32 0.0, %v917
        %v919 = vpop.f32.mrf.mxu0
        %920 = vdwg.mxu0
        %v922 = vsel %vm589, %v771, 0
        %v925 = vsel %vm589, %v772, 0
        %v928 = vsel %vm589, %v773, 0
        %v931 = vsel %vm589, %v774, 0
        %v934 = vsel %vm589, %v775, 0
        %v937 = vsel %vm589, %v776, 0
        %v940 = vsel %vm589, %v777, 0
        %v943 = vsel %vm589, %v778, 0
        %945 = vmatprep.subr.mxu0 0.0
        %946 = vmatpush1.msra.mxu0 0.0
        %947 = vmatprep.subr.mxu0 0.0
        %948 = vmatpush1.msra.mxu0 0.0
        %949 = vmatprep.subr.mxu0 0.0
        %950 = vmatpush1.msra.mxu0 0.0
        %951 = vmatprep.subr.mxu0 0.0
        %952 = vmatpush1.msra.mxu0 0.0
        %953 = vmatprep.subr.mxu0 0.0
        %954 = vmatpush1.msra.mxu0 0.0
        %955 = vmatprep.subr.mxu0 0.0
        %956 = vmatpush1.msra.mxu0 0.0
        %957 = vmatprep.subr.mxu0 0.0
        %958 = vmatpush1.msra.mxu0 0.0
        %959 = vmatprep.subr.mxu0 0.0
        %960 = vmatpush1.msra.mxu0 0.0
        %961 = vmatprep.subr.mxu0 0.0
        %962 = vmatpush1.msra.mxu0 0.0
        %963 = vmatprep.subr.mxu0 0.0
        %964 = vmatpush1.msra.mxu0 0.0
        %965 = vmatprep.subr.mxu0 0.0
        %966 = vmatpush1.msra.mxu0 0.0
        %967 = vmatprep.subr.mxu0 0.0
        %968 = vmatpush1.msra.mxu0 0.0
        %969 = vmatprep.subr.mxu0 0.0
        %970 = vmatpush1.msra.mxu0 0.0
        %971 = vmatprep.subr.mxu0 0.0
        %972 = vmatpush1.msra.mxu0 0.0
        %973 = vmatprep.subr.mxu0 0.0
        %974 = vmatpush1.msra.mxu0 %v780
        %975 = vmatprep.subr.mxu0 0.0
        %976 = vmatpush1.msra.mxu0 %v779
        %977 = vmatprep.subr.mxu0 0.0
        %978 = vmatpush2.msra.mxu0 0.0
        %979 = vmatprep.subr.mxu0 0.0
        %980 = vmatpush2.msra.mxu0 0.0
        %981 = vmatprep.subr.mxu0 0.0
        %982 = vmatpush2.msra.mxu0 0.0
        %983 = vmatprep.subr.mxu0 0.0
        %984 = vmatpush2.msra.mxu0 0.0
        %985 = vmatprep.subr.mxu0 0.0
        %986 = vmatpush2.msra.mxu0 0.0
        %987 = vmatprep.subr.mxu0 0.0
        %988 = vmatpush2.msra.mxu0 0.0
        %989 = vmatprep.subr.mxu0 0.0
        %990 = vmatpush2.msra.mxu0 0.0
        %991 = vmatprep.subr.mxu0 0.0
        %992 = vmatpush2.msra.mxu0 0.0
        %993 = vmatprep.subr.mxu0 0.0
        %994 = vmatpush2.msra.mxu0 0.0
        %995 = vmatprep.subr.mxu0 0.0
        %996 = vmatpush2.msra.mxu0 0.0
        %997 = vmatprep.subr.mxu0 0.0
        %998 = vmatpush2.msra.mxu0 0.0
        %999 = vmatprep.subr.mxu0 0.0
        %1000 = vmatpush2.msra.mxu0 0.0
        %1001 = vmatprep.subr.mxu0 0.0
        %1002 = vmatpush2.msra.mxu0 0.0
        %1003 = vmatprep.subr.mxu0 0.0
        %1004 = vmatpush2.msra.mxu0 0.0
        %1005 = vmatprep.subr.mxu0 0.0
        %1006 = vmatpush2.msra.mxu0 0.0
        %1007 = vmatprep.subr.mxu0 0.0
        %1008 = vmatpush2.msra.mxu0 0.0
        %1009 = vmatprep.mubr.f32.mxu0 0.0
        %1010 = vmatmul.mubr.f32.gmra.mxu0 %v922
        %v1011 = vpop.f32.mrf.mxu0
        %v1012 = vadd.f32 %v883, %v1011
        %v1013 = vpop.f32.mrf.mxu0
        %1014 = vmatprep.mubr.f32.mxu0 0.0
        %1015 = vmatmul.mubr.f32.gmra.mxu0 %v925
        %v1016 = vpop.f32.mrf.mxu0
        %v1017 = vadd.f32 %v888, %v1016
        %v1018 = vpop.f32.mrf.mxu0
        %1019 = vmatprep.mubr.f32.mxu0 0.0
        %1020 = vmatmul.mubr.f32.gmra.mxu0 %v928
        %v1021 = vpop.f32.mrf.mxu0
        %v1022 = vadd.f32 %v893, %v1021
        %v1023 = vpop.f32.mrf.mxu0
        %1024 = vmatprep.mubr.f32.mxu0 0.0
        %1025 = vmatmul.mubr.f32.gmra.mxu0 %v931
        %v1026 = vpop.f32.mrf.mxu0
        %v1027 = vadd.f32 %v898, %v1026
        %v1028 = vpop.f32.mrf.mxu0
        %1029 = vmatprep.mubr.f32.mxu0 0.0
        %1030 = vmatmul.mubr.f32.gmra.mxu0 %v934
        %v1031 = vpop.f32.mrf.mxu0
        %v1032 = vadd.f32 %v903, %v1031
        %v1033 = vpop.f32.mrf.mxu0
        %1034 = vmatprep.mubr.f32.mxu0 0.0
        %1035 = vmatmul.mubr.f32.gmra.mxu0 %v937
        %v1036 = vpop.f32.mrf.mxu0
        %v1037 = vadd.f32 %v908, %v1036
        %v1038 = vpop.f32.mrf.mxu0
        %1039 = vmatprep.mubr.f32.mxu0 0.0
        %1040 = vmatmul.mubr.f32.gmra.mxu0 %v940
        %v1041 = vpop.f32.mrf.mxu0
        %v1042 = vadd.f32 %v913, %v1041
        %v1043 = vpop.f32.mrf.mxu0
        %1044 = vmatprep.mubr.f32.mxu0 0.0
        %1045 = vmatmul.mubr.f32.gmra.mxu0 %v943
        %v1046 = vpop.f32.mrf.mxu0
        %v1047 = vadd.f32 %v918, %v1046
        %v1048 = vpop.f32.mrf.mxu0
        %1049 = vdwg.mxu0
        %v1050 = vld [vmem:[#allocation2 + $0x9] sm:$0xff]
        %v1051 = vld [vmem:[#allocation2 + $0x11] sm:$0xff]
        %v1052 = vld [vmem:[#allocation2 + $0x19] sm:$0xff]
        %v1053 = vld [vmem:[#allocation2 + $0x21] sm:$0xff]
        %v1054 = vld [vmem:[#allocation2 + $0x29] sm:$0xff]
        %v1055 = vld [vmem:[#allocation2 + $0x31] sm:$0xff]
        %v1056 = vld [vmem:[#allocation2 + $0x39] sm:$0xff]
        %v1057 = vld [vmem:[#allocation2 + $0x41] sm:$0xff]
        %v1058 = vmul.f32 %v1050, %v755
        %v1059 = vmul.f32 %v1051, %v756
        %v1060 = vmul.f32 %v1052, %v757
        %v1061 = vmul.f32 %v1053, %v758
        %v1062 = vmul.f32 %v1054, %v759
        %v1063 = vmul.f32 %v1055, %v760
        %v1064 = vmul.f32 %v1056, %v761
        %v1065 = vmul.f32 %v1057, %v762
        %s1066 = scalar_lea.vmem %s4, 32
        %v1067 = vld [vmem:[%s1066] sm:$0xff]
        %v1068 = vld [vmem:[%s1066 + $0x8] sm:$0xff]
        %v1070 = vsel %vm589, %v1058, 0
        %v1073 = vsel %vm589, %v1059, 0
        %v1076 = vsel %vm589, %v1060, 0
        %v1079 = vsel %vm589, %v1061, 0
        %v1082 = vsel %vm589, %v1062, 0
        %v1085 = vsel %vm589, %v1063, 0
        %v1088 = vsel %vm589, %v1064, 0
        %v1091 = vsel %vm589, %v1065, 0
        %1093 = vmatprep.subr.mxu0 0.0
        %1094 = vmatpush1.msra.mxu0 0.0
        %1095 = vmatprep.subr.mxu0 0.0
        %1096 = vmatpush1.msra.mxu0 0.0
        %1097 = vmatprep.subr.mxu0 0.0
        %1098 = vmatpush1.msra.mxu0 0.0
        %1099 = vmatprep.subr.mxu0 0.0
        %1100 = vmatpush1.msra.mxu0 0.0
        %1101 = vmatprep.subr.mxu0 0.0
        %1102 = vmatpush1.msra.mxu0 0.0
        %1103 = vmatprep.subr.mxu0 0.0
        %1104 = vmatpush1.msra.mxu0 0.0
        %1105 = vmatprep.subr.mxu0 0.0
        %1106 = vmatpush1.msra.mxu0 0.0
        %1107 = vmatprep.subr.mxu0 0.0
        %1108 = vmatpush1.msra.mxu0 0.0
        %1109 = vmatprep.subr.mxu0 0.0
        %1110 = vmatpush1.msra.mxu0 0.0
        %1111 = vmatprep.subr.mxu0 0.0
        %1112 = vmatpush1.msra.mxu0 0.0
        %1113 = vmatprep.subr.mxu0 0.0
        %1114 = vmatpush1.msra.mxu0 0.0
        %1115 = vmatprep.subr.mxu0 0.0
        %1116 = vmatpush1.msra.mxu0 0.0
        %1117 = vmatprep.subr.mxu0 0.0
        %1118 = vmatpush1.msra.mxu0 0.0
        %1119 = vmatprep.subr.mxu0 0.0
        %1120 = vmatpush1.msra.mxu0 0.0
        %1121 = vmatprep.subr.mxu0 0.0
        %1122 = vmatpush1.msra.mxu0 %v1068
        %1123 = vmatprep.subr.mxu0 0.0
        %1124 = vmatpush1.msra.mxu0 %v1067
        %1125 = vmatprep.subr.mxu0 0.0
        %1126 = vmatpush2.msra.mxu0 0.0
        %1127 = vmatprep.subr.mxu0 0.0
        %1128 = vmatpush2.msra.mxu0 0.0
        %1129 = vmatprep.subr.mxu0 0.0
        %1130 = vmatpush2.msra.mxu0 0.0
        %1131 = vmatprep.subr.mxu0 0.0
        %1132 = vmatpush2.msra.mxu0 0.0
        %1133 = vmatprep.subr.mxu0 0.0
        %1134 = vmatpush2.msra.mxu0 0.0
        %1135 = vmatprep.subr.mxu0 0.0
        %1136 = vmatpush2.msra.mxu0 0.0
        %1137 = vmatprep.subr.mxu0 0.0
        %1138 = vmatpush2.msra.mxu0 0.0
        %1139 = vmatprep.subr.mxu0 0.0
        %1140 = vmatpush2.msra.mxu0 0.0
        %1141 = vmatprep.subr.mxu0 0.0
        %1142 = vmatpush2.msra.mxu0 0.0
        %1143 = vmatprep.subr.mxu0 0.0
        %1144 = vmatpush2.msra.mxu0 0.0
        %1145 = vmatprep.subr.mxu0 0.0
        %1146 = vmatpush2.msra.mxu0 0.0
        %1147 = vmatprep.subr.mxu0 0.0
        %1148 = vmatpush2.msra.mxu0 0.0
        %1149 = vmatprep.subr.mxu0 0.0
        %1150 = vmatpush2.msra.mxu0 0.0
        %1151 = vmatprep.subr.mxu0 0.0
        %1152 = vmatpush2.msra.mxu0 0.0
        %1153 = vmatprep.subr.mxu0 0.0
        %1154 = vmatpush2.msra.mxu0 0.0
        %1155 = vmatprep.subr.mxu0 0.0
        %1156 = vmatpush2.msra.mxu0 0.0
        %1157 = vmatprep.mubr.f32.mxu0 0.0
        %1158 = vmatmul.mubr.f32.gmra.mxu0 %v1070
        %v1159 = vpop.f32.mrf.mxu0
        %v1160 = vadd.f32 0.0, %v1159
        %v1161 = vpop.f32.mrf.mxu0
        %1162 = vmatprep.mubr.f32.mxu0 0.0
        %1163 = vmatmul.mubr.f32.gmra.mxu0 %v1073
        %v1164 = vpop.f32.mrf.mxu0
        %v1165 = vadd.f32 0.0, %v1164
        %v1166 = vpop.f32.mrf.mxu0
        %1167 = vmatprep.mubr.f32.mxu0 0.0
        %1168 = vmatmul.mubr.f32.gmra.mxu0 %v1076
        %v1169 = vpop.f32.mrf.mxu0
        %v1170 = vadd.f32 0.0, %v1169
        %v1171 = vpop.f32.mrf.mxu0
        %1172 = vmatprep.mubr.f32.mxu0 0.0
        %1173 = vmatmul.mubr.f32.gmra.mxu0 %v1079
        %v1174 = vpop.f32.mrf.mxu0
        %v1175 = vadd.f32 0.0, %v1174
        %v1176 = vpop.f32.mrf.mxu0
        %1177 = vmatprep.mubr.f32.mxu0 0.0
        %1178 = vmatmul.mubr.f32.gmra.mxu0 %v1082
        %v1179 = vpop.f32.mrf.mxu0
        %v1180 = vadd.f32 0.0, %v1179
        %v1181 = vpop.f32.mrf.mxu0
        %1182 = vmatprep.mubr.f32.mxu0 0.0
        %1183 = vmatmul.mubr.f32.gmra.mxu0 %v1085
        %v1184 = vpop.f32.mrf.mxu0
        %v1185 = vadd.f32 0.0, %v1184
        %v1186 = vpop.f32.mrf.mxu0
        %1187 = vmatprep.mubr.f32.mxu0 0.0
        %1188 = vmatmul.mubr.f32.gmra.mxu0 %v1088
        %v1189 = vpop.f32.mrf.mxu0
        %v1190 = vadd.f32 0.0, %v1189
        %v1191 = vpop.f32.mrf.mxu0
        %1192 = vmatprep.mubr.f32.mxu0 0.0
        %1193 = vmatmul.mubr.f32.gmra.mxu0 %v1091
        %v1194 = vpop.f32.mrf.mxu0
        %v1195 = vadd.f32 0.0, %v1194
        %v1196 = vpop.f32.mrf.mxu0
        %1197 = vdwg.mxu0
        %v1198 = vadd.f32 %v1012, %v1160
        %v1199 = vadd.f32 %v1017, %v1165
        %v1200 = vadd.f32 %v1022, %v1170
        %v1201 = vadd.f32 %v1027, %v1175
        %v1202 = vadd.f32 %v1032, %v1180
        %v1203 = vadd.f32 %v1037, %v1185
        %v1204 = vadd.f32 %v1042, %v1190
        %v1205 = vadd.f32 %v1047, %v1195
        %v1206 = vld [vmem:[#allocation2 + $0xf] sm:$0xff]
        %v1207 = vld [vmem:[#allocation2 + $0x17] sm:$0xff]
        %v1208 = vld [vmem:[#allocation2 + $0x1f] sm:$0xff]
        %v1209 = vld [vmem:[#allocation2 + $0x27] sm:$0xff]
        %v1210 = vld [vmem:[#allocation2 + $0x2f] sm:$0xff]
        %v1211 = vld [vmem:[#allocation2 + $0x37] sm:$0xff]
        %v1212 = vld [vmem:[#allocation2 + $0x3f] sm:$0xff]
        %v1213 = vld [vmem:[#allocation2 + $0x47] sm:$0xff]
        %v1214 = vmul.f32 %v1206, %v731
        %v1215 = vmul.f32 %v1207, %v732
        %v1216 = vmul.f32 %v1208, %v733
        %v1217 = vmul.f32 %v1209, %v734
        %v1218 = vmul.f32 %v1210, %v735
        %v1219 = vmul.f32 %v1211, %v736
        %v1220 = vmul.f32 %v1212, %v737
        %v1221 = vmul.f32 %v1213, %v738
        %s1222 = scalar_lea.vmem %s4, 48
        %v1223 = vld [vmem:[%s1222] sm:$0xff]
        %v1224 = vld [vmem:[%s1222 + $0x8] sm:$0xff]
        %v1226 = vsel %vm589, %v1214, 0
        %v1229 = vsel %vm589, %v1215, 0
        %v1232 = vsel %vm589, %v1216, 0
        %v1235 = vsel %vm589, %v1217, 0
        %v1238 = vsel %vm589, %v1218, 0
        %v1241 = vsel %vm589, %v1219, 0
        %v1244 = vsel %vm589, %v1220, 0
        %v1247 = vsel %vm589, %v1221, 0
        %1249 = vmatprep.subr.mxu0 0.0
        %1250 = vmatpush1.msra.mxu0 0.0
        %1251 = vmatprep.subr.mxu0 0.0
        %1252 = vmatpush1.msra.mxu0 0.0
        %1253 = vmatprep.subr.mxu0 0.0
        %1254 = vmatpush1.msra.mxu0 0.0
        %1255 = vmatprep.subr.mxu0 0.0
        %1256 = vmatpush1.msra.mxu0 0.0
        %1257 = vmatprep.subr.mxu0 0.0
        %1258 = vmatpush1.msra.mxu0 0.0
        %1259 = vmatprep.subr.mxu0 0.0
        %1260 = vmatpush1.msra.mxu0 0.0
        %1261 = vmatprep.subr.mxu0 0.0
        %1262 = vmatpush1.msra.mxu0 0.0
        %1263 = vmatprep.subr.mxu0 0.0
        %1264 = vmatpush1.msra.mxu0 0.0
        %1265 = vmatprep.subr.mxu0 0.0
        %1266 = vmatpush1.msra.mxu0 0.0
        %1267 = vmatprep.subr.mxu0 0.0
        %1268 = vmatpush1.msra.mxu0 0.0
        %1269 = vmatprep.subr.mxu0 0.0
        %1270 = vmatpush1.msra.mxu0 0.0
        %1271 = vmatprep.subr.mxu0 0.0
        %1272 = vmatpush1.msra.mxu0 0.0
        %1273 = vmatprep.subr.mxu0 0.0
        %1274 = vmatpush1.msra.mxu0 0.0
        %1275 = vmatprep.subr.mxu0 0.0
        %1276 = vmatpush1.msra.mxu0 0.0
        %1277 = vmatprep.subr.mxu0 0.0
        %1278 = vmatpush1.msra.mxu0 %v1224
        %1279 = vmatprep.subr.mxu0 0.0
        %1280 = vmatpush1.msra.mxu0 %v1223
        %1281 = vmatprep.subr.mxu0 0.0
        %1282 = vmatpush2.msra.mxu0 0.0
        %1283 = vmatprep.subr.mxu0 0.0
        %1284 = vmatpush2.msra.mxu0 0.0
        %1285 = vmatprep.subr.mxu0 0.0
        %1286 = vmatpush2.msra.mxu0 0.0
        %1287 = vmatprep.subr.mxu0 0.0
        %1288 = vmatpush2.msra.mxu0 0.0
        %1289 = vmatprep.subr.mxu0 0.0
        %1290 = vmatpush2.msra.mxu0 0.0
        %1291 = vmatprep.subr.mxu0 0.0
        %1292 = vmatpush2.msra.mxu0 0.0
        %1293 = vmatprep.subr.mxu0 0.0
        %1294 = vmatpush2.msra.mxu0 0.0
        %1295 = vmatprep.subr.mxu0 0.0
        %1296 = vmatpush2.msra.mxu0 0.0
        %1297 = vmatprep.subr.mxu0 0.0
        %1298 = vmatpush2.msra.mxu0 0.0
        %1299 = vmatprep.subr.mxu0 0.0
        %1300 = vmatpush2.msra.mxu0 0.0
        %1301 = vmatprep.subr.mxu0 0.0
        %1302 = vmatpush2.msra.mxu0 0.0
        %1303 = vmatprep.subr.mxu0 0.0
        %1304 = vmatpush2.msra.mxu0 0.0
        %1305 = vmatprep.subr.mxu0 0.0
        %1306 = vmatpush2.msra.mxu0 0.0
        %1307 = vmatprep.subr.mxu0 0.0
        %1308 = vmatpush2.msra.mxu0 0.0
        %1309 = vmatprep.subr.mxu0 0.0
        %1310 = vmatpush2.msra.mxu0 0.0
        %1311 = vmatprep.subr.mxu0 0.0
        %1312 = vmatpush2.msra.mxu0 0.0
        %1313 = vmatprep.mubr.f32.mxu0 0.0
        %1314 = vmatmul.mubr.f32.gmra.mxu0 %v1226
        %v1315 = vpop.f32.mrf.mxu0
        %v1316 = vadd.f32 0.0, %v1315
        %v1317 = vpop.f32.mrf.mxu0
        %1318 = vmatprep.mubr.f32.mxu0 0.0
        %1319 = vmatmul.mubr.f32.gmra.mxu0 %v1229
        %v1320 = vpop.f32.mrf.mxu0
        %v1321 = vadd.f32 0.0, %v1320
        %v1322 = vpop.f32.mrf.mxu0
        %1323 = vmatprep.mubr.f32.mxu0 0.0
        %1324 = vmatmul.mubr.f32.gmra.mxu0 %v1232
        %v1325 = vpop.f32.mrf.mxu0
        %v1326 = vadd.f32 0.0, %v1325
        %v1327 = vpop.f32.mrf.mxu0
        %1328 = vmatprep.mubr.f32.mxu0 0.0
        %1329 = vmatmul.mubr.f32.gmra.mxu0 %v1235
        %v1330 = vpop.f32.mrf.mxu0
        %v1331 = vadd.f32 0.0, %v1330
        %v1332 = vpop.f32.mrf.mxu0
        %1333 = vmatprep.mubr.f32.mxu0 0.0
        %1334 = vmatmul.mubr.f32.gmra.mxu0 %v1238
        %v1335 = vpop.f32.mrf.mxu0
        %v1336 = vadd.f32 0.0, %v1335
        %v1337 = vpop.f32.mrf.mxu0
        %1338 = vmatprep.mubr.f32.mxu0 0.0
        %1339 = vmatmul.mubr.f32.gmra.mxu0 %v1241
        %v1340 = vpop.f32.mrf.mxu0
        %v1341 = vadd.f32 0.0, %v1340
        %v1342 = vpop.f32.mrf.mxu0
        %1343 = vmatprep.mubr.f32.mxu0 0.0
        %1344 = vmatmul.mubr.f32.gmra.mxu0 %v1244
        %v1345 = vpop.f32.mrf.mxu0
        %v1346 = vadd.f32 0.0, %v1345
        %v1347 = vpop.f32.mrf.mxu0
        %1348 = vmatprep.mubr.f32.mxu0 0.0
        %1349 = vmatmul.mubr.f32.gmra.mxu0 %v1247
        %v1350 = vpop.f32.mrf.mxu0
        %v1351 = vadd.f32 0.0, %v1350
        %v1352 = vpop.f32.mrf.mxu0
        %1353 = vdwg.mxu0
        %v1354 = vadd.f32 %v1198, %v1316
        %v1355 = vadd.f32 %v1199, %v1321
        %v1356 = vadd.f32 %v1200, %v1326
        %v1357 = vadd.f32 %v1201, %v1331
        %v1358 = vadd.f32 %v1202, %v1336
        %v1359 = vadd.f32 %v1203, %v1341
        %v1360 = vadd.f32 %v1204, %v1346
        %v1361 = vadd.f32 %v1205, %v1351
        %v1362 = vld [vmem:[#allocation2 + $0x10] sm:$0xff]
        %v1363 = vld [vmem:[#allocation2 + $0x18] sm:$0xff]
        %v1364 = vld [vmem:[#allocation2 + $0x20] sm:$0xff]
        %v1365 = vld [vmem:[#allocation2 + $0x28] sm:$0xff]
        %v1366 = vld [vmem:[#allocation2 + $0x30] sm:$0xff]
        %v1367 = vld [vmem:[#allocation2 + $0x38] sm:$0xff]
        %v1368 = vld [vmem:[#allocation2 + $0x40] sm:$0xff]
        %v1369 = vld [vmem:[#allocation2 + $0x48] sm:$0xff]
        %s1370 = scalar_lea.vmem %s4, 64
        %v1371 = vld [vmem:[%s1370] sm:$0xff]
        %v1372 = vld [vmem:[%s1370 + $0x8] sm:$0xff]
        %v1374 = vsel %vm589, %v1362, 0
        %v1377 = vsel %vm589, %v1363, 0
        %v1380 = vsel %vm589, %v1364, 0
        %v1383 = vsel %vm589, %v1365, 0
        %v1386 = vsel %vm589, %v1366, 0
        %v1389 = vsel %vm589, %v1367, 0
        %v1392 = vsel %vm589, %v1368, 0
        %v1395 = vsel %vm589, %v1369, 0
        %1397 = vmatprep.subr.mxu0 0.0
        %1398 = vmatpush1.msra.mxu0 0.0
        %1399 = vmatprep.subr.mxu0 0.0
        %1400 = vmatpush1.msra.mxu0 0.0
        %1401 = vmatprep.subr.mxu0 0.0
        %1402 = vmatpush1.msra.mxu0 0.0
        %1403 = vmatprep.subr.mxu0 0.0
        %1404 = vmatpush1.msra.mxu0 0.0
        %1405 = vmatprep.subr.mxu0 0.0
        %1406 = vmatpush1.msra.mxu0 0.0
        %1407 = vmatprep.subr.mxu0 0.0
        %1408 = vmatpush1.msra.mxu0 0.0
        %1409 = vmatprep.subr.mxu0 0.0
        %1410 = vmatpush1.msra.mxu0 0.0
        %1411 = vmatprep.subr.mxu0 0.0
        %1412 = vmatpush1.msra.mxu0 0.0
        %1413 = vmatprep.subr.mxu0 0.0
        %1414 = vmatpush1.msra.mxu0 0.0
        %1415 = vmatprep.subr.mxu0 0.0
        %1416 = vmatpush1.msra.mxu0 0.0
        %1417 = vmatprep.subr.mxu0 0.0
        %1418 = vmatpush1.msra.mxu0 0.0
        %1419 = vmatprep.subr.mxu0 0.0
        %1420 = vmatpush1.msra.mxu0 0.0
        %1421 = vmatprep.subr.mxu0 0.0
        %1422 = vmatpush1.msra.mxu0 0.0
        %1423 = vmatprep.subr.mxu0 0.0
        %1424 = vmatpush1.msra.mxu0 0.0
        %1425 = vmatprep.subr.mxu0 0.0
        %1426 = vmatpush1.msra.mxu0 %v1372
        %1427 = vmatprep.subr.mxu0 0.0
        %1428 = vmatpush1.msra.mxu0 %v1371
        %1429 = vmatprep.subr.mxu0 0.0
        %1430 = vmatpush2.msra.mxu0 0.0
        %1431 = vmatprep.subr.mxu0 0.0
        %1432 = vmatpush2.msra.mxu0 0.0
        %1433 = vmatprep.subr.mxu0 0.0
        %1434 = vmatpush2.msra.mxu0 0.0
        %1435 = vmatprep.subr.mxu0 0.0
        %1436 = vmatpush2.msra.mxu0 0.0
        %1437 = vmatprep.subr.mxu0 0.0
        %1438 = vmatpush2.msra.mxu0 0.0
        %1439 = vmatprep.subr.mxu0 0.0
        %1440 = vmatpush2.msra.mxu0 0.0
        %1441 = vmatprep.subr.mxu0 0.0
        %1442 = vmatpush2.msra.mxu0 0.0
        %1443 = vmatprep.subr.mxu0 0.0
        %1444 = vmatpush2.msra.mxu0 0.0
        %1445 = vmatprep.subr.mxu0 0.0
        %1446 = vmatpush2.msra.mxu0 0.0
        %1447 = vmatprep.subr.mxu0 0.0
        %1448 = vmatpush2.msra.mxu0 0.0
        %1449 = vmatprep.subr.mxu0 0.0
        %1450 = vmatpush2.msra.mxu0 0.0
        %1451 = vmatprep.subr.mxu0 0.0
        %1452 = vmatpush2.msra.mxu0 0.0
        %1453 = vmatprep.subr.mxu0 0.0
        %1454 = vmatpush2.msra.mxu0 0.0
        %1455 = vmatprep.subr.mxu0 0.0
        %1456 = vmatpush2.msra.mxu0 0.0
        %1457 = vmatprep.subr.mxu0 0.0
        %1458 = vmatpush2.msra.mxu0 0.0
        %1459 = vmatprep.subr.mxu0 0.0
        %1460 = vmatpush2.msra.mxu0 0.0
        %1461 = vmatprep.mubr.f32.mxu0 0.0
        %1462 = vmatmul.mubr.f32.gmra.mxu0 %v1374
        %v1463 = vpop.f32.mrf.mxu0
        %v1464 = vadd.f32 0.0, %v1463
        %v1465 = vpop.f32.mrf.mxu0
        %1466 = vmatprep.mubr.f32.mxu0 0.0
        %1467 = vmatmul.mubr.f32.gmra.mxu0 %v1377
        %v1468 = vpop.f32.mrf.mxu0
        %v1469 = vadd.f32 0.0, %v1468
        %v1470 = vpop.f32.mrf.mxu0
        %1471 = vmatprep.mubr.f32.mxu0 0.0
        %1472 = vmatmul.mubr.f32.gmra.mxu0 %v1380
        %v1473 = vpop.f32.mrf.mxu0
        %v1474 = vadd.f32 0.0, %v1473
        %v1475 = vpop.f32.mrf.mxu0
        %1476 = vmatprep.mubr.f32.mxu0 0.0
        %1477 = vmatmul.mubr.f32.gmra.mxu0 %v1383
        %v1478 = vpop.f32.mrf.mxu0
        %v1479 = vadd.f32 0.0, %v1478
        %v1480 = vpop.f32.mrf.mxu0
        %1481 = vmatprep.mubr.f32.mxu0 0.0
        %1482 = vmatmul.mubr.f32.gmra.mxu0 %v1386
        %v1483 = vpop.f32.mrf.mxu0
        %v1484 = vadd.f32 0.0, %v1483
        %v1485 = vpop.f32.mrf.mxu0
        %1486 = vmatprep.mubr.f32.mxu0 0.0
        %1487 = vmatmul.mubr.f32.gmra.mxu0 %v1389
        %v1488 = vpop.f32.mrf.mxu0
        %v1489 = vadd.f32 0.0, %v1488
        %v1490 = vpop.f32.mrf.mxu0
        %1491 = vmatprep.mubr.f32.mxu0 0.0
        %1492 = vmatmul.mubr.f32.gmra.mxu0 %v1392
        %v1493 = vpop.f32.mrf.mxu0
        %v1494 = vadd.f32 0.0, %v1493
        %v1495 = vpop.f32.mrf.mxu0
        %1496 = vmatprep.mubr.f32.mxu0 0.0
        %1497 = vmatmul.mubr.f32.gmra.mxu0 %v1395
        %v1498 = vpop.f32.mrf.mxu0
        %v1499 = vadd.f32 0.0, %v1498
        %v1500 = vpop.f32.mrf.mxu0
        %1501 = vdwg.mxu0
        %v1502 = vadd.f32 %v1354, %v1464
        %v1503 = vadd.f32 %v1355, %v1469
        %v1504 = vadd.f32 %v1356, %v1474
        %v1505 = vadd.f32 %v1357, %v1479
        %v1506 = vadd.f32 %v1358, %v1484
        %v1507 = vadd.f32 %v1359, %v1489
        %v1508 = vadd.f32 %v1360, %v1494
        %v1509 = vadd.f32 %v1361, %v1499
        %v1510 = vld [vmem:[#allocation2 + $0x11] sm:$0xff]
        %v1511 = vld [vmem:[#allocation2 + $0x19] sm:$0xff]
        %v1512 = vld [vmem:[#allocation2 + $0x21] sm:$0xff]
        %v1513 = vld [vmem:[#allocation2 + $0x29] sm:$0xff]
        %v1514 = vld [vmem:[#allocation2 + $0x31] sm:$0xff]
        %v1515 = vld [vmem:[#allocation2 + $0x39] sm:$0xff]
        %v1516 = vld [vmem:[#allocation2 + $0x41] sm:$0xff]
        %v1517 = vld [vmem:[#allocation2 + $0x49] sm:$0xff]
        %v1518 = vmul.f32 %v1510, %v755
        %v1519 = vmul.f32 %v1511, %v756
        %v1520 = vmul.f32 %v1512, %v757
        %v1521 = vmul.f32 %v1513, %v758
        %v1522 = vmul.f32 %v1514, %v759
        %v1523 = vmul.f32 %v1515, %v760
        %v1524 = vmul.f32 %v1516, %v761
        %v1525 = vmul.f32 %v1517, %v762
        %s1526 = scalar_lea.vmem %s4, 80
        %v1527 = vld [vmem:[%s1526] sm:$0xff]
        %v1528 = vld [vmem:[%s1526 + $0x8] sm:$0xff]
        %v1530 = vsel %vm589, %v1518, 0
        %v1533 = vsel %vm589, %v1519, 0
        %v1536 = vsel %vm589, %v1520, 0
        %v1539 = vsel %vm589, %v1521, 0
        %v1542 = vsel %vm589, %v1522, 0
        %v1545 = vsel %vm589, %v1523, 0
        %v1548 = vsel %vm589, %v1524, 0
        %v1551 = vsel %vm589, %v1525, 0
        %1553 = vmatprep.subr.mxu0 0.0
        %1554 = vmatpush1.msra.mxu0 0.0
        %1555 = vmatprep.subr.mxu0 0.0
        %1556 = vmatpush1.msra.mxu0 0.0
        %1557 = vmatprep.subr.mxu0 0.0
        %1558 = vmatpush1.msra.mxu0 0.0
        %1559 = vmatprep.subr.mxu0 0.0
        %1560 = vmatpush1.msra.mxu0 0.0
        %1561 = vmatprep.subr.mxu0 0.0
        %1562 = vmatpush1.msra.mxu0 0.0
        %1563 = vmatprep.subr.mxu0 0.0
        %1564 = vmatpush1.msra.mxu0 0.0
        %1565 = vmatprep.subr.mxu0 0.0
        %1566 = vmatpush1.msra.mxu0 0.0
        %1567 = vmatprep.subr.mxu0 0.0
        %1568 = vmatpush1.msra.mxu0 0.0
        %1569 = vmatprep.subr.mxu0 0.0
        %1570 = vmatpush1.msra.mxu0 0.0
        %1571 = vmatprep.subr.mxu0 0.0
        %1572 = vmatpush1.msra.mxu0 0.0
        %1573 = vmatprep.subr.mxu0 0.0
        %1574 = vmatpush1.msra.mxu0 0.0
        %1575 = vmatprep.subr.mxu0 0.0
        %1576 = vmatpush1.msra.mxu0 0.0
        %1577 = vmatprep.subr.mxu0 0.0
        %1578 = vmatpush1.msra.mxu0 0.0
        %1579 = vmatprep.subr.mxu0 0.0
        %1580 = vmatpush1.msra.mxu0 0.0
        %1581 = vmatprep.subr.mxu0 0.0
        %1582 = vmatpush1.msra.mxu0 %v1528
        %1583 = vmatprep.subr.mxu0 0.0
        %1584 = vmatpush1.msra.mxu0 %v1527
        %1585 = vmatprep.subr.mxu0 0.0
        %1586 = vmatpush2.msra.mxu0 0.0
        %1587 = vmatprep.subr.mxu0 0.0
        %1588 = vmatpush2.msra.mxu0 0.0
        %1589 = vmatprep.subr.mxu0 0.0
        %1590 = vmatpush2.msra.mxu0 0.0
        %1591 = vmatprep.subr.mxu0 0.0
        %1592 = vmatpush2.msra.mxu0 0.0
        %1593 = vmatprep.subr.mxu0 0.0
        %1594 = vmatpush2.msra.mxu0 0.0
        %1595 = vmatprep.subr.mxu0 0.0
        %1596 = vmatpush2.msra.mxu0 0.0
        %1597 = vmatprep.subr.mxu0 0.0
        %1598 = vmatpush2.msra.mxu0 0.0
        %1599 = vmatprep.subr.mxu0 0.0
        %1600 = vmatpush2.msra.mxu0 0.0
        %1601 = vmatprep.subr.mxu0 0.0
        %1602 = vmatpush2.msra.mxu0 0.0
        %1603 = vmatprep.subr.mxu0 0.0
        %1604 = vmatpush2.msra.mxu0 0.0
        %1605 = vmatprep.subr.mxu0 0.0
        %1606 = vmatpush2.msra.mxu0 0.0
        %1607 = vmatprep.subr.mxu0 0.0
        %1608 = vmatpush2.msra.mxu0 0.0
        %1609 = vmatprep.subr.mxu0 0.0
        %1610 = vmatpush2.msra.mxu0 0.0
        %1611 = vmatprep.subr.mxu0 0.0
        %1612 = vmatpush2.msra.mxu0 0.0
        %1613 = vmatprep.subr.mxu0 0.0
        %1614 = vmatpush2.msra.mxu0 0.0
        %1615 = vmatprep.subr.mxu0 0.0
        %1616 = vmatpush2.msra.mxu0 0.0
        %1617 = vmatprep.mubr.f32.mxu0 0.0
        %1618 = vmatmul.mubr.f32.gmra.mxu0 %v1530
        %v1619 = vpop.f32.mrf.mxu0
        %v1620 = vadd.f32 0.0, %v1619
        %v1621 = vpop.f32.mrf.mxu0
        %1622 = vmatprep.mubr.f32.mxu0 0.0
        %1623 = vmatmul.mubr.f32.gmra.mxu0 %v1533
        %v1624 = vpop.f32.mrf.mxu0
        %v1625 = vadd.f32 0.0, %v1624
        %v1626 = vpop.f32.mrf.mxu0
        %1627 = vmatprep.mubr.f32.mxu0 0.0
        %1628 = vmatmul.mubr.f32.gmra.mxu0 %v1536
        %v1629 = vpop.f32.mrf.mxu0
        %v1630 = vadd.f32 0.0, %v1629
        %v1631 = vpop.f32.mrf.mxu0
        %1632 = vmatprep.mubr.f32.mxu0 0.0
        %1633 = vmatmul.mubr.f32.gmra.mxu0 %v1539
        %v1634 = vpop.f32.mrf.mxu0
        %v1635 = vadd.f32 0.0, %v1634
        %v1636 = vpop.f32.mrf.mxu0
        %1637 = vmatprep.mubr.f32.mxu0 0.0
        %1638 = vmatmul.mubr.f32.gmra.mxu0 %v1542
        %v1639 = vpop.f32.mrf.mxu0
        %v1640 = vadd.f32 0.0, %v1639
        %v1641 = vpop.f32.mrf.mxu0
        %1642 = vmatprep.mubr.f32.mxu0 0.0
        %1643 = vmatmul.mubr.f32.gmra.mxu0 %v1545
        %v1644 = vpop.f32.mrf.mxu0
        %v1645 = vadd.f32 0.0, %v1644
        %v1646 = vpop.f32.mrf.mxu0
        %1647 = vmatprep.mubr.f32.mxu0 0.0
        %1648 = vmatmul.mubr.f32.gmra.mxu0 %v1548
        %v1649 = vpop.f32.mrf.mxu0
        %v1650 = vadd.f32 0.0, %v1649
        %v1651 = vpop.f32.mrf.mxu0
        %1652 = vmatprep.mubr.f32.mxu0 0.0
        %1653 = vmatmul.mubr.f32.gmra.mxu0 %v1551
        %v1654 = vpop.f32.mrf.mxu0
        %v1655 = vadd.f32 0.0, %v1654
        %v1656 = vpop.f32.mrf.mxu0
        %1657 = vdwg.mxu0
        %v1658 = vadd.f32 %v1502, %v1620
        %v1659 = vadd.f32 %v1503, %v1625
        %v1660 = vadd.f32 %v1504, %v1630
        %v1661 = vadd.f32 %v1505, %v1635
        %v1662 = vadd.f32 %v1506, %v1640
        %v1663 = vadd.f32 %v1507, %v1645
        %v1664 = vadd.f32 %v1508, %v1650
        %v1665 = vadd.f32 %v1509, %v1655
        %v1666 = vld [vmem:[#allocation2 + $0x17] sm:$0xff]
        %v1667 = vld [vmem:[#allocation2 + $0x1f] sm:$0xff]
        %v1668 = vld [vmem:[#allocation2 + $0x27] sm:$0xff]
        %v1669 = vld [vmem:[#allocation2 + $0x2f] sm:$0xff]
        %v1670 = vld [vmem:[#allocation2 + $0x37] sm:$0xff]
        %v1671 = vld [vmem:[#allocation2 + $0x3f] sm:$0xff]
        %v1672 = vld [vmem:[#allocation2 + $0x47] sm:$0xff]
        %v1673 = vld [vmem:[#allocation2 + $0x4f] sm:$0xff]
        %v1674 = vmul.f32 %v1666, %v731
        %v1675 = vmul.f32 %v1667, %v732
        %v1676 = vmul.f32 %v1668, %v733
        %v1677 = vmul.f32 %v1669, %v734
        %v1678 = vmul.f32 %v1670, %v735
        %v1679 = vmul.f32 %v1671, %v736
        %v1680 = vmul.f32 %v1672, %v737
        %v1681 = vmul.f32 %v1673, %v738
        %s1682 = scalar_lea.vmem %s4, 96
        %v1683 = vld [vmem:[%s1682] sm:$0xff]
        %v1684 = vld [vmem:[%s1682 + $0x8] sm:$0xff]
        %v1686 = vsel %vm589, %v1674, 0
        %v1689 = vsel %vm589, %v1675, 0
        %v1692 = vsel %vm589, %v1676, 0
        %v1695 = vsel %vm589, %v1677, 0
        %v1698 = vsel %vm589, %v1678, 0
        %v1701 = vsel %vm589, %v1679, 0
        %v1704 = vsel %vm589, %v1680, 0
        %v1707 = vsel %vm589, %v1681, 0
        %1709 = vmatprep.subr.mxu0 0.0
        %1710 = vmatpush1.msra.mxu0 0.0
        %1711 = vmatprep.subr.mxu0 0.0
        %1712 = vmatpush1.msra.mxu0 0.0
        %1713 = vmatprep.subr.mxu0 0.0
        %1714 = vmatpush1.msra.mxu0 0.0
        %1715 = vmatprep.subr.mxu0 0.0
        %1716 = vmatpush1.msra.mxu0 0.0
        %1717 = vmatprep.subr.mxu0 0.0
        %1718 = vmatpush1.msra.mxu0 0.0
        %1719 = vmatprep.subr.mxu0 0.0
        %1720 = vmatpush1.msra.mxu0 0.0
        %1721 = vmatprep.subr.mxu0 0.0
        %1722 = vmatpush1.msra.mxu0 0.0
        %1723 = vmatprep.subr.mxu0 0.0
        %1724 = vmatpush1.msra.mxu0 0.0
        %1725 = vmatprep.subr.mxu0 0.0
        %1726 = vmatpush1.msra.mxu0 0.0
        %1727 = vmatprep.subr.mxu0 0.0
        %1728 = vmatpush1.msra.mxu0 0.0
        %1729 = vmatprep.subr.mxu0 0.0
        %1730 = vmatpush1.msra.mxu0 0.0
        %1731 = vmatprep.subr.mxu0 0.0
        %1732 = vmatpush1.msra.mxu0 0.0
        %1733 = vmatprep.subr.mxu0 0.0
        %1734 = vmatpush1.msra.mxu0 0.0
        %1735 = vmatprep.subr.mxu0 0.0
        %1736 = vmatpush1.msra.mxu0 0.0
        %1737 = vmatprep.subr.mxu0 0.0
        %1738 = vmatpush1.msra.mxu0 %v1684
        %1739 = vmatprep.subr.mxu0 0.0
        %1740 = vmatpush1.msra.mxu0 %v1683
        %1741 = vmatprep.subr.mxu0 0.0
        %1742 = vmatpush2.msra.mxu0 0.0
        %1743 = vmatprep.subr.mxu0 0.0
        %1744 = vmatpush2.msra.mxu0 0.0
        %1745 = vmatprep.subr.mxu0 0.0
        %1746 = vmatpush2.msra.mxu0 0.0
        %1747 = vmatprep.subr.mxu0 0.0
        %1748 = vmatpush2.msra.mxu0 0.0
        %1749 = vmatprep.subr.mxu0 0.0
        %1750 = vmatpush2.msra.mxu0 0.0
        %1751 = vmatprep.subr.mxu0 0.0
        %1752 = vmatpush2.msra.mxu0 0.0
        %1753 = vmatprep.subr.mxu0 0.0
        %1754 = vmatpush2.msra.mxu0 0.0
        %1755 = vmatprep.subr.mxu0 0.0
        %1756 = vmatpush2.msra.mxu0 0.0
        %1757 = vmatprep.subr.mxu0 0.0
        %1758 = vmatpush2.msra.mxu0 0.0
        %1759 = vmatprep.subr.mxu0 0.0
        %1760 = vmatpush2.msra.mxu0 0.0
        %1761 = vmatprep.subr.mxu0 0.0
        %1762 = vmatpush2.msra.mxu0 0.0
        %1763 = vmatprep.subr.mxu0 0.0
        %1764 = vmatpush2.msra.mxu0 0.0
        %1765 = vmatprep.subr.mxu0 0.0
        %1766 = vmatpush2.msra.mxu0 0.0
        %1767 = vmatprep.subr.mxu0 0.0
        %1768 = vmatpush2.msra.mxu0 0.0
        %1769 = vmatprep.subr.mxu0 0.0
        %1770 = vmatpush2.msra.mxu0 0.0
        %1771 = vmatprep.subr.mxu0 0.0
        %1772 = vmatpush2.msra.mxu0 0.0
        %1773 = vmatprep.mubr.f32.mxu0 0.0
        %1774 = vmatmul.mubr.f32.gmra.mxu0 %v1686
        %v1775 = vpop.f32.mrf.mxu0
        %v1776 = vadd.f32 0.0, %v1775
        %v1777 = vpop.f32.mrf.mxu0
        %1778 = vmatprep.mubr.f32.mxu0 0.0
        %1779 = vmatmul.mubr.f32.gmra.mxu0 %v1689
        %v1780 = vpop.f32.mrf.mxu0
        %v1781 = vadd.f32 0.0, %v1780
        %v1782 = vpop.f32.mrf.mxu0
        %1783 = vmatprep.mubr.f32.mxu0 0.0
        %1784 = vmatmul.mubr.f32.gmra.mxu0 %v1692
        %v1785 = vpop.f32.mrf.mxu0
        %v1786 = vadd.f32 0.0, %v1785
        %v1787 = vpop.f32.mrf.mxu0
        %1788 = vmatprep.mubr.f32.mxu0 0.0
        %1789 = vmatmul.mubr.f32.gmra.mxu0 %v1695
        %v1790 = vpop.f32.mrf.mxu0
        %v1791 = vadd.f32 0.0, %v1790
        %v1792 = vpop.f32.mrf.mxu0
        %1793 = vmatprep.mubr.f32.mxu0 0.0
        %1794 = vmatmul.mubr.f32.gmra.mxu0 %v1698
        %v1795 = vpop.f32.mrf.mxu0
        %v1796 = vadd.f32 0.0, %v1795
        %v1797 = vpop.f32.mrf.mxu0
        %1798 = vmatprep.mubr.f32.mxu0 0.0
        %1799 = vmatmul.mubr.f32.gmra.mxu0 %v1701
        %v1800 = vpop.f32.mrf.mxu0
        %v1801 = vadd.f32 0.0, %v1800
        %v1802 = vpop.f32.mrf.mxu0
        %1803 = vmatprep.mubr.f32.mxu0 0.0
        %1804 = vmatmul.mubr.f32.gmra.mxu0 %v1704
        %v1805 = vpop.f32.mrf.mxu0
        %v1806 = vadd.f32 0.0, %v1805
        %v1807 = vpop.f32.mrf.mxu0
        %1808 = vmatprep.mubr.f32.mxu0 0.0
        %1809 = vmatmul.mubr.f32.gmra.mxu0 %v1707
        %v1810 = vpop.f32.mrf.mxu0
        %v1811 = vadd.f32 0.0, %v1810
        %v1812 = vpop.f32.mrf.mxu0
        %1813 = vdwg.mxu0
        %v1814 = vadd.f32 %v1658, %v1776
        %v1815 = vadd.f32 %v1659, %v1781
        %v1816 = vadd.f32 %v1660, %v1786
        %v1817 = vadd.f32 %v1661, %v1791
        %v1818 = vadd.f32 %v1662, %v1796
        %v1819 = vadd.f32 %v1663, %v1801
        %v1820 = vadd.f32 %v1664, %v1806
        %v1821 = vadd.f32 %v1665, %v1811
        %v1822 = vld [vmem:[#allocation2 + $0x18] sm:$0xff]
        %v1823 = vld [vmem:[#allocation2 + $0x20] sm:$0xff]
        %v1824 = vld [vmem:[#allocation2 + $0x28] sm:$0xff]
        %v1825 = vld [vmem:[#allocation2 + $0x30] sm:$0xff]
        %v1826 = vld [vmem:[#allocation2 + $0x38] sm:$0xff]
        %v1827 = vld [vmem:[#allocation2 + $0x40] sm:$0xff]
        %v1828 = vld [vmem:[#allocation2 + $0x48] sm:$0xff]
        %v1829 = vld [vmem:[#allocation2 + $0x50] sm:$0xff]
        %s1830 = scalar_lea.vmem %s4, 112
        %v1831 = vld [vmem:[%s1830] sm:$0xff]
        %v1832 = vld [vmem:[%s1830 + $0x8] sm:$0xff]
        %v1834 = vsel %vm589, %v1822, 0
        %v1837 = vsel %vm589, %v1823, 0
        %v1840 = vsel %vm589, %v1824, 0
        %v1843 = vsel %vm589, %v1825, 0
        %v1846 = vsel %vm589, %v1826, 0
        %v1849 = vsel %vm589, %v1827, 0
        %v1852 = vsel %vm589, %v1828, 0
        %v1855 = vsel %vm589, %v1829, 0
        %1857 = vmatprep.subr.mxu0 0.0
        %1858 = vmatpush1.msra.mxu0 0.0
        %1859 = vmatprep.subr.mxu0 0.0
        %1860 = vmatpush1.msra.mxu0 0.0
        %1861 = vmatprep.subr.mxu0 0.0
        %1862 = vmatpush1.msra.mxu0 0.0
        %1863 = vmatprep.subr.mxu0 0.0
        %1864 = vmatpush1.msra.mxu0 0.0
        %1865 = vmatprep.subr.mxu0 0.0
        %1866 = vmatpush1.msra.mxu0 0.0
        %1867 = vmatprep.subr.mxu0 0.0
        %1868 = vmatpush1.msra.mxu0 0.0
        %1869 = vmatprep.subr.mxu0 0.0
        %1870 = vmatpush1.msra.mxu0 0.0
        %1871 = vmatprep.subr.mxu0 0.0
        %1872 = vmatpush1.msra.mxu0 0.0
        %1873 = vmatprep.subr.mxu0 0.0
        %1874 = vmatpush1.msra.mxu0 0.0
        %1875 = vmatprep.subr.mxu0 0.0
        %1876 = vmatpush1.msra.mxu0 0.0
        %1877 = vmatprep.subr.mxu0 0.0
        %1878 = vmatpush1.msra.mxu0 0.0
        %1879 = vmatprep.subr.mxu0 0.0
        %1880 = vmatpush1.msra.mxu0 0.0
        %1881 = vmatprep.subr.mxu0 0.0
        %1882 = vmatpush1.msra.mxu0 0.0
        %1883 = vmatprep.subr.mxu0 0.0
        %1884 = vmatpush1.msra.mxu0 0.0
        %1885 = vmatprep.subr.mxu0 0.0
        %1886 = vmatpush1.msra.mxu0 %v1832
        %1887 = vmatprep.subr.mxu0 0.0
        %1888 = vmatpush1.msra.mxu0 %v1831
        %1889 = vmatprep.subr.mxu0 0.0
        %1890 = vmatpush2.msra.mxu0 0.0
        %1891 = vmatprep.subr.mxu0 0.0
        %1892 = vmatpush2.msra.mxu0 0.0
        %1893 = vmatprep.subr.mxu0 0.0
        %1894 = vmatpush2.msra.mxu0 0.0
        %1895 = vmatprep.subr.mxu0 0.0
        %1896 = vmatpush2.msra.mxu0 0.0
        %1897 = vmatprep.subr.mxu0 0.0
        %1898 = vmatpush2.msra.mxu0 0.0
        %1899 = vmatprep.subr.mxu0 0.0
        %1900 = vmatpush2.msra.mxu0 0.0
        %1901 = vmatprep.subr.mxu0 0.0
        %1902 = vmatpush2.msra.mxu0 0.0
        %1903 = vmatprep.subr.mxu0 0.0
        %1904 = vmatpush2.msra.mxu0 0.0
        %1905 = vmatprep.subr.mxu0 0.0
        %1906 = vmatpush2.msra.mxu0 0.0
        %1907 = vmatprep.subr.mxu0 0.0
        %1908 = vmatpush2.msra.mxu0 0.0
        %1909 = vmatprep.subr.mxu0 0.0
        %1910 = vmatpush2.msra.mxu0 0.0
        %1911 = vmatprep.subr.mxu0 0.0
        %1912 = vmatpush2.msra.mxu0 0.0
        %1913 = vmatprep.subr.mxu0 0.0
        %1914 = vmatpush2.msra.mxu0 0.0
        %1915 = vmatprep.subr.mxu0 0.0
        %1916 = vmatpush2.msra.mxu0 0.0
        %1917 = vmatprep.subr.mxu0 0.0
        %1918 = vmatpush2.msra.mxu0 0.0
        %1919 = vmatprep.subr.mxu0 0.0
        %1920 = vmatpush2.msra.mxu0 0.0
        %1921 = vmatprep.mubr.f32.mxu0 0.0
        %1922 = vmatmul.mubr.f32.gmra.mxu0 %v1834
        %v1923 = vpop.f32.mrf.mxu0
        %v1924 = vadd.f32 0.0, %v1923
        %v1925 = vpop.f32.mrf.mxu0
        %1926 = vmatprep.mubr.f32.mxu0 0.0
        %1927 = vmatmul.mubr.f32.gmra.mxu0 %v1837
        %v1928 = vpop.f32.mrf.mxu0
        %v1929 = vadd.f32 0.0, %v1928
        %v1930 = vpop.f32.mrf.mxu0
        %1931 = vmatprep.mubr.f32.mxu0 0.0
        %1932 = vmatmul.mubr.f32.gmra.mxu0 %v1840
        %v1933 = vpop.f32.mrf.mxu0
        %v1934 = vadd.f32 0.0, %v1933
        %v1935 = vpop.f32.mrf.mxu0
        %1936 = vmatprep.mubr.f32.mxu0 0.0
        %1937 = vmatmul.mubr.f32.gmra.mxu0 %v1843
        %v1938 = vpop.f32.mrf.mxu0
        %v1939 = vadd.f32 0.0, %v1938
        %v1940 = vpop.f32.mrf.mxu0
        %1941 = vmatprep.mubr.f32.mxu0 0.0
        %1942 = vmatmul.mubr.f32.gmra.mxu0 %v1846
        %v1943 = vpop.f32.mrf.mxu0
        %v1944 = vadd.f32 0.0, %v1943
        %v1945 = vpop.f32.mrf.mxu0
        %1946 = vmatprep.mubr.f32.mxu0 0.0
        %1947 = vmatmul.mubr.f32.gmra.mxu0 %v1849
        %v1948 = vpop.f32.mrf.mxu0
        %v1949 = vadd.f32 0.0, %v1948
        %v1950 = vpop.f32.mrf.mxu0
        %1951 = vmatprep.mubr.f32.mxu0 0.0
        %1952 = vmatmul.mubr.f32.gmra.mxu0 %v1852
        %v1953 = vpop.f32.mrf.mxu0
        %v1954 = vadd.f32 0.0, %v1953
        %v1955 = vpop.f32.mrf.mxu0
        %1956 = vmatprep.mubr.f32.mxu0 0.0
        %1957 = vmatmul.mubr.f32.gmra.mxu0 %v1855
        %v1958 = vpop.f32.mrf.mxu0
        %v1959 = vadd.f32 0.0, %v1958
        %v1960 = vpop.f32.mrf.mxu0
        %1961 = vdwg.mxu0
        %v1962 = vadd.f32 %v1814, %v1924
        %v1963 = vadd.f32 %v1815, %v1929
        %v1964 = vadd.f32 %v1816, %v1934
        %v1965 = vadd.f32 %v1817, %v1939
        %v1966 = vadd.f32 %v1818, %v1944
        %v1967 = vadd.f32 %v1819, %v1949
        %v1968 = vadd.f32 %v1820, %v1954
        %v1969 = vadd.f32 %v1821, %v1959
        %v1970 = vld [vmem:[#allocation2 + $0x19] sm:$0xff]
        %v1971 = vld [vmem:[#allocation2 + $0x21] sm:$0xff]
        %v1972 = vld [vmem:[#allocation2 + $0x29] sm:$0xff]
        %v1973 = vld [vmem:[#allocation2 + $0x31] sm:$0xff]
        %v1974 = vld [vmem:[#allocation2 + $0x39] sm:$0xff]
        %v1975 = vld [vmem:[#allocation2 + $0x41] sm:$0xff]
        %v1976 = vld [vmem:[#allocation2 + $0x49] sm:$0xff]
        %v1977 = vld [vmem:[#allocation2 + $0x51] sm:$0xff]
        %v1978 = vmul.f32 %v1970, %v755
        %v1979 = vmul.f32 %v1971, %v756
        %v1980 = vmul.f32 %v1972, %v757
        %v1981 = vmul.f32 %v1973, %v758
        %v1982 = vmul.f32 %v1974, %v759
        %v1983 = vmul.f32 %v1975, %v760
        %v1984 = vmul.f32 %v1976, %v761
        %v1985 = vmul.f32 %v1977, %v762
        %s1986 = scalar_lea.vmem %s4, 128
        %v1987 = vld [vmem:[%s1986] sm:$0xff]
        %v1988 = vld [vmem:[%s1986 + $0x8] sm:$0xff]
        %v1990 = vsel %vm589, %v1978, 0
        %v1993 = vsel %vm589, %v1979, 0
        %v1996 = vsel %vm589, %v1980, 0
        %v1999 = vsel %vm589, %v1981, 0
        %v2002 = vsel %vm589, %v1982, 0
        %v2005 = vsel %vm589, %v1983, 0
        %v2008 = vsel %vm589, %v1984, 0
        %v2011 = vsel %vm589, %v1985, 0
        %2013 = vmatprep.subr.mxu0 0.0
        %2014 = vmatpush1.msra.mxu0 0.0
        %2015 = vmatprep.subr.mxu0 0.0
        %2016 = vmatpush1.msra.mxu0 0.0
        %2017 = vmatprep.subr.mxu0 0.0
        %2018 = vmatpush1.msra.mxu0 0.0
        %2019 = vmatprep.subr.mxu0 0.0
        %2020 = vmatpush1.msra.mxu0 0.0
        %2021 = vmatprep.subr.mxu0 0.0
        %2022 = vmatpush1.msra.mxu0 0.0
        %2023 = vmatprep.subr.mxu0 0.0
        %2024 = vmatpush1.msra.mxu0 0.0
        %2025 = vmatprep.subr.mxu0 0.0
        %2026 = vmatpush1.msra.mxu0 0.0
        %2027 = vmatprep.subr.mxu0 0.0
        %2028 = vmatpush1.msra.mxu0 0.0
        %2029 = vmatprep.subr.mxu0 0.0
        %2030 = vmatpush1.msra.mxu0 0.0
        %2031 = vmatprep.subr.mxu0 0.0
        %2032 = vmatpush1.msra.mxu0 0.0
        %2033 = vmatprep.subr.mxu0 0.0
        %2034 = vmatpush1.msra.mxu0 0.0
        %2035 = vmatprep.subr.mxu0 0.0
        %2036 = vmatpush1.msra.mxu0 0.0
        %2037 = vmatprep.subr.mxu0 0.0
        %2038 = vmatpush1.msra.mxu0 0.0
        %2039 = vmatprep.subr.mxu0 0.0
        %2040 = vmatpush1.msra.mxu0 0.0
        %2041 = vmatprep.subr.mxu0 0.0
        %2042 = vmatpush1.msra.mxu0 %v1988
        %2043 = vmatprep.subr.mxu0 0.0
        %2044 = vmatpush1.msra.mxu0 %v1987
        %2045 = vmatprep.subr.mxu0 0.0
        %2046 = vmatpush2.msra.mxu0 0.0
        %2047 = vmatprep.subr.mxu0 0.0
        %2048 = vmatpush2.msra.mxu0 0.0
        %2049 = vmatprep.subr.mxu0 0.0
        %2050 = vmatpush2.msra.mxu0 0.0
        %2051 = vmatprep.subr.mxu0 0.0
        %2052 = vmatpush2.msra.mxu0 0.0
        %2053 = vmatprep.subr.mxu0 0.0
        %2054 = vmatpush2.msra.mxu0 0.0
        %2055 = vmatprep.subr.mxu0 0.0
        %2056 = vmatpush2.msra.mxu0 0.0
        %2057 = vmatprep.subr.mxu0 0.0
        %2058 = vmatpush2.msra.mxu0 0.0
        %2059 = vmatprep.subr.mxu0 0.0
        %2060 = vmatpush2.msra.mxu0 0.0
        %2061 = vmatprep.subr.mxu0 0.0
        %2062 = vmatpush2.msra.mxu0 0.0
        %2063 = vmatprep.subr.mxu0 0.0
        %2064 = vmatpush2.msra.mxu0 0.0
        %2065 = vmatprep.subr.mxu0 0.0
        %2066 = vmatpush2.msra.mxu0 0.0
        %2067 = vmatprep.subr.mxu0 0.0
        %2068 = vmatpush2.msra.mxu0 0.0
        %2069 = vmatprep.subr.mxu0 0.0
        %2070 = vmatpush2.msra.mxu0 0.0
        %2071 = vmatprep.subr.mxu0 0.0
        %2072 = vmatpush2.msra.mxu0 0.0
        %2073 = vmatprep.subr.mxu0 0.0
        %2074 = vmatpush2.msra.mxu0 0.0
        %2075 = vmatprep.subr.mxu0 0.0
        %2076 = vmatpush2.msra.mxu0 0.0
        %2077 = vmatprep.mubr.f32.mxu0 0.0
        %2078 = vmatmul.mubr.f32.gmra.mxu0 %v1990
        %v2079 = vpop.f32.mrf.mxu0
        %v2080 = vadd.f32 0.0, %v2079
        %v2081 = vpop.f32.mrf.mxu0
        %2082 = vmatprep.mubr.f32.mxu0 0.0
        %2083 = vmatmul.mubr.f32.gmra.mxu0 %v1993
        %v2084 = vpop.f32.mrf.mxu0
        %v2085 = vadd.f32 0.0, %v2084
        %v2086 = vpop.f32.mrf.mxu0
        %2087 = vmatprep.mubr.f32.mxu0 0.0
        %2088 = vmatmul.mubr.f32.gmra.mxu0 %v1996
        %v2089 = vpop.f32.mrf.mxu0
        %v2090 = vadd.f32 0.0, %v2089
        %v2091 = vpop.f32.mrf.mxu0
        %2092 = vmatprep.mubr.f32.mxu0 0.0
        %2093 = vmatmul.mubr.f32.gmra.mxu0 %v1999
        %v2094 = vpop.f32.mrf.mxu0
        %v2095 = vadd.f32 0.0, %v2094
        %v2096 = vpop.f32.mrf.mxu0
        %2097 = vmatprep.mubr.f32.mxu0 0.0
        %2098 = vmatmul.mubr.f32.gmra.mxu0 %v2002
        %v2099 = vpop.f32.mrf.mxu0
        %v2100 = vadd.f32 0.0, %v2099
        %v2101 = vpop.f32.mrf.mxu0
        %2102 = vmatprep.mubr.f32.mxu0 0.0
        %2103 = vmatmul.mubr.f32.gmra.mxu0 %v2005
        %v2104 = vpop.f32.mrf.mxu0
        %v2105 = vadd.f32 0.0, %v2104
        %v2106 = vpop.f32.mrf.mxu0
        %2107 = vmatprep.mubr.f32.mxu0 0.0
        %2108 = vmatmul.mubr.f32.gmra.mxu0 %v2008
        %v2109 = vpop.f32.mrf.mxu0
        %v2110 = vadd.f32 0.0, %v2109
        %v2111 = vpop.f32.mrf.mxu0
        %2112 = vmatprep.mubr.f32.mxu0 0.0
        %2113 = vmatmul.mubr.f32.gmra.mxu0 %v2011
        %v2114 = vpop.f32.mrf.mxu0
        %v2115 = vadd.f32 0.0, %v2114
        %v2116 = vpop.f32.mrf.mxu0
        %2117 = vdwg.mxu0
        %v2118 = vadd.f32 %v1962, %v2080
        %v2119 = vadd.f32 %v1963, %v2085
        %v2120 = vadd.f32 %v1964, %v2090
        %v2121 = vadd.f32 %v1965, %v2095
        %v2122 = vadd.f32 %v1966, %v2100
        %v2123 = vadd.f32 %v1967, %v2105
        %v2124 = vadd.f32 %v1968, %v2110
        %v2125 = vadd.f32 %v1969, %v2115
        %v2126 = vmul.f32 %v2118, 0.5
        %v2127 = vmul.f32 %v2119, 0.5
        %v2128 = vmul.f32 %v2120, 0.5
        %v2129 = vmul.f32 %v2121, 0.5
        %v2130 = vmul.f32 %v2122, 0.5
        %v2131 = vmul.f32 %v2123, 0.5
        %v2132 = vmul.f32 %v2124, 0.5
        %v2133 = vmul.f32 %v2125, 0.5
        %v2134 = vmul.f32 %v2118, 0.70710677
        %v2135 = vmul.f32 %v2119, 0.70710677
        %v2136 = vmul.f32 %v2120, 0.70710677
        %v2137 = vmul.f32 %v2121, 0.70710677
        %v2138 = vmul.f32 %v2122, 0.70710677
        %v2139 = vmul.f32 %v2123, 0.70710677
        %v2140 = vmul.f32 %v2124, 0.70710677
        %v2141 = vmul.f32 %v2125, 0.70710677
        %v2142 = verf.f32.pop %v2134
        %v2143 = verf.f32.pop %v2135
        %v2144 = verf.f32.pop %v2136
        %v2145 = verf.f32.pop %v2137
        %v2146 = verf.f32.pop %v2138
        %v2147 = verf.f32.pop %v2139
        %v2148 = verf.f32.pop %v2140
        %v2149 = verf.f32.pop %v2141
        %v2150 = vadd.f32 %v2142, 1.0
        %v2151 = vadd.f32 %v2143, 1.0
        %v2152 = vadd.f32 %v2144, 1.0
        %v2153 = vadd.f32 %v2145, 1.0
        %v2154 = vadd.f32 %v2146, 1.0
        %v2155 = vadd.f32 %v2147, 1.0
        %v2156 = vadd.f32 %v2148, 1.0
        %v2157 = vadd.f32 %v2149, 1.0
        %v2158 = vmul.f32 %v2126, %v2150
        %v2159 = vmul.f32 %v2127, %v2151
        %v2160 = vmul.f32 %v2128, %v2152
        %v2161 = vmul.f32 %v2129, %v2153
        %v2162 = vmul.f32 %v2130, %v2154
        %v2163 = vmul.f32 %v2131, %v2155
        %v2164 = vmul.f32 %v2132, %v2156
        %v2165 = vmul.f32 %v2133, %v2157
        %v2166 = vld [vmem:[%s5] sm:$0x1]
        %v2168 = vlaneseq
        %v2169 = vshrl.u32 %v2168, 7
        %v2170 = vsub.s32 0, %v2169
        %v2171 = vrot.slane %v2166, %v2170
        %v2173 = vmul.f32 %v2158, %v2171
        %v2174 = vmul.f32 %v2159, %v2171
        %v2175 = vmul.f32 %v2160, %v2171
        %v2176 = vmul.f32 %v2161, %v2171
        %v2177 = vmul.f32 %v2162, %v2171
        %v2178 = vmul.f32 %v2163, %v2171
        %v2179 = vmul.f32 %v2164, %v2171
        %v2180 = vmul.f32 %v2165, %v2171
        %v2181 = vld [vmem:[%s6] sm:$0x1]
        %v2183 = vlaneseq
        %v2184 = vshrl.u32 %v2183, 7
        %v2185 = vsub.s32 0, %v2184
        %v2186 = vrot.slane %v2181, %v2185
        %v2188 = vadd.f32 %v2173, %v2186
        %v2189 = vadd.f32 %v2174, %v2186
        %v2190 = vadd.f32 %v2175, %v2186
        %v2191 = vadd.f32 %v2176, %v2186
        %v2192 = vadd.f32 %v2177, %v2186
        %v2193 = vadd.f32 %v2178, %v2186
        %v2194 = vadd.f32 %v2179, %v2186
        %v2195 = vadd.f32 %v2180, %v2186
        %vm2196 = vcmask 261120
        %2197 = vst.msk [vmem:[#allocation3] sm:$0xff] %vm2196, 0.0
        %2198 = vst.msk [vmem:[#allocation3 + $0x8] sm:$0xff] %vm2196, 0.0
        %2199 = vst.msk [vmem:[#allocation3 + $0x10] sm:$0xff] %vm2196, 0.0
        %2200 = vst.msk [vmem:[#allocation3 + $0x18] sm:$0xff] %vm2196, 0.0
        %2201 = vst.msk [vmem:[#allocation3 + $0x20] sm:$0xff] %vm2196, 0.0
        %2202 = vst.msk [vmem:[#allocation3 + $0x28] sm:$0xff] %vm2196, 0.0
        %2203 = vst.msk [vmem:[#allocation3 + $0x30] sm:$0xff] %vm2196, 0.0
        %2204 = vst.msk [vmem:[#allocation3 + $0x38] sm:$0xff] %vm2196, 0.0
        %2205 = vst.msk [vmem:[#allocation3 + $0x40] sm:$0xff] %vm2196, 0.0
        %2206 = vst.msk [vmem:[#allocation3 + $0x48] sm:$0xff] %vm2196, 0.0
        %2207 = vst.msk [vmem:[#allocation3 + $0x50] sm:$0xff] %vm2196, 0.0
        %2208 = vst.msk [vmem:[#allocation3 + $0x58] sm:$0xff] %vm2196, 0.0
        %2209 = vst.msk [vmem:[#allocation3 + $0x10] sm:$0xff] %vm2196, %v2188
        %2210 = vst.msk [vmem:[#allocation3 + $0x18] sm:$0xff] %vm2196, %v2189
        %2211 = vst.msk [vmem:[#allocation3 + $0x20] sm:$0xff] %vm2196, %v2190
        %2212 = vst.msk [vmem:[#allocation3 + $0x28] sm:$0xff] %vm2196, %v2191
        %2213 = vst.msk [vmem:[#allocation3 + $0x30] sm:$0xff] %vm2196, %v2192
        %2214 = vst.msk [vmem:[#allocation3 + $0x38] sm:$0xff] %vm2196, %v2193
        %2215 = vst.msk [vmem:[#allocation3 + $0x40] sm:$0xff] %vm2196, %v2194
        %2216 = vst.msk [vmem:[#allocation3 + $0x48] sm:$0xff] %vm2196, %v2195
        %v2217 = vld [vmem:[#allocation3 + $0x7] sm:$0xff]
        %v2218 = vld [vmem:[#allocation3 + $0xf] sm:$0xff]
        %v2219 = vld [vmem:[#allocation3 + $0x17] sm:$0xff]
        %v2220 = vld [vmem:[#allocation3 + $0x1f] sm:$0xff]
        %v2221 = vld [vmem:[#allocation3 + $0x27] sm:$0xff]
        %v2222 = vld [vmem:[#allocation3 + $0x2f] sm:$0xff]
        %v2223 = vld [vmem:[#allocation3 + $0x37] sm:$0xff]
        %v2224 = vld [vmem:[#allocation3 + $0x3f] sm:$0xff]
        %v2225 = vmul.f32 %v2217, %v731
        %v2226 = vmul.f32 %v2218, %v732
        %v2227 = vmul.f32 %v2219, %v733
        %v2228 = vmul.f32 %v2220, %v734
        %v2229 = vmul.f32 %v2221, %v735
        %v2230 = vmul.f32 %v2222, %v736
        %v2231 = vmul.f32 %v2223, %v737
        %v2232 = vmul.f32 %v2224, %v738
        %v2233 = vld [vmem:[#allocation4] sm:$0xff]
        %v2234 = vld [vmem:[#allocation4 + $0x8] sm:$0xff]
        %v2235 = vld [vmem:[#allocation4 + $0x10] sm:$0xff]
        %v2236 = vld [vmem:[#allocation4 + $0x18] sm:$0xff]
        %v2237 = vld [vmem:[#allocation3 + $0x8] sm:$0xff]
        %v2238 = vld [vmem:[#allocation3 + $0x10] sm:$0xff]
        %v2239 = vld [vmem:[#allocation3 + $0x18] sm:$0xff]
        %v2240 = vld [vmem:[#allocation3 + $0x20] sm:$0xff]
        %v2241 = vld [vmem:[#allocation3 + $0x28] sm:$0xff]
        %v2242 = vld [vmem:[#allocation3 + $0x30] sm:$0xff]
        %v2243 = vld [vmem:[#allocation3 + $0x38] sm:$0xff]
        %v2244 = vld [vmem:[#allocation3 + $0x40] sm:$0xff]
        %s2245 = scalar_lea.vmem [#allocation4], 32
        %v2246 = vld [vmem:[%s2245] sm:$0xff]
        %v2247 = vld [vmem:[%s2245 + $0x8] sm:$0xff]
        %v2248 = vld [vmem:[%s2245 + $0x10] sm:$0xff]
        %v2249 = vld [vmem:[%s2245 + $0x18] sm:$0xff]
        %v2251 = vsel %vm2196, %v2237, 0
        %v2254 = vsel %vm2196, %v2238, 0
        %v2257 = vsel %vm2196, %v2239, 0
        %v2260 = vsel %vm2196, %v2240, 0
        %v2263 = vsel %vm2196, %v2241, 0
        %v2266 = vsel %vm2196, %v2242, 0
        %v2269 = vsel %vm2196, %v2243, 0
        %v2272 = vsel %vm2196, %v2244, 0
        %2274 = vmatprep.subr.mxu0 0.0
        %2275 = vmatpush1.msra.mxu0 0.0
        %2276 = vmatprep.subr.mxu0 0.0
        %2277 = vmatpush1.msra.mxu0 0.0
        %2278 = vmatprep.subr.mxu0 0.0
        %2279 = vmatpush1.msra.mxu0 0.0
        %2280 = vmatprep.subr.mxu0 0.0
        %2281 = vmatpush1.msra.mxu0 0.0
        %2282 = vmatprep.subr.mxu0 0.0
        %2283 = vmatpush1.msra.mxu0 0.0
        %2284 = vmatprep.subr.mxu0 0.0
        %2285 = vmatpush1.msra.mxu0 0.0
        %2286 = vmatprep.subr.mxu0 0.0
        %2287 = vmatpush1.msra.mxu0 0.0
        %2288 = vmatprep.subr.mxu0 0.0
        %2289 = vmatpush1.msra.mxu0 0.0
        %2290 = vmatprep.subr.mxu0 0.0
        %2291 = vmatpush1.msra.mxu0 0.0
        %2292 = vmatprep.subr.mxu0 0.0
        %2293 = vmatpush1.msra.mxu0 0.0
        %2294 = vmatprep.subr.mxu0 0.0
        %2295 = vmatpush1.msra.mxu0 0.0
        %2296 = vmatprep.subr.mxu0 0.0
        %2297 = vmatpush1.msra.mxu0 0.0
        %2298 = vmatprep.subr.mxu0 0.0
        %2299 = vmatpush1.msra.mxu0 %v2249
        %2300 = vmatprep.subr.mxu0 0.0
        %2301 = vmatpush1.msra.mxu0 %v2248
        %2302 = vmatprep.subr.mxu0 0.0
        %2303 = vmatpush1.msra.mxu0 %v2247
        %2304 = vmatprep.subr.mxu0 0.0
        %2305 = vmatpush1.msra.mxu0 %v2246
        %2306 = vmatprep.subr.mxu0 0.0
        %2307 = vmatpush2.msra.mxu0 0.0
        %2308 = vmatprep.subr.mxu0 0.0
        %2309 = vmatpush2.msra.mxu0 0.0
        %2310 = vmatprep.subr.mxu0 0.0
        %2311 = vmatpush2.msra.mxu0 0.0
        %2312 = vmatprep.subr.mxu0 0.0
        %2313 = vmatpush2.msra.mxu0 0.0
        %2314 = vmatprep.subr.mxu0 0.0
        %2315 = vmatpush2.msra.mxu0 0.0
        %2316 = vmatprep.subr.mxu0 0.0
        %2317 = vmatpush2.msra.mxu0 0.0
        %2318 = vmatprep.subr.mxu0 0.0
        %2319 = vmatpush2.msra.mxu0 0.0
        %2320 = vmatprep.subr.mxu0 0.0
        %2321 = vmatpush2.msra.mxu0 0.0
        %2322 = vmatprep.subr.mxu0 0.0
        %2323 = vmatpush2.msra.mxu0 0.0
        %2324 = vmatprep.subr.mxu0 0.0
        %2325 = vmatpush2.msra.mxu0 0.0
        %2326 = vmatprep.subr.mxu0 0.0
        %2327 = vmatpush2.msra.mxu0 0.0
        %2328 = vmatprep.subr.mxu0 0.0
        %2329 = vmatpush2.msra.mxu0 0.0
        %2330 = vmatprep.subr.mxu0 0.0
        %2331 = vmatpush2.msra.mxu0 0.0
        %2332 = vmatprep.subr.mxu0 0.0
        %2333 = vmatpush2.msra.mxu0 0.0
        %2334 = vmatprep.subr.mxu0 0.0
        %2335 = vmatpush2.msra.mxu0 0.0
        %2336 = vmatprep.subr.mxu0 0.0
        %2337 = vmatpush2.msra.mxu0 0.0
        %2338 = vmatprep.mubr.f32.mxu0 0.0
        %2339 = vmatmul.mubr.f32.gmra.mxu0 %v2251
        %v2340 = vpop.f32.mrf.mxu0
        %v2341 = vadd.f32 0.0, %v2340
        %v2342 = vpop.f32.mrf.mxu0
        %2343 = vmatprep.mubr.f32.mxu0 0.0
        %2344 = vmatmul.mubr.f32.gmra.mxu0 %v2254
        %v2345 = vpop.f32.mrf.mxu0
        %v2346 = vadd.f32 0.0, %v2345
        %v2347 = vpop.f32.mrf.mxu0
        %2348 = vmatprep.mubr.f32.mxu0 0.0
        %2349 = vmatmul.mubr.f32.gmra.mxu0 %v2257
        %v2350 = vpop.f32.mrf.mxu0
        %v2351 = vadd.f32 0.0, %v2350
        %v2352 = vpop.f32.mrf.mxu0
        %2353 = vmatprep.mubr.f32.mxu0 0.0
        %2354 = vmatmul.mubr.f32.gmra.mxu0 %v2260
        %v2355 = vpop.f32.mrf.mxu0
        %v2356 = vadd.f32 0.0, %v2355
        %v2357 = vpop.f32.mrf.mxu0
        %2358 = vmatprep.mubr.f32.mxu0 0.0
        %2359 = vmatmul.mubr.f32.gmra.mxu0 %v2263
        %v2360 = vpop.f32.mrf.mxu0
        %v2361 = vadd.f32 0.0, %v2360
        %v2362 = vpop.f32.mrf.mxu0
        %2363 = vmatprep.mubr.f32.mxu0 0.0
        %2364 = vmatmul.mubr.f32.gmra.mxu0 %v2266
        %v2365 = vpop.f32.mrf.mxu0
        %v2366 = vadd.f32 0.0, %v2365
        %v2367 = vpop.f32.mrf.mxu0
        %2368 = vmatprep.mubr.f32.mxu0 0.0
        %2369 = vmatmul.mubr.f32.gmra.mxu0 %v2269
        %v2370 = vpop.f32.mrf.mxu0
        %v2371 = vadd.f32 0.0, %v2370
        %v2372 = vpop.f32.mrf.mxu0
        %2373 = vmatprep.mubr.f32.mxu0 0.0
        %2374 = vmatmul.mubr.f32.gmra.mxu0 %v2272
        %v2375 = vpop.f32.mrf.mxu0
        %v2376 = vadd.f32 0.0, %v2375
        %v2377 = vpop.f32.mrf.mxu0
        %2378 = vdwg.mxu0
        %v2380 = vsel %vm2196, %v2225, 0
        %v2383 = vsel %vm2196, %v2226, 0
        %v2386 = vsel %vm2196, %v2227, 0
        %v2389 = vsel %vm2196, %v2228, 0
        %v2392 = vsel %vm2196, %v2229, 0
        %v2395 = vsel %vm2196, %v2230, 0
        %v2398 = vsel %vm2196, %v2231, 0
        %v2401 = vsel %vm2196, %v2232, 0
        %2403 = vmatprep.subr.mxu0 0.0
        %2404 = vmatpush1.msra.mxu0 0.0
        %2405 = vmatprep.subr.mxu0 0.0
        %2406 = vmatpush1.msra.mxu0 0.0
        %2407 = vmatprep.subr.mxu0 0.0
        %2408 = vmatpush1.msra.mxu0 0.0
        %2409 = vmatprep.subr.mxu0 0.0
        %2410 = vmatpush1.msra.mxu0 0.0
        %2411 = vmatprep.subr.mxu0 0.0
        %2412 = vmatpush1.msra.mxu0 0.0
        %2413 = vmatprep.subr.mxu0 0.0
        %2414 = vmatpush1.msra.mxu0 0.0
        %2415 = vmatprep.subr.mxu0 0.0
        %2416 = vmatpush1.msra.mxu0 0.0
        %2417 = vmatprep.subr.mxu0 0.0
        %2418 = vmatpush1.msra.mxu0 0.0
        %2419 = vmatprep.subr.mxu0 0.0
        %2420 = vmatpush1.msra.mxu0 0.0
        %2421 = vmatprep.subr.mxu0 0.0
        %2422 = vmatpush1.msra.mxu0 0.0
        %2423 = vmatprep.subr.mxu0 0.0
        %2424 = vmatpush1.msra.mxu0 0.0
        %2425 = vmatprep.subr.mxu0 0.0
        %2426 = vmatpush1.msra.mxu0 0.0
        %2427 = vmatprep.subr.mxu0 0.0
        %2428 = vmatpush1.msra.mxu0 %v2236
        %2429 = vmatprep.subr.mxu0 0.0
        %2430 = vmatpush1.msra.mxu0 %v2235
        %2431 = vmatprep.subr.mxu0 0.0
        %2432 = vmatpush1.msra.mxu0 %v2234
        %2433 = vmatprep.subr.mxu0 0.0
        %2434 = vmatpush1.msra.mxu0 %v2233
        %2435 = vmatprep.subr.mxu0 0.0
        %2436 = vmatpush2.msra.mxu0 0.0
        %2437 = vmatprep.subr.mxu0 0.0
        %2438 = vmatpush2.msra.mxu0 0.0
        %2439 = vmatprep.subr.mxu0 0.0
        %2440 = vmatpush2.msra.mxu0 0.0
        %2441 = vmatprep.subr.mxu0 0.0
        %2442 = vmatpush2.msra.mxu0 0.0
        %2443 = vmatprep.subr.mxu0 0.0
        %2444 = vmatpush2.msra.mxu0 0.0
        %2445 = vmatprep.subr.mxu0 0.0
        %2446 = vmatpush2.msra.mxu0 0.0
        %2447 = vmatprep.subr.mxu0 0.0
        %2448 = vmatpush2.msra.mxu0 0.0
        %2449 = vmatprep.subr.mxu0 0.0
        %2450 = vmatpush2.msra.mxu0 0.0
        %2451 = vmatprep.subr.mxu0 0.0
        %2452 = vmatpush2.msra.mxu0 0.0
        %2453 = vmatprep.subr.mxu0 0.0
        %2454 = vmatpush2.msra.mxu0 0.0
        %2455 = vmatprep.subr.mxu0 0.0
        %2456 = vmatpush2.msra.mxu0 0.0
        %2457 = vmatprep.subr.mxu0 0.0
        %2458 = vmatpush2.msra.mxu0 0.0
        %2459 = vmatprep.subr.mxu0 0.0
        %2460 = vmatpush2.msra.mxu0 0.0
        %2461 = vmatprep.subr.mxu0 0.0
        %2462 = vmatpush2.msra.mxu0 0.0
        %2463 = vmatprep.subr.mxu0 0.0
        %2464 = vmatpush2.msra.mxu0 0.0
        %2465 = vmatprep.subr.mxu0 0.0
        %2466 = vmatpush2.msra.mxu0 0.0
        %2467 = vmatprep.mubr.f32.mxu0 0.0
        %2468 = vmatmul.mubr.f32.gmra.mxu0 %v2380
        %v2469 = vpop.f32.mrf.mxu0
        %v2470 = vadd.f32 %v2341, %v2469
        %v2471 = vpop.f32.mrf.mxu0
        %2472 = vmatprep.mubr.f32.mxu0 0.0
        %2473 = vmatmul.mubr.f32.gmra.mxu0 %v2383
        %v2474 = vpop.f32.mrf.mxu0
        %v2475 = vadd.f32 %v2346, %v2474
        %v2476 = vpop.f32.mrf.mxu0
        %2477 = vmatprep.mubr.f32.mxu0 0.0
        %2478 = vmatmul.mubr.f32.gmra.mxu0 %v2386
        %v2479 = vpop.f32.mrf.mxu0
        %v2480 = vadd.f32 %v2351, %v2479
        %v2481 = vpop.f32.mrf.mxu0
        %2482 = vmatprep.mubr.f32.mxu0 0.0
        %2483 = vmatmul.mubr.f32.gmra.mxu0 %v2389
        %v2484 = vpop.f32.mrf.mxu0
        %v2485 = vadd.f32 %v2356, %v2484
        %v2486 = vpop.f32.mrf.mxu0
        %2487 = vmatprep.mubr.f32.mxu0 0.0
        %2488 = vmatmul.mubr.f32.gmra.mxu0 %v2392
        %v2489 = vpop.f32.mrf.mxu0
        %v2490 = vadd.f32 %v2361, %v2489
        %v2491 = vpop.f32.mrf.mxu0
        %2492 = vmatprep.mubr.f32.mxu0 0.0
        %2493 = vmatmul.mubr.f32.gmra.mxu0 %v2395
        %v2494 = vpop.f32.mrf.mxu0
        %v2495 = vadd.f32 %v2366, %v2494
        %v2496 = vpop.f32.mrf.mxu0
        %2497 = vmatprep.mubr.f32.mxu0 0.0
        %2498 = vmatmul.mubr.f32.gmra.mxu0 %v2398
        %v2499 = vpop.f32.mrf.mxu0
        %v2500 = vadd.f32 %v2371, %v2499
        %v2501 = vpop.f32.mrf.mxu0
        %2502 = vmatprep.mubr.f32.mxu0 0.0
        %2503 = vmatmul.mubr.f32.gmra.mxu0 %v2401
        %v2504 = vpop.f32.mrf.mxu0
        %v2505 = vadd.f32 %v2376, %v2504
        %v2506 = vpop.f32.mrf.mxu0
        %2507 = vdwg.mxu0
        %v2508 = vld [vmem:[#allocation3 + $0x9] sm:$0xff]
        %v2509 = vld [vmem:[#allocation3 + $0x11] sm:$0xff]
        %v2510 = vld [vmem:[#allocation3 + $0x19] sm:$0xff]
        %v2511 = vld [vmem:[#allocation3 + $0x21] sm:$0xff]
        %v2512 = vld [vmem:[#allocation3 + $0x29] sm:$0xff]
        %v2513 = vld [vmem:[#allocation3 + $0x31] sm:$0xff]
        %v2514 = vld [vmem:[#allocation3 + $0x39] sm:$0xff]
        %v2515 = vld [vmem:[#allocation3 + $0x41] sm:$0xff]
        %v2516 = vmul.f32 %v2508, %v755
        %v2517 = vmul.f32 %v2509, %v756
        %v2518 = vmul.f32 %v2510, %v757
        %v2519 = vmul.f32 %v2511, %v758
        %v2520 = vmul.f32 %v2512, %v759
        %v2521 = vmul.f32 %v2513, %v760
        %v2522 = vmul.f32 %v2514, %v761
        %v2523 = vmul.f32 %v2515, %v762
        %s2524 = scalar_lea.vmem [#allocation4], 64
        %v2525 = vld [vmem:[%s2524] sm:$0xff]
        %v2526 = vld [vmem:[%s2524 + $0x8] sm:$0xff]
        %v2527 = vld [vmem:[%s2524 + $0x10] sm:$0xff]
        %v2528 = vld [vmem:[%s2524 + $0x18] sm:$0xff]
        %v2530 = vsel %vm2196, %v2516, 0
        %v2533 = vsel %vm2196, %v2517, 0
        %v2536 = vsel %vm2196, %v2518, 0
        %v2539 = vsel %vm2196, %v2519, 0
        %v2542 = vsel %vm2196, %v2520, 0
        %v2545 = vsel %vm2196, %v2521, 0
        %v2548 = vsel %vm2196, %v2522, 0
        %v2551 = vsel %vm2196, %v2523, 0
        %2553 = vmatprep.subr.mxu0 0.0
        %2554 = vmatpush1.msra.mxu0 0.0
        %2555 = vmatprep.subr.mxu0 0.0
        %2556 = vmatpush1.msra.mxu0 0.0
        %2557 = vmatprep.subr.mxu0 0.0
        %2558 = vmatpush1.msra.mxu0 0.0
        %2559 = vmatprep.subr.mxu0 0.0
        %2560 = vmatpush1.msra.mxu0 0.0
        %2561 = vmatprep.subr.mxu0 0.0
        %2562 = vmatpush1.msra.mxu0 0.0
        %2563 = vmatprep.subr.mxu0 0.0
        %2564 = vmatpush1.msra.mxu0 0.0
        %2565 = vmatprep.subr.mxu0 0.0
        %2566 = vmatpush1.msra.mxu0 0.0
        %2567 = vmatprep.subr.mxu0 0.0
        %2568 = vmatpush1.msra.mxu0 0.0
        %2569 = vmatprep.subr.mxu0 0.0
        %2570 = vmatpush1.msra.mxu0 0.0
        %2571 = vmatprep.subr.mxu0 0.0
        %2572 = vmatpush1.msra.mxu0 0.0
        %2573 = vmatprep.subr.mxu0 0.0
        %2574 = vmatpush1.msra.mxu0 0.0
        %2575 = vmatprep.subr.mxu0 0.0
        %2576 = vmatpush1.msra.mxu0 0.0
        %2577 = vmatprep.subr.mxu0 0.0
        %2578 = vmatpush1.msra.mxu0 %v2528
        %2579 = vmatprep.subr.mxu0 0.0
        %2580 = vmatpush1.msra.mxu0 %v2527
        %2581 = vmatprep.subr.mxu0 0.0
        %2582 = vmatpush1.msra.mxu0 %v2526
        %2583 = vmatprep.subr.mxu0 0.0
        %2584 = vmatpush1.msra.mxu0 %v2525
        %2585 = vmatprep.subr.mxu0 0.0
        %2586 = vmatpush2.msra.mxu0 0.0
        %2587 = vmatprep.subr.mxu0 0.0
        %2588 = vmatpush2.msra.mxu0 0.0
        %2589 = vmatprep.subr.mxu0 0.0
        %2590 = vmatpush2.msra.mxu0 0.0
        %2591 = vmatprep.subr.mxu0 0.0
        %2592 = vmatpush2.msra.mxu0 0.0
        %2593 = vmatprep.subr.mxu0 0.0
        %2594 = vmatpush2.msra.mxu0 0.0
        %2595 = vmatprep.subr.mxu0 0.0
        %2596 = vmatpush2.msra.mxu0 0.0
        %2597 = vmatprep.subr.mxu0 0.0
        %2598 = vmatpush2.msra.mxu0 0.0
        %2599 = vmatprep.subr.mxu0 0.0
        %2600 = vmatpush2.msra.mxu0 0.0
        %2601 = vmatprep.subr.mxu0 0.0
        %2602 = vmatpush2.msra.mxu0 0.0
        %2603 = vmatprep.subr.mxu0 0.0
        %2604 = vmatpush2.msra.mxu0 0.0
        %2605 = vmatprep.subr.mxu0 0.0
        %2606 = vmatpush2.msra.mxu0 0.0
        %2607 = vmatprep.subr.mxu0 0.0
        %2608 = vmatpush2.msra.mxu0 0.0
        %2609 = vmatprep.subr.mxu0 0.0
        %2610 = vmatpush2.msra.mxu0 0.0
        %2611 = vmatprep.subr.mxu0 0.0
        %2612 = vmatpush2.msra.mxu0 0.0
        %2613 = vmatprep.subr.mxu0 0.0
        %2614 = vmatpush2.msra.mxu0 0.0
        %2615 = vmatprep.subr.mxu0 0.0
        %2616 = vmatpush2.msra.mxu0 0.0
        %2617 = vmatprep.mubr.f32.mxu0 0.0
        %2618 = vmatmul.mubr.f32.gmra.mxu0 %v2530
        %v2619 = vpop.f32.mrf.mxu0
        %v2620 = vadd.f32 0.0, %v2619
        %v2621 = vpop.f32.mrf.mxu0
        %2622 = vmatprep.mubr.f32.mxu0 0.0
        %2623 = vmatmul.mubr.f32.gmra.mxu0 %v2533
        %v2624 = vpop.f32.mrf.mxu0
        %v2625 = vadd.f32 0.0, %v2624
        %v2626 = vpop.f32.mrf.mxu0
        %2627 = vmatprep.mubr.f32.mxu0 0.0
        %2628 = vmatmul.mubr.f32.gmra.mxu0 %v2536
        %v2629 = vpop.f32.mrf.mxu0
        %v2630 = vadd.f32 0.0, %v2629
        %v2631 = vpop.f32.mrf.mxu0
        %2632 = vmatprep.mubr.f32.mxu0 0.0
        %2633 = vmatmul.mubr.f32.gmra.mxu0 %v2539
        %v2634 = vpop.f32.mrf.mxu0
        %v2635 = vadd.f32 0.0, %v2634
        %v2636 = vpop.f32.mrf.mxu0
        %2637 = vmatprep.mubr.f32.mxu0 0.0
        %2638 = vmatmul.mubr.f32.gmra.mxu0 %v2542
        %v2639 = vpop.f32.mrf.mxu0
        %v2640 = vadd.f32 0.0, %v2639
        %v2641 = vpop.f32.mrf.mxu0
        %2642 = vmatprep.mubr.f32.mxu0 0.0
        %2643 = vmatmul.mubr.f32.gmra.mxu0 %v2545
        %v2644 = vpop.f32.mrf.mxu0
        %v2645 = vadd.f32 0.0, %v2644
        %v2646 = vpop.f32.mrf.mxu0
        %2647 = vmatprep.mubr.f32.mxu0 0.0
        %2648 = vmatmul.mubr.f32.gmra.mxu0 %v2548
        %v2649 = vpop.f32.mrf.mxu0
        %v2650 = vadd.f32 0.0, %v2649
        %v2651 = vpop.f32.mrf.mxu0
        %2652 = vmatprep.mubr.f32.mxu0 0.0
        %2653 = vmatmul.mubr.f32.gmra.mxu0 %v2551
        %v2654 = vpop.f32.mrf.mxu0
        %v2655 = vadd.f32 0.0, %v2654
        %v2656 = vpop.f32.mrf.mxu0
        %2657 = vdwg.mxu0
        %v2658 = vadd.f32 %v2470, %v2620
        %v2659 = vadd.f32 %v2475, %v2625
        %v2660 = vadd.f32 %v2480, %v2630
        %v2661 = vadd.f32 %v2485, %v2635
        %v2662 = vadd.f32 %v2490, %v2640
        %v2663 = vadd.f32 %v2495, %v2645
        %v2664 = vadd.f32 %v2500, %v2650
        %v2665 = vadd.f32 %v2505, %v2655
        %v2666 = vld [vmem:[#allocation3 + $0xf] sm:$0xff]
        %v2667 = vld [vmem:[#allocation3 + $0x17] sm:$0xff]
        %v2668 = vld [vmem:[#allocation3 + $0x1f] sm:$0xff]
        %v2669 = vld [vmem:[#allocation3 + $0x27] sm:$0xff]
        %v2670 = vld [vmem:[#allocation3 + $0x2f] sm:$0xff]
        %v2671 = vld [vmem:[#allocation3 + $0x37] sm:$0xff]
        %v2672 = vld [vmem:[#allocation3 + $0x3f] sm:$0xff]
        %v2673 = vld [vmem:[#allocation3 + $0x47] sm:$0xff]
        %v2674 = vmul.f32 %v2666, %v731
        %v2675 = vmul.f32 %v2667, %v732
        %v2676 = vmul.f32 %v2668, %v733
        %v2677 = vmul.f32 %v2669, %v734
        %v2678 = vmul.f32 %v2670, %v735
        %v2679 = vmul.f32 %v2671, %v736
        %v2680 = vmul.f32 %v2672, %v737
        %v2681 = vmul.f32 %v2673, %v738
        %s2682 = scalar_lea.vmem [#allocation4], 96
        %v2683 = vld [vmem:[%s2682] sm:$0xff]
        %v2684 = vld [vmem:[%s2682 + $0x8] sm:$0xff]
        %v2685 = vld [vmem:[%s2682 + $0x10] sm:$0xff]
        %v2686 = vld [vmem:[%s2682 + $0x18] sm:$0xff]
        %v2688 = vsel %vm2196, %v2674, 0
        %v2691 = vsel %vm2196, %v2675, 0
        %v2694 = vsel %vm2196, %v2676, 0
        %v2697 = vsel %vm2196, %v2677, 0
        %v2700 = vsel %vm2196, %v2678, 0
        %v2703 = vsel %vm2196, %v2679, 0
        %v2706 = vsel %vm2196, %v2680, 0
        %v2709 = vsel %vm2196, %v2681, 0
        %2711 = vmatprep.subr.mxu0 0.0
        %2712 = vmatpush1.msra.mxu0 0.0
        %2713 = vmatprep.subr.mxu0 0.0
        %2714 = vmatpush1.msra.mxu0 0.0
        %2715 = vmatprep.subr.mxu0 0.0
        %2716 = vmatpush1.msra.mxu0 0.0
        %2717 = vmatprep.subr.mxu0 0.0
        %2718 = vmatpush1.msra.mxu0 0.0
        %2719 = vmatprep.subr.mxu0 0.0
        %2720 = vmatpush1.msra.mxu0 0.0
        %2721 = vmatprep.subr.mxu0 0.0
        %2722 = vmatpush1.msra.mxu0 0.0
        %2723 = vmatprep.subr.mxu0 0.0
        %2724 = vmatpush1.msra.mxu0 0.0
        %2725 = vmatprep.subr.mxu0 0.0
        %2726 = vmatpush1.msra.mxu0 0.0
        %2727 = vmatprep.subr.mxu0 0.0
        %2728 = vmatpush1.msra.mxu0 0.0
        %2729 = vmatprep.subr.mxu0 0.0
        %2730 = vmatpush1.msra.mxu0 0.0
        %2731 = vmatprep.subr.mxu0 0.0
        %2732 = vmatpush1.msra.mxu0 0.0
        %2733 = vmatprep.subr.mxu0 0.0
        %2734 = vmatpush1.msra.mxu0 0.0
        %2735 = vmatprep.subr.mxu0 0.0
        %2736 = vmatpush1.msra.mxu0 %v2686
        %2737 = vmatprep.subr.mxu0 0.0
        %2738 = vmatpush1.msra.mxu0 %v2685
        %2739 = vmatprep.subr.mxu0 0.0
        %2740 = vmatpush1.msra.mxu0 %v2684
        %2741 = vmatprep.subr.mxu0 0.0
        %2742 = vmatpush1.msra.mxu0 %v2683
        %2743 = vmatprep.subr.mxu0 0.0
        %2744 = vmatpush2.msra.mxu0 0.0
        %2745 = vmatprep.subr.mxu0 0.0
        %2746 = vmatpush2.msra.mxu0 0.0
        %2747 = vmatprep.subr.mxu0 0.0
        %2748 = vmatpush2.msra.mxu0 0.0
        %2749 = vmatprep.subr.mxu0 0.0
        %2750 = vmatpush2.msra.mxu0 0.0
        %2751 = vmatprep.subr.mxu0 0.0
        %2752 = vmatpush2.msra.mxu0 0.0
        %2753 = vmatprep.subr.mxu0 0.0
        %2754 = vmatpush2.msra.mxu0 0.0
        %2755 = vmatprep.subr.mxu0 0.0
        %2756 = vmatpush2.msra.mxu0 0.0
        %2757 = vmatprep.subr.mxu0 0.0
        %2758 = vmatpush2.msra.mxu0 0.0
        %2759 = vmatprep.subr.mxu0 0.0
        %2760 = vmatpush2.msra.mxu0 0.0
        %2761 = vmatprep.subr.mxu0 0.0
        %2762 = vmatpush2.msra.mxu0 0.0
        %2763 = vmatprep.subr.mxu0 0.0
        %2764 = vmatpush2.msra.mxu0 0.0
        %2765 = vmatprep.subr.mxu0 0.0
        %2766 = vmatpush2.msra.mxu0 0.0
        %2767 = vmatprep.subr.mxu0 0.0
        %2768 = vmatpush2.msra.mxu0 0.0
        %2769 = vmatprep.subr.mxu0 0.0
        %2770 = vmatpush2.msra.mxu0 0.0
        %2771 = vmatprep.subr.mxu0 0.0
        %2772 = vmatpush2.msra.mxu0 0.0
        %2773 = vmatprep.subr.mxu0 0.0
        %2774 = vmatpush2.msra.mxu0 0.0
        %2775 = vmatprep.mubr.f32.mxu0 0.0
        %2776 = vmatmul.mubr.f32.gmra.mxu0 %v2688
        %v2777 = vpop.f32.mrf.mxu0
        %v2778 = vadd.f32 0.0, %v2777
        %v2779 = vpop.f32.mrf.mxu0
        %2780 = vmatprep.mubr.f32.mxu0 0.0
        %2781 = vmatmul.mubr.f32.gmra.mxu0 %v2691
        %v2782 = vpop.f32.mrf.mxu0
        %v2783 = vadd.f32 0.0, %v2782
        %v2784 = vpop.f32.mrf.mxu0
        %2785 = vmatprep.mubr.f32.mxu0 0.0
        %2786 = vmatmul.mubr.f32.gmra.mxu0 %v2694
        %v2787 = vpop.f32.mrf.mxu0
        %v2788 = vadd.f32 0.0, %v2787
        %v2789 = vpop.f32.mrf.mxu0
        %2790 = vmatprep.mubr.f32.mxu0 0.0
        %2791 = vmatmul.mubr.f32.gmra.mxu0 %v2697
        %v2792 = vpop.f32.mrf.mxu0
        %v2793 = vadd.f32 0.0, %v2792
        %v2794 = vpop.f32.mrf.mxu0
        %2795 = vmatprep.mubr.f32.mxu0 0.0
        %2796 = vmatmul.mubr.f32.gmra.mxu0 %v2700
        %v2797 = vpop.f32.mrf.mxu0
        %v2798 = vadd.f32 0.0, %v2797
        %v2799 = vpop.f32.mrf.mxu0
        %2800 = vmatprep.mubr.f32.mxu0 0.0
        %2801 = vmatmul.mubr.f32.gmra.mxu0 %v2703
        %v2802 = vpop.f32.mrf.mxu0
        %v2803 = vadd.f32 0.0, %v2802
        %v2804 = vpop.f32.mrf.mxu0
        %2805 = vmatprep.mubr.f32.mxu0 0.0
        %2806 = vmatmul.mubr.f32.gmra.mxu0 %v2706
        %v2807 = vpop.f32.mrf.mxu0
        %v2808 = vadd.f32 0.0, %v2807
        %v2809 = vpop.f32.mrf.mxu0
        %2810 = vmatprep.mubr.f32.mxu0 0.0
        %2811 = vmatmul.mubr.f32.gmra.mxu0 %v2709
        %v2812 = vpop.f32.mrf.mxu0
        %v2813 = vadd.f32 0.0, %v2812
        %v2814 = vpop.f32.mrf.mxu0
        %2815 = vdwg.mxu0
        %v2816 = vadd.f32 %v2658, %v2778
        %v2817 = vadd.f32 %v2659, %v2783
        %v2818 = vadd.f32 %v2660, %v2788
        %v2819 = vadd.f32 %v2661, %v2793
        %v2820 = vadd.f32 %v2662, %v2798
        %v2821 = vadd.f32 %v2663, %v2803
        %v2822 = vadd.f32 %v2664, %v2808
        %v2823 = vadd.f32 %v2665, %v2813
        %v2824 = vld [vmem:[#allocation3 + $0x10] sm:$0xff]
        %v2825 = vld [vmem:[#allocation3 + $0x18] sm:$0xff]
        %v2826 = vld [vmem:[#allocation3 + $0x20] sm:$0xff]
        %v2827 = vld [vmem:[#allocation3 + $0x28] sm:$0xff]
        %v2828 = vld [vmem:[#allocation3 + $0x30] sm:$0xff]
        %v2829 = vld [vmem:[#allocation3 + $0x38] sm:$0xff]
        %v2830 = vld [vmem:[#allocation3 + $0x40] sm:$0xff]
        %v2831 = vld [vmem:[#allocation3 + $0x48] sm:$0xff]
        %s2832 = scalar_lea.vmem [#allocation4], 128
        %v2833 = vld [vmem:[%s2832] sm:$0xff]
        %v2834 = vld [vmem:[%s2832 + $0x8] sm:$0xff]
        %v2835 = vld [vmem:[%s2832 + $0x10] sm:$0xff]
        %v2836 = vld [vmem:[%s2832 + $0x18] sm:$0xff]
        %v2838 = vsel %vm2196, %v2824, 0
        %v2841 = vsel %vm2196, %v2825, 0
        %v2844 = vsel %vm2196, %v2826, 0
        %v2847 = vsel %vm2196, %v2827, 0
        %v2850 = vsel %vm2196, %v2828, 0
        %v2853 = vsel %vm2196, %v2829, 0
        %v2856 = vsel %vm2196, %v2830, 0
        %v2859 = vsel %vm2196, %v2831, 0
        %2861 = vmatprep.subr.mxu0 0.0
        %2862 = vmatpush1.msra.mxu0 0.0
        %2863 = vmatprep.subr.mxu0 0.0
        %2864 = vmatpush1.msra.mxu0 0.0
        %2865 = vmatprep.subr.mxu0 0.0
        %2866 = vmatpush1.msra.mxu0 0.0
        %2867 = vmatprep.subr.mxu0 0.0
        %2868 = vmatpush1.msra.mxu0 0.0
        %2869 = vmatprep.subr.mxu0 0.0
        %2870 = vmatpush1.msra.mxu0 0.0
        %2871 = vmatprep.subr.mxu0 0.0
        %2872 = vmatpush1.msra.mxu0 0.0
        %2873 = vmatprep.subr.mxu0 0.0
        %2874 = vmatpush1.msra.mxu0 0.0
        %2875 = vmatprep.subr.mxu0 0.0
        %2876 = vmatpush1.msra.mxu0 0.0
        %2877 = vmatprep.subr.mxu0 0.0
        %2878 = vmatpush1.msra.mxu0 0.0
        %2879 = vmatprep.subr.mxu0 0.0
        %2880 = vmatpush1.msra.mxu0 0.0
        %2881 = vmatprep.subr.mxu0 0.0
        %2882 = vmatpush1.msra.mxu0 0.0
        %2883 = vmatprep.subr.mxu0 0.0
        %2884 = vmatpush1.msra.mxu0 0.0
        %2885 = vmatprep.subr.mxu0 0.0
        %2886 = vmatpush1.msra.mxu0 %v2836
        %2887 = vmatprep.subr.mxu0 0.0
        %2888 = vmatpush1.msra.mxu0 %v2835
        %2889 = vmatprep.subr.mxu0 0.0
        %2890 = vmatpush1.msra.mxu0 %v2834
        %2891 = vmatprep.subr.mxu0 0.0
        %2892 = vmatpush1.msra.mxu0 %v2833
        %2893 = vmatprep.subr.mxu0 0.0
        %2894 = vmatpush2.msra.mxu0 0.0
        %2895 = vmatprep.subr.mxu0 0.0
        %2896 = vmatpush2.msra.mxu0 0.0
        %2897 = vmatprep.subr.mxu0 0.0
        %2898 = vmatpush2.msra.mxu0 0.0
        %2899 = vmatprep.subr.mxu0 0.0
        %2900 = vmatpush2.msra.mxu0 0.0
        %2901 = vmatprep.subr.mxu0 0.0
        %2902 = vmatpush2.msra.mxu0 0.0
        %2903 = vmatprep.subr.mxu0 0.0
        %2904 = vmatpush2.msra.mxu0 0.0
        %2905 = vmatprep.subr.mxu0 0.0
        %2906 = vmatpush2.msra.mxu0 0.0
        %2907 = vmatprep.subr.mxu0 0.0
        %2908 = vmatpush2.msra.mxu0 0.0
        %2909 = vmatprep.subr.mxu0 0.0
        %2910 = vmatpush2.msra.mxu0 0.0
        %2911 = vmatprep.subr.mxu0 0.0
        %2912 = vmatpush2.msra.mxu0 0.0
        %2913 = vmatprep.subr.mxu0 0.0
        %2914 = vmatpush2.msra.mxu0 0.0
        %2915 = vmatprep.subr.mxu0 0.0
        %2916 = vmatpush2.msra.mxu0 0.0
        %2917 = vmatprep.subr.mxu0 0.0
        %2918 = vmatpush2.msra.mxu0 0.0
        %2919 = vmatprep.subr.mxu0 0.0
        %2920 = vmatpush2.msra.mxu0 0.0
        %2921 = vmatprep.subr.mxu0 0.0
        %2922 = vmatpush2.msra.mxu0 0.0
        %2923 = vmatprep.subr.mxu0 0.0
        %2924 = vmatpush2.msra.mxu0 0.0
        %2925 = vmatprep.mubr.f32.mxu0 0.0
        %2926 = vmatmul.mubr.f32.gmra.mxu0 %v2838
        %v2927 = vpop.f32.mrf.mxu0
        %v2928 = vadd.f32 0.0, %v2927
        %v2929 = vpop.f32.mrf.mxu0
        %2930 = vmatprep.mubr.f32.mxu0 0.0
        %2931 = vmatmul.mubr.f32.gmra.mxu0 %v2841
        %v2932 = vpop.f32.mrf.mxu0
        %v2933 = vadd.f32 0.0, %v2932
        %v2934 = vpop.f32.mrf.mxu0
        %2935 = vmatprep.mubr.f32.mxu0 0.0
        %2936 = vmatmul.mubr.f32.gmra.mxu0 %v2844
        %v2937 = vpop.f32.mrf.mxu0
        %v2938 = vadd.f32 0.0, %v2937
        %v2939 = vpop.f32.mrf.mxu0
        %2940 = vmatprep.mubr.f32.mxu0 0.0
        %2941 = vmatmul.mubr.f32.gmra.mxu0 %v2847
        %v2942 = vpop.f32.mrf.mxu0
        %v2943 = vadd.f32 0.0, %v2942
        %v2944 = vpop.f32.mrf.mxu0
        %2945 = vmatprep.mubr.f32.mxu0 0.0
        %2946 = vmatmul.mubr.f32.gmra.mxu0 %v2850
        %v2947 = vpop.f32.mrf.mxu0
        %v2948 = vadd.f32 0.0, %v2947
        %v2949 = vpop.f32.mrf.mxu0
        %2950 = vmatprep.mubr.f32.mxu0 0.0
        %2951 = vmatmul.mubr.f32.gmra.mxu0 %v2853
        %v2952 = vpop.f32.mrf.mxu0
        %v2953 = vadd.f32 0.0, %v2952
        %v2954 = vpop.f32.mrf.mxu0
        %2955 = vmatprep.mubr.f32.mxu0 0.0
        %2956 = vmatmul.mubr.f32.gmra.mxu0 %v2856
        %v2957 = vpop.f32.mrf.mxu0
        %v2958 = vadd.f32 0.0, %v2957
        %v2959 = vpop.f32.mrf.mxu0
        %2960 = vmatprep.mubr.f32.mxu0 0.0
        %2961 = vmatmul.mubr.f32.gmra.mxu0 %v2859
        %v2962 = vpop.f32.mrf.mxu0
        %v2963 = vadd.f32 0.0, %v2962
        %v2964 = vpop.f32.mrf.mxu0
        %2965 = vdwg.mxu0
        %v2966 = vadd.f32 %v2816, %v2928
        %v2967 = vadd.f32 %v2817, %v2933
        %v2968 = vadd.f32 %v2818, %v2938
        %v2969 = vadd.f32 %v2819, %v2943
        %v2970 = vadd.f32 %v2820, %v2948
        %v2971 = vadd.f32 %v2821, %v2953
        %v2972 = vadd.f32 %v2822, %v2958
        %v2973 = vadd.f32 %v2823, %v2963
        %v2974 = vld [vmem:[#allocation3 + $0x11] sm:$0xff]
        %v2975 = vld [vmem:[#allocation3 + $0x19] sm:$0xff]
        %v2976 = vld [vmem:[#allocation3 + $0x21] sm:$0xff]
        %v2977 = vld [vmem:[#allocation3 + $0x29] sm:$0xff]
        %v2978 = vld [vmem:[#allocation3 + $0x31] sm:$0xff]
        %v2979 = vld [vmem:[#allocation3 + $0x39] sm:$0xff]
        %v2980 = vld [vmem:[#allocation3 + $0x41] sm:$0xff]
        %v2981 = vld [vmem:[#allocation3 + $0x49] sm:$0xff]
        %v2982 = vmul.f32 %v2974, %v755
        %v2983 = vmul.f32 %v2975, %v756
        %v2984 = vmul.f32 %v2976, %v757
        %v2985 = vmul.f32 %v2977, %v758
        %v2986 = vmul.f32 %v2978, %v759
        %v2987 = vmul.f32 %v2979, %v760
        %v2988 = vmul.f32 %v2980, %v761
        %v2989 = vmul.f32 %v2981, %v762
        %s2990 = scalar_lea.vmem [#allocation4], 160
        %v2991 = vld [vmem:[%s2990] sm:$0xff]
        %v2992 = vld [vmem:[%s2990 + $0x8] sm:$0xff]
        %v2993 = vld [vmem:[%s2990 + $0x10] sm:$0xff]
        %v2994 = vld [vmem:[%s2990 + $0x18] sm:$0xff]
        %v2996 = vsel %vm2196, %v2982, 0
        %v2999 = vsel %vm2196, %v2983, 0
        %v3002 = vsel %vm2196, %v2984, 0
        %v3005 = vsel %vm2196, %v2985, 0
        %v3008 = vsel %vm2196, %v2986, 0
        %v3011 = vsel %vm2196, %v2987, 0
        %v3014 = vsel %vm2196, %v2988, 0
        %v3017 = vsel %vm2196, %v2989, 0
        %3019 = vmatprep.subr.mxu0 0.0
        %3020 = vmatpush1.msra.mxu0 0.0
        %3021 = vmatprep.subr.mxu0 0.0
        %3022 = vmatpush1.msra.mxu0 0.0
        %3023 = vmatprep.subr.mxu0 0.0
        %3024 = vmatpush1.msra.mxu0 0.0
        %3025 = vmatprep.subr.mxu0 0.0
        %3026 = vmatpush1.msra.mxu0 0.0
        %3027 = vmatprep.subr.mxu0 0.0
        %3028 = vmatpush1.msra.mxu0 0.0
        %3029 = vmatprep.subr.mxu0 0.0
        %3030 = vmatpush1.msra.mxu0 0.0
        %3031 = vmatprep.subr.mxu0 0.0
        %3032 = vmatpush1.msra.mxu0 0.0
        %3033 = vmatprep.subr.mxu0 0.0
        %3034 = vmatpush1.msra.mxu0 0.0
        %3035 = vmatprep.subr.mxu0 0.0
        %3036 = vmatpush1.msra.mxu0 0.0
        %3037 = vmatprep.subr.mxu0 0.0
        %3038 = vmatpush1.msra.mxu0 0.0
        %3039 = vmatprep.subr.mxu0 0.0
        %3040 = vmatpush1.msra.mxu0 0.0
        %3041 = vmatprep.subr.mxu0 0.0
        %3042 = vmatpush1.msra.mxu0 0.0
        %3043 = vmatprep.subr.mxu0 0.0
        %3044 = vmatpush1.msra.mxu0 %v2994
        %3045 = vmatprep.subr.mxu0 0.0
        %3046 = vmatpush1.msra.mxu0 %v2993
        %3047 = vmatprep.subr.mxu0 0.0
        %3048 = vmatpush1.msra.mxu0 %v2992
        %3049 = vmatprep.subr.mxu0 0.0
        %3050 = vmatpush1.msra.mxu0 %v2991
        %3051 = vmatprep.subr.mxu0 0.0
        %3052 = vmatpush2.msra.mxu0 0.0
        %3053 = vmatprep.subr.mxu0 0.0
        %3054 = vmatpush2.msra.mxu0 0.0
        %3055 = vmatprep.subr.mxu0 0.0
        %3056 = vmatpush2.msra.mxu0 0.0
        %3057 = vmatprep.subr.mxu0 0.0
        %3058 = vmatpush2.msra.mxu0 0.0
        %3059 = vmatprep.subr.mxu0 0.0
        %3060 = vmatpush2.msra.mxu0 0.0
        %3061 = vmatprep.subr.mxu0 0.0
        %3062 = vmatpush2.msra.mxu0 0.0
        %3063 = vmatprep.subr.mxu0 0.0
        %3064 = vmatpush2.msra.mxu0 0.0
        %3065 = vmatprep.subr.mxu0 0.0
        %3066 = vmatpush2.msra.mxu0 0.0
        %3067 = vmatprep.subr.mxu0 0.0
        %3068 = vmatpush2.msra.mxu0 0.0
        %3069 = vmatprep.subr.mxu0 0.0
        %3070 = vmatpush2.msra.mxu0 0.0
        %3071 = vmatprep.subr.mxu0 0.0
        %3072 = vmatpush2.msra.mxu0 0.0
        %3073 = vmatprep.subr.mxu0 0.0
        %3074 = vmatpush2.msra.mxu0 0.0
        %3075 = vmatprep.subr.mxu0 0.0
        %3076 = vmatpush2.msra.mxu0 0.0
        %3077 = vmatprep.subr.mxu0 0.0
        %3078 = vmatpush2.msra.mxu0 0.0
        %3079 = vmatprep.subr.mxu0 0.0
        %3080 = vmatpush2.msra.mxu0 0.0
        %3081 = vmatprep.subr.mxu0 0.0
        %3082 = vmatpush2.msra.mxu0 0.0
        %3083 = vmatprep.mubr.f32.mxu0 0.0
        %3084 = vmatmul.mubr.f32.gmra.mxu0 %v2996
        %v3085 = vpop.f32.mrf.mxu0
        %v3086 = vadd.f32 0.0, %v3085
        %v3087 = vpop.f32.mrf.mxu0
        %3088 = vmatprep.mubr.f32.mxu0 0.0
        %3089 = vmatmul.mubr.f32.gmra.mxu0 %v2999
        %v3090 = vpop.f32.mrf.mxu0
        %v3091 = vadd.f32 0.0, %v3090
        %v3092 = vpop.f32.mrf.mxu0
        %3093 = vmatprep.mubr.f32.mxu0 0.0
        %3094 = vmatmul.mubr.f32.gmra.mxu0 %v3002
        %v3095 = vpop.f32.mrf.mxu0
        %v3096 = vadd.f32 0.0, %v3095
        %v3097 = vpop.f32.mrf.mxu0
        %3098 = vmatprep.mubr.f32.mxu0 0.0
        %3099 = vmatmul.mubr.f32.gmra.mxu0 %v3005
        %v3100 = vpop.f32.mrf.mxu0
        %v3101 = vadd.f32 0.0, %v3100
        %v3102 = vpop.f32.mrf.mxu0
        %3103 = vmatprep.mubr.f32.mxu0 0.0
        %3104 = vmatmul.mubr.f32.gmra.mxu0 %v3008
        %v3105 = vpop.f32.mrf.mxu0
        %v3106 = vadd.f32 0.0, %v3105
        %v3107 = vpop.f32.mrf.mxu0
        %3108 = vmatprep.mubr.f32.mxu0 0.0
        %3109 = vmatmul.mubr.f32.gmra.mxu0 %v3011
        %v3110 = vpop.f32.mrf.mxu0
        %v3111 = vadd.f32 0.0, %v3110
        %v3112 = vpop.f32.mrf.mxu0
        %3113 = vmatprep.mubr.f32.mxu0 0.0
        %3114 = vmatmul.mubr.f32.gmra.mxu0 %v3014
        %v3115 = vpop.f32.mrf.mxu0
        %v3116 = vadd.f32 0.0, %v3115
        %v3117 = vpop.f32.mrf.mxu0
        %3118 = vmatprep.mubr.f32.mxu0 0.0
        %3119 = vmatmul.mubr.f32.gmra.mxu0 %v3017
        %v3120 = vpop.f32.mrf.mxu0
        %v3121 = vadd.f32 0.0, %v3120
        %v3122 = vpop.f32.mrf.mxu0
        %3123 = vdwg.mxu0
        %v3124 = vadd.f32 %v2966, %v3086
        %v3125 = vadd.f32 %v2967, %v3091
        %v3126 = vadd.f32 %v2968, %v3096
        %v3127 = vadd.f32 %v2969, %v3101
        %v3128 = vadd.f32 %v2970, %v3106
        %v3129 = vadd.f32 %v2971, %v3111
        %v3130 = vadd.f32 %v2972, %v3116
        %v3131 = vadd.f32 %v2973, %v3121
        %v3132 = vld [vmem:[#allocation3 + $0x17] sm:$0xff]
        %v3133 = vld [vmem:[#allocation3 + $0x1f] sm:$0xff]
        %v3134 = vld [vmem:[#allocation3 + $0x27] sm:$0xff]
        %v3135 = vld [vmem:[#allocation3 + $0x2f] sm:$0xff]
        %v3136 = vld [vmem:[#allocation3 + $0x37] sm:$0xff]
        %v3137 = vld [vmem:[#allocation3 + $0x3f] sm:$0xff]
        %v3138 = vld [vmem:[#allocation3 + $0x47] sm:$0xff]
        %v3139 = vld [vmem:[#allocation3 + $0x4f] sm:$0xff]
        %v3140 = vmul.f32 %v3132, %v731
        %v3141 = vmul.f32 %v3133, %v732
        %v3142 = vmul.f32 %v3134, %v733
        %v3143 = vmul.f32 %v3135, %v734
        %v3144 = vmul.f32 %v3136, %v735
        %v3145 = vmul.f32 %v3137, %v736
        %v3146 = vmul.f32 %v3138, %v737
        %v3147 = vmul.f32 %v3139, %v738
        %s3148 = scalar_lea.vmem [#allocation4], 192
        %v3149 = vld [vmem:[%s3148] sm:$0xff]
        %v3150 = vld [vmem:[%s3148 + $0x8] sm:$0xff]
        %v3151 = vld [vmem:[%s3148 + $0x10] sm:$0xff]
        %v3152 = vld [vmem:[%s3148 + $0x18] sm:$0xff]
        %v3154 = vsel %vm2196, %v3140, 0
        %v3157 = vsel %vm2196, %v3141, 0
        %v3160 = vsel %vm2196, %v3142, 0
        %v3163 = vsel %vm2196, %v3143, 0
        %v3166 = vsel %vm2196, %v3144, 0
        %v3169 = vsel %vm2196, %v3145, 0
        %v3172 = vsel %vm2196, %v3146, 0
        %v3175 = vsel %vm2196, %v3147, 0
        %3177 = vmatprep.subr.mxu0 0.0
        %3178 = vmatpush1.msra.mxu0 0.0
        %3179 = vmatprep.subr.mxu0 0.0
        %3180 = vmatpush1.msra.mxu0 0.0
        %3181 = vmatprep.subr.mxu0 0.0
        %3182 = vmatpush1.msra.mxu0 0.0
        %3183 = vmatprep.subr.mxu0 0.0
        %3184 = vmatpush1.msra.mxu0 0.0
        %3185 = vmatprep.subr.mxu0 0.0
        %3186 = vmatpush1.msra.mxu0 0.0
        %3187 = vmatprep.subr.mxu0 0.0
        %3188 = vmatpush1.msra.mxu0 0.0
        %3189 = vmatprep.subr.mxu0 0.0
        %3190 = vmatpush1.msra.mxu0 0.0
        %3191 = vmatprep.subr.mxu0 0.0
        %3192 = vmatpush1.msra.mxu0 0.0
        %3193 = vmatprep.subr.mxu0 0.0
        %3194 = vmatpush1.msra.mxu0 0.0
        %3195 = vmatprep.subr.mxu0 0.0
        %3196 = vmatpush1.msra.mxu0 0.0
        %3197 = vmatprep.subr.mxu0 0.0
        %3198 = vmatpush1.msra.mxu0 0.0
        %3199 = vmatprep.subr.mxu0 0.0
        %3200 = vmatpush1.msra.mxu0 0.0
        %3201 = vmatprep.subr.mxu0 0.0
        %3202 = vmatpush1.msra.mxu0 %v3152
        %3203 = vmatprep.subr.mxu0 0.0
        %3204 = vmatpush1.msra.mxu0 %v3151
        %3205 = vmatprep.subr.mxu0 0.0
        %3206 = vmatpush1.msra.mxu0 %v3150
        %3207 = vmatprep.subr.mxu0 0.0
        %3208 = vmatpush1.msra.mxu0 %v3149
        %3209 = vmatprep.subr.mxu0 0.0
        %3210 = vmatpush2.msra.mxu0 0.0
        %3211 = vmatprep.subr.mxu0 0.0
        %3212 = vmatpush2.msra.mxu0 0.0
        %3213 = vmatprep.subr.mxu0 0.0
        %3214 = vmatpush2.msra.mxu0 0.0
        %3215 = vmatprep.subr.mxu0 0.0
        %3216 = vmatpush2.msra.mxu0 0.0
        %3217 = vmatprep.subr.mxu0 0.0
        %3218 = vmatpush2.msra.mxu0 0.0
        %3219 = vmatprep.subr.mxu0 0.0
        %3220 = vmatpush2.msra.mxu0 0.0
        %3221 = vmatprep.subr.mxu0 0.0
        %3222 = vmatpush2.msra.mxu0 0.0
        %3223 = vmatprep.subr.mxu0 0.0
        %3224 = vmatpush2.msra.mxu0 0.0
        %3225 = vmatprep.subr.mxu0 0.0
        %3226 = vmatpush2.msra.mxu0 0.0
        %3227 = vmatprep.subr.mxu0 0.0
        %3228 = vmatpush2.msra.mxu0 0.0
        %3229 = vmatprep.subr.mxu0 0.0
        %3230 = vmatpush2.msra.mxu0 0.0
        %3231 = vmatprep.subr.mxu0 0.0
        %3232 = vmatpush2.msra.mxu0 0.0
        %3233 = vmatprep.subr.mxu0 0.0
        %3234 = vmatpush2.msra.mxu0 0.0
        %3235 = vmatprep.subr.mxu0 0.0
        %3236 = vmatpush2.msra.mxu0 0.0
        %3237 = vmatprep.subr.mxu0 0.0
        %3238 = vmatpush2.msra.mxu0 0.0
        %3239 = vmatprep.subr.mxu0 0.0
        %3240 = vmatpush2.msra.mxu0 0.0
        %3241 = vmatprep.mubr.f32.mxu0 0.0
        %3242 = vmatmul.mubr.f32.gmra.mxu0 %v3154
        %v3243 = vpop.f32.mrf.mxu0
        %v3244 = vadd.f32 0.0, %v3243
        %v3245 = vpop.f32.mrf.mxu0
        %3246 = vmatprep.mubr.f32.mxu0 0.0
        %3247 = vmatmul.mubr.f32.gmra.mxu0 %v3157
        %v3248 = vpop.f32.mrf.mxu0
        %v3249 = vadd.f32 0.0, %v3248
        %v3250 = vpop.f32.mrf.mxu0
        %3251 = vmatprep.mubr.f32.mxu0 0.0
        %3252 = vmatmul.mubr.f32.gmra.mxu0 %v3160
        %v3253 = vpop.f32.mrf.mxu0
        %v3254 = vadd.f32 0.0, %v3253
        %v3255 = vpop.f32.mrf.mxu0
        %3256 = vmatprep.mubr.f32.mxu0 0.0
        %3257 = vmatmul.mubr.f32.gmra.mxu0 %v3163
        %v3258 = vpop.f32.mrf.mxu0
        %v3259 = vadd.f32 0.0, %v3258
        %v3260 = vpop.f32.mrf.mxu0
        %3261 = vmatprep.mubr.f32.mxu0 0.0
        %3262 = vmatmul.mubr.f32.gmra.mxu0 %v3166
        %v3263 = vpop.f32.mrf.mxu0
        %v3264 = vadd.f32 0.0, %v3263
        %v3265 = vpop.f32.mrf.mxu0
        %3266 = vmatprep.mubr.f32.mxu0 0.0
        %3267 = vmatmul.mubr.f32.gmra.mxu0 %v3169
        %v3268 = vpop.f32.mrf.mxu0
        %v3269 = vadd.f32 0.0, %v3268
        %v3270 = vpop.f32.mrf.mxu0
        %3271 = vmatprep.mubr.f32.mxu0 0.0
        %3272 = vmatmul.mubr.f32.gmra.mxu0 %v3172
        %v3273 = vpop.f32.mrf.mxu0
        %v3274 = vadd.f32 0.0, %v3273
        %v3275 = vpop.f32.mrf.mxu0
        %3276 = vmatprep.mubr.f32.mxu0 0.0
        %3277 = vmatmul.mubr.f32.gmra.mxu0 %v3175
        %v3278 = vpop.f32.mrf.mxu0
        %v3279 = vadd.f32 0.0, %v3278
        %v3280 = vpop.f32.mrf.mxu0
        %3281 = vdwg.mxu0
        %v3282 = vadd.f32 %v3124, %v3244
        %v3283 = vadd.f32 %v3125, %v3249
        %v3284 = vadd.f32 %v3126, %v3254
        %v3285 = vadd.f32 %v3127, %v3259
        %v3286 = vadd.f32 %v3128, %v3264
        %v3287 = vadd.f32 %v3129, %v3269
        %v3288 = vadd.f32 %v3130, %v3274
        %v3289 = vadd.f32 %v3131, %v3279
        %v3290 = vld [vmem:[#allocation3 + $0x18] sm:$0xff]
        %v3291 = vld [vmem:[#allocation3 + $0x20] sm:$0xff]
        %v3292 = vld [vmem:[#allocation3 + $0x28] sm:$0xff]
        %v3293 = vld [vmem:[#allocation3 + $0x30] sm:$0xff]
        %v3294 = vld [vmem:[#allocation3 + $0x38] sm:$0xff]
        %v3295 = vld [vmem:[#allocation3 + $0x40] sm:$0xff]
        %v3296 = vld [vmem:[#allocation3 + $0x48] sm:$0xff]
        %v3297 = vld [vmem:[#allocation3 + $0x50] sm:$0xff]
        %s3298 = scalar_lea.vmem [#allocation4], 224
        %v3299 = vld [vmem:[%s3298] sm:$0xff]
        %v3300 = vld [vmem:[%s3298 + $0x8] sm:$0xff]
        %v3301 = vld [vmem:[%s3298 + $0x10] sm:$0xff]
        %v3302 = vld [vmem:[%s3298 + $0x18] sm:$0xff]
        %v3304 = vsel %vm2196, %v3290, 0
        %v3307 = vsel %vm2196, %v3291, 0
        %v3310 = vsel %vm2196, %v3292, 0
        %v3313 = vsel %vm2196, %v3293, 0
        %v3316 = vsel %vm2196, %v3294, 0
        %v3319 = vsel %vm2196, %v3295, 0
        %v3322 = vsel %vm2196, %v3296, 0
        %v3325 = vsel %vm2196, %v3297, 0
        %3327 = vmatprep.subr.mxu0 0.0
        %3328 = vmatpush1.msra.mxu0 0.0
        %3329 = vmatprep.subr.mxu0 0.0
        %3330 = vmatpush1.msra.mxu0 0.0
        %3331 = vmatprep.subr.mxu0 0.0
        %3332 = vmatpush1.msra.mxu0 0.0
        %3333 = vmatprep.subr.mxu0 0.0
        %3334 = vmatpush1.msra.mxu0 0.0
        %3335 = vmatprep.subr.mxu0 0.0
        %3336 = vmatpush1.msra.mxu0 0.0
        %3337 = vmatprep.subr.mxu0 0.0
        %3338 = vmatpush1.msra.mxu0 0.0
        %3339 = vmatprep.subr.mxu0 0.0
        %3340 = vmatpush1.msra.mxu0 0.0
        %3341 = vmatprep.subr.mxu0 0.0
        %3342 = vmatpush1.msra.mxu0 0.0
        %3343 = vmatprep.subr.mxu0 0.0
        %3344 = vmatpush1.msra.mxu0 0.0
        %3345 = vmatprep.subr.mxu0 0.0
        %3346 = vmatpush1.msra.mxu0 0.0
        %3347 = vmatprep.subr.mxu0 0.0
        %3348 = vmatpush1.msra.mxu0 0.0
        %3349 = vmatprep.subr.mxu0 0.0
        %3350 = vmatpush1.msra.mxu0 0.0
        %3351 = vmatprep.subr.mxu0 0.0
        %3352 = vmatpush1.msra.mxu0 %v3302
        %3353 = vmatprep.subr.mxu0 0.0
        %3354 = vmatpush1.msra.mxu0 %v3301
        %3355 = vmatprep.subr.mxu0 0.0
        %3356 = vmatpush1.msra.mxu0 %v3300
        %3357 = vmatprep.subr.mxu0 0.0
        %3358 = vmatpush1.msra.mxu0 %v3299
        %3359 = vmatprep.subr.mxu0 0.0
        %3360 = vmatpush2.msra.mxu0 0.0
        %3361 = vmatprep.subr.mxu0 0.0
        %3362 = vmatpush2.msra.mxu0 0.0
        %3363 = vmatprep.subr.mxu0 0.0
        %3364 = vmatpush2.msra.mxu0 0.0
        %3365 = vmatprep.subr.mxu0 0.0
        %3366 = vmatpush2.msra.mxu0 0.0
        %3367 = vmatprep.subr.mxu0 0.0
        %3368 = vmatpush2.msra.mxu0 0.0
        %3369 = vmatprep.subr.mxu0 0.0
        %3370 = vmatpush2.msra.mxu0 0.0
        %3371 = vmatprep.subr.mxu0 0.0
        %3372 = vmatpush2.msra.mxu0 0.0
        %3373 = vmatprep.subr.mxu0 0.0
        %3374 = vmatpush2.msra.mxu0 0.0
        %3375 = vmatprep.subr.mxu0 0.0
        %3376 = vmatpush2.msra.mxu0 0.0
        %3377 = vmatprep.subr.mxu0 0.0
        %3378 = vmatpush2.msra.mxu0 0.0
        %3379 = vmatprep.subr.mxu0 0.0
        %3380 = vmatpush2.msra.mxu0 0.0
        %3381 = vmatprep.subr.mxu0 0.0
        %3382 = vmatpush2.msra.mxu0 0.0
        %3383 = vmatprep.subr.mxu0 0.0
        %3384 = vmatpush2.msra.mxu0 0.0
        %3385 = vmatprep.subr.mxu0 0.0
        %3386 = vmatpush2.msra.mxu0 0.0
        %3387 = vmatprep.subr.mxu0 0.0
        %3388 = vmatpush2.msra.mxu0 0.0
        %3389 = vmatprep.subr.mxu0 0.0
        %3390 = vmatpush2.msra.mxu0 0.0
        %3391 = vmatprep.mubr.f32.mxu0 0.0
        %3392 = vmatmul.mubr.f32.gmra.mxu0 %v3304
        %v3393 = vpop.f32.mrf.mxu0
        %v3394 = vadd.f32 0.0, %v3393
        %v3395 = vpop.f32.mrf.mxu0
        %3396 = vmatprep.mubr.f32.mxu0 0.0
        %3397 = vmatmul.mubr.f32.gmra.mxu0 %v3307
        %v3398 = vpop.f32.mrf.mxu0
        %v3399 = vadd.f32 0.0, %v3398
        %v3400 = vpop.f32.mrf.mxu0
        %3401 = vmatprep.mubr.f32.mxu0 0.0
        %3402 = vmatmul.mubr.f32.gmra.mxu0 %v3310
        %v3403 = vpop.f32.mrf.mxu0
        %v3404 = vadd.f32 0.0, %v3403
        %v3405 = vpop.f32.mrf.mxu0
        %3406 = vmatprep.mubr.f32.mxu0 0.0
        %3407 = vmatmul.mubr.f32.gmra.mxu0 %v3313
        %v3408 = vpop.f32.mrf.mxu0
        %v3409 = vadd.f32 0.0, %v3408
        %v3410 = vpop.f32.mrf.mxu0
        %3411 = vmatprep.mubr.f32.mxu0 0.0
        %3412 = vmatmul.mubr.f32.gmra.mxu0 %v3316
        %v3413 = vpop.f32.mrf.mxu0
        %v3414 = vadd.f32 0.0, %v3413
        %v3415 = vpop.f32.mrf.mxu0
        %3416 = vmatprep.mubr.f32.mxu0 0.0
        %3417 = vmatmul.mubr.f32.gmra.mxu0 %v3319
        %v3418 = vpop.f32.mrf.mxu0
        %v3419 = vadd.f32 0.0, %v3418
        %v3420 = vpop.f32.mrf.mxu0
        %3421 = vmatprep.mubr.f32.mxu0 0.0
        %3422 = vmatmul.mubr.f32.gmra.mxu0 %v3322
        %v3423 = vpop.f32.mrf.mxu0
        %v3424 = vadd.f32 0.0, %v3423
        %v3425 = vpop.f32.mrf.mxu0
        %3426 = vmatprep.mubr.f32.mxu0 0.0
        %3427 = vmatmul.mubr.f32.gmra.mxu0 %v3325
        %v3428 = vpop.f32.mrf.mxu0
        %v3429 = vadd.f32 0.0, %v3428
        %v3430 = vpop.f32.mrf.mxu0
        %3431 = vdwg.mxu0
        %v3432 = vadd.f32 %v3282, %v3394
        %v3433 = vadd.f32 %v3283, %v3399
        %v3434 = vadd.f32 %v3284, %v3404
        %v3435 = vadd.f32 %v3285, %v3409
        %v3436 = vadd.f32 %v3286, %v3414
        %v3437 = vadd.f32 %v3287, %v3419
        %v3438 = vadd.f32 %v3288, %v3424
        %v3439 = vadd.f32 %v3289, %v3429
        %v3440 = vld [vmem:[#allocation3 + $0x19] sm:$0xff]
        %v3441 = vld [vmem:[#allocation3 + $0x21] sm:$0xff]
        %v3442 = vld [vmem:[#allocation3 + $0x29] sm:$0xff]
        %v3443 = vld [vmem:[#allocation3 + $0x31] sm:$0xff]
        %v3444 = vld [vmem:[#allocation3 + $0x39] sm:$0xff]
        %v3445 = vld [vmem:[#allocation3 + $0x41] sm:$0xff]
        %v3446 = vld [vmem:[#allocation3 + $0x49] sm:$0xff]
        %v3447 = vld [vmem:[#allocation3 + $0x51] sm:$0xff]
        %v3448 = vmul.f32 %v3440, %v755
        %v3449 = vmul.f32 %v3441, %v756
        %v3450 = vmul.f32 %v3442, %v757
        %v3451 = vmul.f32 %v3443, %v758
        %v3452 = vmul.f32 %v3444, %v759
        %v3453 = vmul.f32 %v3445, %v760
        %v3454 = vmul.f32 %v3446, %v761
        %v3455 = vmul.f32 %v3447, %v762
        %s3456 = scalar_lea.vmem [#allocation4], 256
        %v3457 = vld [vmem:[%s3456] sm:$0xff]
        %v3458 = vld [vmem:[%s3456 + $0x8] sm:$0xff]
        %v3459 = vld [vmem:[%s3456 + $0x10] sm:$0xff]
        %v3460 = vld [vmem:[%s3456 + $0x18] sm:$0xff]
        %v3462 = vsel %vm2196, %v3448, 0
        %v3465 = vsel %vm2196, %v3449, 0
        %v3468 = vsel %vm2196, %v3450, 0
        %v3471 = vsel %vm2196, %v3451, 0
        %v3474 = vsel %vm2196, %v3452, 0
        %v3477 = vsel %vm2196, %v3453, 0
        %v3480 = vsel %vm2196, %v3454, 0
        %v3483 = vsel %vm2196, %v3455, 0
        %3485 = vmatprep.subr.mxu0 0.0
        %3486 = vmatpush1.msra.mxu0 0.0
        %3487 = vmatprep.subr.mxu0 0.0
        %3488 = vmatpush1.msra.mxu0 0.0
        %3489 = vmatprep.subr.mxu0 0.0
        %3490 = vmatpush1.msra.mxu0 0.0
        %3491 = vmatprep.subr.mxu0 0.0
        %3492 = vmatpush1.msra.mxu0 0.0
        %3493 = vmatprep.subr.mxu0 0.0
        %3494 = vmatpush1.msra.mxu0 0.0
        %3495 = vmatprep.subr.mxu0 0.0
        %3496 = vmatpush1.msra.mxu0 0.0
        %3497 = vmatprep.subr.mxu0 0.0
        %3498 = vmatpush1.msra.mxu0 0.0
        %3499 = vmatprep.subr.mxu0 0.0
        %3500 = vmatpush1.msra.mxu0 0.0
        %3501 = vmatprep.subr.mxu0 0.0
        %3502 = vmatpush1.msra.mxu0 0.0
        %3503 = vmatprep.subr.mxu0 0.0
        %3504 = vmatpush1.msra.mxu0 0.0
        %3505 = vmatprep.subr.mxu0 0.0
        %3506 = vmatpush1.msra.mxu0 0.0
        %3507 = vmatprep.subr.mxu0 0.0
        %3508 = vmatpush1.msra.mxu0 0.0
        %3509 = vmatprep.subr.mxu0 0.0
        %3510 = vmatpush1.msra.mxu0 %v3460
        %3511 = vmatprep.subr.mxu0 0.0
        %3512 = vmatpush1.msra.mxu0 %v3459
        %3513 = vmatprep.subr.mxu0 0.0
        %3514 = vmatpush1.msra.mxu0 %v3458
        %3515 = vmatprep.subr.mxu0 0.0
        %3516 = vmatpush1.msra.mxu0 %v3457
        %3517 = vmatprep.subr.mxu0 0.0
        %3518 = vmatpush2.msra.mxu0 0.0
        %3519 = vmatprep.subr.mxu0 0.0
        %3520 = vmatpush2.msra.mxu0 0.0
        %3521 = vmatprep.subr.mxu0 0.0
        %3522 = vmatpush2.msra.mxu0 0.0
        %3523 = vmatprep.subr.mxu0 0.0
        %3524 = vmatpush2.msra.mxu0 0.0
        %3525 = vmatprep.subr.mxu0 0.0
        %3526 = vmatpush2.msra.mxu0 0.0
        %3527 = vmatprep.subr.mxu0 0.0
        %3528 = vmatpush2.msra.mxu0 0.0
        %3529 = vmatprep.subr.mxu0 0.0
        %3530 = vmatpush2.msra.mxu0 0.0
        %3531 = vmatprep.subr.mxu0 0.0
        %3532 = vmatpush2.msra.mxu0 0.0
        %3533 = vmatprep.subr.mxu0 0.0
        %3534 = vmatpush2.msra.mxu0 0.0
        %3535 = vmatprep.subr.mxu0 0.0
        %3536 = vmatpush2.msra.mxu0 0.0
        %3537 = vmatprep.subr.mxu0 0.0
        %3538 = vmatpush2.msra.mxu0 0.0
        %3539 = vmatprep.subr.mxu0 0.0
        %3540 = vmatpush2.msra.mxu0 0.0
        %3541 = vmatprep.subr.mxu0 0.0
        %3542 = vmatpush2.msra.mxu0 0.0
        %3543 = vmatprep.subr.mxu0 0.0
        %3544 = vmatpush2.msra.mxu0 0.0
        %3545 = vmatprep.subr.mxu0 0.0
        %3546 = vmatpush2.msra.mxu0 0.0
        %3547 = vmatprep.subr.mxu0 0.0
        %3548 = vmatpush2.msra.mxu0 0.0
        %3549 = vmatprep.mubr.f32.mxu0 0.0
        %3550 = vmatmul.mubr.f32.gmra.mxu0 %v3462
        %v3551 = vpop.f32.mrf.mxu0
        %v3552 = vadd.f32 0.0, %v3551
        %v3553 = vpop.f32.mrf.mxu0
        %3554 = vmatprep.mubr.f32.mxu0 0.0
        %3555 = vmatmul.mubr.f32.gmra.mxu0 %v3465
        %v3556 = vpop.f32.mrf.mxu0
        %v3557 = vadd.f32 0.0, %v3556
        %v3558 = vpop.f32.mrf.mxu0
        %3559 = vmatprep.mubr.f32.mxu0 0.0
        %3560 = vmatmul.mubr.f32.gmra.mxu0 %v3468
        %v3561 = vpop.f32.mrf.mxu0
        %v3562 = vadd.f32 0.0, %v3561
        %v3563 = vpop.f32.mrf.mxu0
        %3564 = vmatprep.mubr.f32.mxu0 0.0
        %3565 = vmatmul.mubr.f32.gmra.mxu0 %v3471
        %v3566 = vpop.f32.mrf.mxu0
        %v3567 = vadd.f32 0.0, %v3566
        %v3568 = vpop.f32.mrf.mxu0
        %3569 = vmatprep.mubr.f32.mxu0 0.0
        %3570 = vmatmul.mubr.f32.gmra.mxu0 %v3474
        %v3571 = vpop.f32.mrf.mxu0
        %v3572 = vadd.f32 0.0, %v3571
        %v3573 = vpop.f32.mrf.mxu0
        %3574 = vmatprep.mubr.f32.mxu0 0.0
        %3575 = vmatmul.mubr.f32.gmra.mxu0 %v3477
        %v3576 = vpop.f32.mrf.mxu0
        %v3577 = vadd.f32 0.0, %v3576
        %v3578 = vpop.f32.mrf.mxu0
        %3579 = vmatprep.mubr.f32.mxu0 0.0
        %3580 = vmatmul.mubr.f32.gmra.mxu0 %v3480
        %v3581 = vpop.f32.mrf.mxu0
        %v3582 = vadd.f32 0.0, %v3581
        %v3583 = vpop.f32.mrf.mxu0
        %3584 = vmatprep.mubr.f32.mxu0 0.0
        %3585 = vmatmul.mubr.f32.gmra.mxu0 %v3483
        %v3586 = vpop.f32.mrf.mxu0
        %v3587 = vadd.f32 0.0, %v3586
        %v3588 = vpop.f32.mrf.mxu0
        %3589 = vdwg.mxu0
        %v3590 = vadd.f32 %v3432, %v3552
        %v3591 = vadd.f32 %v3433, %v3557
        %v3592 = vadd.f32 %v3434, %v3562
        %v3593 = vadd.f32 %v3435, %v3567
        %v3594 = vadd.f32 %v3436, %v3572
        %v3595 = vadd.f32 %v3437, %v3577
        %v3596 = vadd.f32 %v3438, %v3582
        %v3597 = vadd.f32 %v3439, %v3587
        %v3598 = vmul.f32 %v3590, 0.5
        %v3599 = vmul.f32 %v3591, 0.5
        %v3600 = vmul.f32 %v3592, 0.5
        %v3601 = vmul.f32 %v3593, 0.5
        %v3602 = vmul.f32 %v3594, 0.5
        %v3603 = vmul.f32 %v3595, 0.5
        %v3604 = vmul.f32 %v3596, 0.5
        %v3605 = vmul.f32 %v3597, 0.5
        %v3606 = vmul.f32 %v3590, 0.70710677
        %v3607 = vmul.f32 %v3591, 0.70710677
        %v3608 = vmul.f32 %v3592, 0.70710677
        %v3609 = vmul.f32 %v3593, 0.70710677
        %v3610 = vmul.f32 %v3594, 0.70710677
        %v3611 = vmul.f32 %v3595, 0.70710677
        %v3612 = vmul.f32 %v3596, 0.70710677
        %v3613 = vmul.f32 %v3597, 0.70710677
        %v3614 = verf.f32.pop %v3606
        %v3615 = verf.f32.pop %v3607
        %v3616 = verf.f32.pop %v3608
        %v3617 = verf.f32.pop %v3609
        %v3618 = verf.f32.pop %v3610
        %v3619 = verf.f32.pop %v3611
        %v3620 = verf.f32.pop %v3612
        %v3621 = verf.f32.pop %v3613
        %v3622 = vadd.f32 %v3614, 1.0
        %v3623 = vadd.f32 %v3615, 1.0
        %v3624 = vadd.f32 %v3616, 1.0
        %v3625 = vadd.f32 %v3617, 1.0
        %v3626 = vadd.f32 %v3618, 1.0
        %v3627 = vadd.f32 %v3619, 1.0
        %v3628 = vadd.f32 %v3620, 1.0
        %v3629 = vadd.f32 %v3621, 1.0
        %v3630 = vmul.f32 %v3598, %v3622
        %v3631 = vmul.f32 %v3599, %v3623
        %v3632 = vmul.f32 %v3600, %v3624
        %v3633 = vmul.f32 %v3601, %v3625
        %v3634 = vmul.f32 %v3602, %v3626
        %v3635 = vmul.f32 %v3603, %v3627
        %v3636 = vmul.f32 %v3604, %v3628
        %v3637 = vmul.f32 %v3605, %v3629
        %v3638 = vld [vmem:[%s8] sm:$0x1]
        %v3640 = vlaneseq
        %v3641 = vshrl.u32 %v3640, 7
        %v3642 = vsub.s32 0, %v3641
        %v3643 = vrot.slane %v3638, %v3642
        %v3645 = vmul.f32 %v3630, %v3643
        %v3646 = vmul.f32 %v3631, %v3643
        %v3647 = vmul.f32 %v3632, %v3643
        %v3648 = vmul.f32 %v3633, %v3643
        %v3649 = vmul.f32 %v3634, %v3643
        %v3650 = vmul.f32 %v3635, %v3643
        %v3651 = vmul.f32 %v3636, %v3643
        %v3652 = vmul.f32 %v3637, %v3643
        %v3653 = vld [vmem:[%s9] sm:$0x1]
        %v3655 = vlaneseq
        %v3656 = vshrl.u32 %v3655, 7
        %v3657 = vsub.s32 0, %v3656
        %v3658 = vrot.slane %v3653, %v3657
        %v3660 = vadd.f32 %v3645, %v3658
        %v3661 = vadd.f32 %v3646, %v3658
        %v3662 = vadd.f32 %v3647, %v3658
        %v3663 = vadd.f32 %v3648, %v3658
        %v3664 = vadd.f32 %v3649, %v3658
        %v3665 = vadd.f32 %v3650, %v3658
        %v3666 = vadd.f32 %v3651, %v3658
        %v3667 = vadd.f32 %v3652, %v3658
        %3670 = vrot.lane.b32.xlu0 %v3662, 32
        %v3671 = vpop.permute.xlu0 %3670
        %3672 = vrot.lane.b32.xlu0 %v3663, 32
        %v3673 = vpop.permute.xlu0 %3672
        %3678 = vrot.lane.b32.xlu0 %v3664, 64
        %v3679 = vpop.permute.xlu0 %3678
        %3680 = vrot.lane.b32.xlu0 %v3665, 64
        %v3681 = vpop.permute.xlu0 %3680
        %3686 = vrot.lane.b32.xlu0 %v3666, 96
        %v3687 = vpop.permute.xlu0 %3686
        %3688 = vrot.lane.b32.xlu0 %v3667, 96
        %v3689 = vpop.permute.xlu0 %3688
        %v3692 = vsel %vm2196, %v3660, %v3671
        %v3693 = vsel %vm2196, %v3661, %v3673
        %vm3694 = vcmask 523264
        %v3695 = vsel %vm3694, %v3692, %v3679
        %v3696 = vsel %vm3694, %v3693, %v3681
        %vm3697 = vcmask 785408
        %v3698 = vsel %vm3697, %v3695, %v3687
        %v3699 = vsel %vm3697, %v3696, %v3689
        %3700 = vst [vmem:[%s367] sm:$0xff] %v3698
        %3701 = vst [vmem:[%s367 + $0x8] sm:$0xff] %v3699
        %s3702 = sand.u32 %s248, 1
        %s3703 = scalar_lea.sflag [#allocation6], %s3702
        %s3704 = sand.u32 %s248, 1
        %s3705 = smul.addr %s3704, 16
        %s3706 = scalar_lea.vmem [#allocation7], %s3705
        // Predicated region
        $region65: #{tpu_custom_call.1} parent=59 // pred_check
          %p3707 = pneg %p258
        $region66: #{tpu_custom_call.1} parent=59 // pred_check_branch
          %3709 = sbr.rel (%p3707) target = $region68
        $region67: #{tpu_custom_call.1} parent=59 // pred_region
          %s3711 = ssub.s32 256, 256
          %3712 = vsyncadd %s3703, %s3711
          %s3713 = smul.addr %s25, 2
          %s3714 = smul.addr %s3713, 128
          %s3715 = scalar_lea.hbm %s10, %s3714
          %s3716 = sshll.u32 %s3706, 4
          %s3717 = int_to_ptr.vmem [resolvable:$true] %s3716
          %3722 = dma.vmem_to_hbm [thread:$0]  %s3717, 256, %s3715, %s3703, 128, 128, 8
        $region68: #{tpu_custom_call.1} parent=59 // pred_fallthru
          _
      $region60: #{tpu_custom_call.1} parent=5 // pred_fallthru
        _
      %p3723 = scmp.le.s32.totalorder 2, %s20
      // Predicated region
      $region69: #{tpu_custom_call.1} parent=5 // pred_check
        %p3724 = pneg %p3723
      $region70: #{tpu_custom_call.1} parent=5 // pred_check_branch
        %3726 = sbr.rel (%p3724) target = $region72
      $region71: #{tpu_custom_call.1} parent=5 // pred_region
        %s3727 = ssub.s32 %s20, 2
        // Predicated region
        $region73: #{tpu_custom_call.1} parent=71 // pred_check
          %p3728 = pneg %p264
        $region74: #{tpu_custom_call.1} parent=71 // pred_check_branch
          %3730 = sbr.rel (%p3728) target = $region76
        $region75: #{tpu_custom_call.1} parent=71 // pred_region
          %s3731 = sand.u32 %s249, 1
          %s3732 = scalar_lea.sflag [#allocation6], %s3731
          %s3733 = sand.u32 %s249, 1
          %s3734 = smul.addr %s3733, 16
          %s3735 = scalar_lea.vmem [#allocation7], %s3734
          %3736 = dma.done %s3732, 256
        $region76: #{tpu_custom_call.1} parent=71 // pred_fallthru
          _
      $region72: #{tpu_custom_call.1} parent=5 // pred_fallthru
        _
    $region6: #{tpu_custom_call.1} parent=1 // loop_footer
      %s24 = sadd.s32 1, %s20
    $region7: #{tpu_custom_call.1} parent=1 // loop_footer_branch
      %19 = sbr.rel target = $region3
    $region8: #{tpu_custom_call.1} parent=1 // loop_exit
      _
    %3737 = vsyncpa [#allocation5], 1
    %s3738 = scalar_lea.sflag [#allocation5], 1
    %3739 = vsyncpa %s3738, 1
    %3740 = vsyncpa [#allocation6], 1
    %s3741 = scalar_lea.sflag [#allocation6], 1
    %3742 = vsyncpa %s3741, 1

</llo_original>
